<compile_context>
chip_gen: v5e
topology: v5e:2x2
jax: 0.10.0
libtpu: 0.0.40
codegen_flags: <defaults>
</compile_context>

<pallas_src>
import jax
import jax.numpy as jnp
from jax import lax
from jax.experimental import pallas as pl
from jax.experimental.pallas import tpu as pltpu


def lstm_dqn_kernel(x_ref, h0_ref, c0_ref, wih_ref, whh_ref, b_ref,
                    wfc_ref, bfc_ref, q_ref, hN_ref, cN_ref):
    """Single-layer LSTM over time + Linear on the last hidden state.

    x_ref   : [T, TB, D_in]     bf16  (time-major batch tile)
    h0_ref  : [TB, H]           f32
    c0_ref  : [TB, H]           f32
    wih_ref : [D_in, 4H]        bf16  (W_ih transposed)
    whh_ref : [H,    4H]        bf16  (W_hh transposed)
    b_ref   : [1,    4H]        f32   (b_ih + b_hh)
    wfc_ref : [H,  D_out_pad]   bf16  (W_fc transposed, lane-padded)
    bfc_ref : [1,  D_out_pad]   f32
    q_ref   : [TB, D_out_pad]   f32
    hN_ref  : [TB, H]           f32
    cN_ref  : [TB, H]           f32
    """
    T, TB, D_in = x_ref.shape
    H = whh_ref.shape[0]
    TBh = TB // 2                       # two independent chains per tile

    wih = wih_ref[...]                  # [D_in, 4H] bf16, VMEM-resident
    whh = whh_ref[...]                  # [H,    4H] bf16
    b = b_ref[...]                      # [1,    4H] f32

    # Hoisted input projection: one MXU matmul covers all timesteps.
    # (bias intentionally NOT added here -- added per-step on the small slice)
    x_all = x_ref[...].reshape(T * TB, D_in)                       # bf16
    zin = jnp.dot(x_all, wih, preferred_element_type=jnp.float32)  # [T*TB,4H]

    # Chain A = rows [0:TBh), chain B = rows [TBh:TB). Independent carries.
    h_a = h0_ref[:TBh, :]
    c_a = c0_ref[:TBh, :]
    h_b = h0_ref[TBh:, :]
    c_b = c0_ref[TBh:, :]

    def gates(z, c):
        # PyTorch gate order (i, f, g, o); H=128 -> whole-lane-group slices.
        i_g = jax.nn.sigmoid(z[:, 0 * H:1 * H])
        f_g = jax.nn.sigmoid(z[:, 1 * H:2 * H])
        g_g = jnp.tanh(z[:, 2 * H:3 * H])
        o_g = jax.nn.sigmoid(z[:, 3 * H:4 * H])
        c_new = f_g * c + i_g * g_g
        h_new = o_g * jnp.tanh(c_new)
        return h_new, c_new

    # T is small and static -> unrolled; both chains' dependent h@Whh matmul +
    # gate math sit in the same basic block, so the scheduler overlaps
    # MXU (chain A) with EUP/VPU (chain B) and vice versa.
    for t in range(T):
        base = t * TB                                              # static, aligned
        za = (zin[base:base + TBh, :] + b
              + jnp.dot(h_a.astype(whh.dtype), whh,
                        preferred_element_type=jnp.float32))       # [TBh, 4H]
        zb = (zin[base + TBh:base + TB, :] + b
              + jnp.dot(h_b.astype(whh.dtype), whh,
                        preferred_element_type=jnp.float32))       # [TBh, 4H]
        h_a, c_a = gates(za, c_a)
        h_b, c_b = gates(zb, c_b)

    wfc = wfc_ref[...]
    bfc = bfc_ref[...]
    # Lane-dense (128-wide) q store; wrapper slices back to D_out.
    q_ref[:TBh, :] = (jnp.dot(h_a.astype(wfc.dtype), wfc,
                              preferred_element_type=jnp.float32) + bfc)
    q_ref[TBh:, :] = (jnp.dot(h_b.astype(wfc.dtype), wfc,
                              preferred_element_type=jnp.float32) + bfc)
    hN_ref[:TBh, :] = h_a
    hN_ref[TBh:, :] = h_b
    cN_ref[:TBh, :] = c_a
    cN_ref[TBh:, :] = c_b


def recurrent_dqn_forward(x, params, h=None, *, matmul_dtype=jnp.bfloat16,
                          batch_tile=256):
    """x: [B, T, input_size] f32. Returns (q, (h_n, c_n)) like the torch module."""
    B, T, D_in = x.shape
    H = params["w_hh"].shape[1]           # w_hh: [4H, H]
    D_out = params["w_fc"].shape[0]       # w_fc: [D_out, H]

    def round_up(v, m):
        return -(-v // m) * m

    D_out_pad = round_up(max(D_out, 128), 128)   # lane-dense output slab

    # Glue (layout plumbing only): transpose weights, fold biases, pad the fc
    # weight/bias to 128 lanes, time-major + batch-pad x, bf16 casts.
    wih_t = params["w_ih"].T.astype(matmul_dtype)                  # [D_in, 4H]
    whh_t = params["w_hh"].T.astype(matmul_dtype)                  # [H, 4H]
    b = (params["b_ih"] + params["b_hh"]).astype(jnp.float32).reshape(1, 4 * H)
    wfc_t = jnp.pad(params["w_fc"].T.astype(matmul_dtype),
                    ((0, 0), (0, D_out_pad - D_out)))              # [H, D_out_pad]
    bfc = jnp.pad(params["b_fc"].astype(jnp.float32).reshape(1, D_out),
                  ((0, 0), (0, D_out_pad - D_out)))                # [1, D_out_pad]

    if h is None:
        h0 = jnp.zeros((B, H), jnp.float32)
        c0 = jnp.zeros((B, H), jnp.float32)
    else:
        h0 = h[0][0].astype(jnp.float32)
        c0 = h[1][0].astype(jnp.float32)

    # Batch tile: multiple of 16 (two 8-sublane chains; bf16 packs 16 sublanes).
    TB = min(batch_tile, max(16, round_up(B, 16)))
    # Cap TB so the hoisted f32 projection [T*TB, 4H] stays well within the
    # scoped VMEM default on every generation (incl. v7x's 64 MiB physical).
    zin_budget = 8 * 1024 * 1024
    tb_cap = max(16, (zin_budget // (T * 4 * H * 4)) // 16 * 16)
    TB = max(16, min(TB, tb_cap) // 16 * 16)
    B_pad = round_up(B, TB)
    # v7x megacore: if the whole batch fits one tile, split into two tiles so
    # the "parallel" grid axis shards across both TensorCores (neutral on
    # v5e/v6e).
    if B_pad // TB == 1 and TB >= 32:
        TB = round_up(-(-B // 2), 16)
        B_pad = 2 * TB
    pad = B_pad - B

    x_tm = jnp.swapaxes(x, 0, 1).astype(matmul_dtype)              # [T, B, D_in]
    if pad:
        x_tm = jnp.pad(x_tm, ((0, 0), (0, pad), (0, 0)))
        h0 = jnp.pad(h0, ((0, pad), (0, 0)))
        c0 = jnp.pad(c0, ((0, pad), (0, 0)))

    grid = (B_pad // TB,)
    in_specs = [
        pl.BlockSpec((T, TB, D_in), lambda i: (0, i, 0)),          # x (time-major)
        pl.BlockSpec((TB, H), lambda i: (i, 0)),                   # h0
        pl.BlockSpec((TB, H), lambda i: (i, 0)),                   # c0
        pl.BlockSpec((D_in, 4 * H), lambda i: (0, 0)),             # W_ih^T
        pl.BlockSpec((H, 4 * H), lambda i: (0, 0)),                # W_hh^T
        pl.BlockSpec((1, 4 * H), lambda i: (0, 0)),                # b_ih + b_hh
        pl.BlockSpec((H, D_out_pad), lambda i: (0, 0)),            # W_fc^T (padded)
        pl.BlockSpec((1, D_out_pad), lambda i: (0, 0)),            # b_fc (padded)
    ]
    out_specs = (
        pl.BlockSpec((TB, D_out_pad), lambda i: (i, 0)),           # q (lane-dense)
        pl.BlockSpec((TB, H), lambda i: (i, 0)),                   # h_T
        pl.BlockSpec((TB, H), lambda i: (i, 0)),                   # c_T
    )

    q_pad, hN_pad, cN_pad = pl.pallas_call(
        lstm_dqn_kernel,
        out_shape=(
            jax.ShapeDtypeStruct((B_pad, D_out_pad), jnp.float32),
            jax.ShapeDtypeStruct((B_pad, H), jnp.float32),
            jax.ShapeDtypeStruct((B_pad, H), jnp.float32),
        ),
        grid=grid,
        in_specs=in_specs,
        out_specs=out_specs,
        compiler_params=pltpu.CompilerParams(
            dimension_semantics=("parallel",)),   # batch tiles -> 2 TCs on v7x
    )(x_tm, h0, c0, wih_t, whh_t, b, wfc_t, bfc)

    # PyTorch returns h/c with a leading num_layers dim (=1 here). Padded rows
    # (and padded q lanes) are sliced off and must never be reused.
    q = q_pad[:B, :D_out]
    return q, (hN_pad[:B][None, :, :], cN_pad[:B][None, :, :])


def recurrent_dqn_reference(x, params, h=None, *, matmul_dtype=jnp.bfloat16):
    """Pure-JAX reference (lax.scan), same gate order and matmul dtypes."""
    B, T, _ = x.shape
    H = params["w_hh"].shape[1]
    wih_t = params["w_ih"].T.astype(matmul_dtype)
    whh_t = params["w_hh"].T.astype(matmul_dtype)
    wfc_t = params["w_fc"].T.astype(matmul_dtype)
    b = (params["b_ih"] + params["b_hh"]).astype(jnp.float32)

    if h is None:
        h0 = jnp.zeros((B, H), jnp.float32)
        c0 = jnp.zeros((B, H), jnp.float32)
    else:
        h0, c0 = h[0][0], h[1][0]

    def step(carry, x_t):
        hh, cc = carry
        z = (jnp.dot(x_t.astype(matmul_dtype), wih_t,
                     preferred_element_type=jnp.float32)
             + jnp.dot(hh.astype(matmul_dtype), whh_t,
                       preferred_element_type=jnp.float32) + b)
        i_g = jax.nn.sigmoid(z[:, 0 * H:1 * H])
        f_g = jax.nn.sigmoid(z[:, 1 * H:2 * H])
        g_g = jnp.tanh(z[:, 2 * H:3 * H])
        o_g = jax.nn.sigmoid(z[:, 3 * H:4 * H])
        cc = f_g * cc + i_g * g_g
        hh = o_g * jnp.tanh(cc)
        return (hh, cc), None

    (hT, cT), _ = lax.scan(step, (h0, c0), jnp.swapaxes(x, 0, 1))
    q = jnp.dot(hT.astype(matmul_dtype), wfc_t,
                preferred_element_type=jnp.float32) + params["b_fc"]
    return q, (hT[None], cT[None])


def init_params(key, input_size, hidden_size, output_size):
    """Deterministic init, uniform(-1/sqrt(H), 1/sqrt(H)) like PyTorch defaults."""
    ks = jax.random.split(key, 6)
    bound = 1.0 / jnp.sqrt(hidden_size)

    def u(k, shape):
        return jax.random.uniform(k, shape, jnp.float32, -bound, bound)

    return {
        "w_ih": u(ks[0], (4 * hidden_size, input_size)),
        "w_hh": u(ks[1], (4 * hidden_size, hidden_size)),
        "b_ih": u(ks[2], (4 * hidden_size,)),
        "b_hh": u(ks[3], (4 * hidden_size,)),
        "w_fc": u(ks[4], (output_size, hidden_size)),
        "b_fc": u(ks[5], (output_size,)),
    }


if __name__ == "__main__":
    # H = 128 is the module's default hidden_size and keeps gate slices
    # lane-aligned (each gate is exactly one 128-lane group).
    B, T, D_in, H, D_out = 2, 8, 16, 128, 4

    key = jax.random.PRNGKey(0)
    k_x, k_p = jax.random.split(key)
    x = jax.random.normal(k_x, (B, T, D_in), jnp.float32)
    params = init_params(k_p, D_in, H, D_out)

    q, (h_n, c_n) = recurrent_dqn_forward(x, params)
    jax.block_until_ready((q, h_n, c_n))

    q_ref, (h_ref, c_ref) = recurrent_dqn_reference(x, params)
    assert q.shape == (B, D_out) and h_n.shape == (1, B, H) and c_n.shape == (1, B, H)
    assert jnp.allclose(q, q_ref, atol=5e-3, rtol=5e-3), float(jnp.abs(q - q_ref).max())
    assert jnp.allclose(h_n, h_ref, atol=5e-3, rtol=5e-3)
    assert jnp.allclose(c_n, c_ref, atol=5e-3, rtol=5e-3)

    print("KERNEL_OK")
</pallas_src>

<mosaic_0001>
module attributes {stable_mosaic.version = 11 : i64} {
  func.func @lstm_dqn_kernel(%arg0: i32, %arg1: memref<8x16x16xbf16, #tpu.memory_space<vmem>>, %arg2: memref<16x128xf32, #tpu.memory_space<vmem>>, %arg3: memref<16x128xf32, #tpu.memory_space<vmem>>, %arg4: memref<16x512xbf16, #tpu.memory_space<vmem>>, %arg5: memref<128x512xbf16, #tpu.memory_space<vmem>>, %arg6: memref<1x512xf32, #tpu.memory_space<vmem>>, %arg7: memref<128x128xbf16, #tpu.memory_space<vmem>>, %arg8: memref<1x128xf32, #tpu.memory_space<vmem>>, %arg9: memref<16x128xf32, #tpu.memory_space<vmem>>, %arg10: memref<16x128xf32, #tpu.memory_space<vmem>>, %arg11: memref<16x128xf32, #tpu.memory_space<vmem>>) attributes {dimension_semantics = [#tpu.dimension_semantics<parallel>], iteration_bounds = array<i64: 1>, scalar_prefetch = 0 : i64, scratch_operands = 0 : i64, tpu.core_type = #tpu.core_type<tc>, window_params = [{transform_indices = @transform_0, window_bounds = array<i64: 8, 16, 16>}, {transform_indices = @transform_1, window_bounds = array<i64: 16, 128>}, {transform_indices = @transform_2, window_bounds = array<i64: 16, 128>}, {pipeline_mode = #tpu.pipeline_mode<synchronous>, transform_indices = @transform_3, window_bounds = array<i64: 16, 512>}, {pipeline_mode = #tpu.pipeline_mode<synchronous>, transform_indices = @transform_4, window_bounds = array<i64: 128, 512>}, {pipeline_mode = #tpu.pipeline_mode<synchronous>, transform_indices = @transform_5, window_bounds = array<i64: 1, 512>}, {pipeline_mode = #tpu.pipeline_mode<synchronous>, transform_indices = @transform_6, window_bounds = array<i64: 128, 128>}, {pipeline_mode = #tpu.pipeline_mode<synchronous>, transform_indices = @transform_7, window_bounds = array<i64: 1, 128>}, {transform_indices = @transform_8, window_bounds = array<i64: 16, 128>}, {transform_indices = @transform_9, window_bounds = array<i64: 16, 128>}, {transform_indices = @transform_10, window_bounds = array<i64: 16, 128>}]} {
    %c0 = arith.constant 0 : index
    %c0_0 = arith.constant 0 : index
    %0 = vector.load %arg4[%c0, %c0_0] : memref<16x512xbf16, #tpu.memory_space<vmem>>, vector<16x512xbf16>
    %c0_1 = arith.constant 0 : index
    %c0_2 = arith.constant 0 : index
    %1 = vector.load %arg5[%c0_1, %c0_2] : memref<128x512xbf16, #tpu.memory_space<vmem>>, vector<128x512xbf16>
    %c0_3 = arith.constant 0 : index
    %c0_4 = arith.constant 0 : index
    %2 = vector.load %arg6[%c0_3, %c0_4] : memref<1x512xf32, #tpu.memory_space<vmem>>, vector<1x512xf32>
    %c0_5 = arith.constant 0 : index
    %c0_6 = arith.constant 0 : index
    %c0_7 = arith.constant 0 : index
    %3 = vector.load %arg1[%c0_5, %c0_6, %c0_7] : memref<8x16x16xbf16, #tpu.memory_space<vmem>>, vector<8x16x16xbf16>
    %4 = vector.shape_cast %3 : vector<8x16x16xbf16> to vector<128x16xbf16>
    %cst = arith.constant dense<0.000000e+00> : vector<128x512xf32>
    %5 = tpu.matmul %4, %0, %cst {dimension_numbers = #tpu.dot_dimension_numbers<[1], [0], [0], [1], [0, 0, 1, 1], [], []>} : vector<128x16xbf16>, vector<16x512xbf16>, vector<128x512xf32> -> vector<128x512xf32>
    %c0_8 = arith.constant 0 : index
    %c0_9 = arith.constant 0 : index
    %6 = vector.load %arg2[%c0_8, %c0_9] : memref<16x128xf32, #tpu.memory_space<vmem>>, vector<8x128xf32>
    %c0_10 = arith.constant 0 : index
    %c0_11 = arith.constant 0 : index
    %7 = vector.load %arg3[%c0_10, %c0_11] : memref<16x128xf32, #tpu.memory_space<vmem>>, vector<8x128xf32>
    %c8 = arith.constant 8 : index
    %c0_12 = arith.constant 0 : index
    %8 = vector.load %arg2[%c8, %c0_12] : memref<16x128xf32, #tpu.memory_space<vmem>>, vector<8x128xf32>
    %c8_13 = arith.constant 8 : index
    %c0_14 = arith.constant 0 : index
    %9 = vector.load %arg3[%c8_13, %c0_14] : memref<16x128xf32, #tpu.memory_space<vmem>>, vector<8x128xf32>
    %10 = vector.extract_strided_slice %5 {offsets = [0, 0], sizes = [8, 512], strides = [1, 1]} : vector<128x512xf32> to vector<8x512xf32>
    %11 = vector.broadcast %2 : vector<1x512xf32> to vector<8x512xf32>
    %12 = arith.addf %10, %11 : vector<8x512xf32>
    %13 = arith.truncf %6 : vector<8x128xf32> to vector<8x128xbf16>
    %cst_15 = arith.constant dense<0.000000e+00> : vector<8x512xf32>
    %14 = tpu.matmul %13, %1, %cst_15 {dimension_numbers = #tpu.dot_dimension_numbers<[1], [0], [0], [1], [0, 0, 1, 1], [], []>} : vector<8x128xbf16>, vector<128x512xbf16>, vector<8x512xf32> -> vector<8x512xf32>
    %15 = arith.addf %12, %14 : vector<8x512xf32>
    %16 = vector.extract_strided_slice %5 {offsets = [8, 0], sizes = [8, 512], strides = [1, 1]} : vector<128x512xf32> to vector<8x512xf32>
    %17 = vector.broadcast %2 : vector<1x512xf32> to vector<8x512xf32>
    %18 = arith.addf %16, %17 : vector<8x512xf32>
    %19 = arith.truncf %8 : vector<8x128xf32> to vector<8x128xbf16>
    %cst_16 = arith.constant dense<0.000000e+00> : vector<8x512xf32>
    %20 = tpu.matmul %19, %1, %cst_16 {dimension_numbers = #tpu.dot_dimension_numbers<[1], [0], [0], [1], [0, 0, 1, 1], [], []>} : vector<8x128xbf16>, vector<128x512xbf16>, vector<8x512xf32> -> vector<8x512xf32>
    %21 = arith.addf %18, %20 : vector<8x512xf32>
    %22 = vector.extract_strided_slice %15 {offsets = [0, 0], sizes = [8, 128], strides = [1, 1]} : vector<8x512xf32> to vector<8x128xf32>
    %23 = arith.negf %22 : vector<8x128xf32>
    %24 = math.exp %23 : vector<8x128xf32>
    %cst_17 = arith.constant 1.000000e+00 : f32
    %25 = vector.broadcast %cst_17 : f32 to vector<8x128xf32>
    %26 = arith.addf %25, %24 : vector<8x128xf32>
    %27 = arith.divf %25, %26 : vector<8x128xf32>
    %28 = vector.extract_strided_slice %15 {offsets = [0, 128], sizes = [8, 128], strides = [1, 1]} : vector<8x512xf32> to vector<8x128xf32>
    %29 = arith.negf %28 : vector<8x128xf32>
    %30 = math.exp %29 : vector<8x128xf32>
    %cst_18 = arith.constant 1.000000e+00 : f32
    %31 = vector.broadcast %cst_18 : f32 to vector<8x128xf32>
    %32 = arith.addf %31, %30 : vector<8x128xf32>
    %33 = arith.divf %31, %32 : vector<8x128xf32>
    %34 = vector.extract_strided_slice %15 {offsets = [0, 256], sizes = [8, 128], strides = [1, 1]} : vector<8x512xf32> to vector<8x128xf32>
    %35 = math.tanh %34 : vector<8x128xf32>
    %36 = vector.extract_strided_slice %15 {offsets = [0, 384], sizes = [8, 128], strides = [1, 1]} : vector<8x512xf32> to vector<8x128xf32>
    %37 = arith.negf %36 : vector<8x128xf32>
    %38 = math.exp %37 : vector<8x128xf32>
    %cst_19 = arith.constant 1.000000e+00 : f32
    %39 = vector.broadcast %cst_19 : f32 to vector<8x128xf32>
    %40 = arith.addf %39, %38 : vector<8x128xf32>
    %41 = arith.divf %39, %40 : vector<8x128xf32>
    %42 = arith.mulf %33, %7 : vector<8x128xf32>
    %43 = arith.mulf %27, %35 : vector<8x128xf32>
    %44 = arith.addf %42, %43 : vector<8x128xf32>
    %45 = math.tanh %44 : vector<8x128xf32>
    %46 = arith.mulf %41, %45 : vector<8x128xf32>
    %47 = vector.extract_strided_slice %21 {offsets = [0, 0], sizes = [8, 128], strides = [1, 1]} : vector<8x512xf32> to vector<8x128xf32>
    %48 = arith.negf %47 : vector<8x128xf32>
    %49 = math.exp %48 : vector<8x128xf32>
    %cst_20 = arith.constant 1.000000e+00 : f32
    %50 = vector.broadcast %cst_20 : f32 to vector<8x128xf32>
    %51 = arith.addf %50, %49 : vector<8x128xf32>
    %52 = arith.divf %50, %51 : vector<8x128xf32>
    %53 = vector.extract_strided_slice %21 {offsets = [0, 128], sizes = [8, 128], strides = [1, 1]} : vector<8x512xf32> to vector<8x128xf32>
    %54 = arith.negf %53 : vector<8x128xf32>
    %55 = math.exp %54 : vector<8x128xf32>
    %cst_21 = arith.constant 1.000000e+00 : f32
    %56 = vector.broadcast %cst_21 : f32 to vector<8x128xf32>
    %57 = arith.addf %56, %55 : vector<8x128xf32>
    %58 = arith.divf %56, %57 : vector<8x128xf32>
    %59 = vector.extract_strided_slice %21 {offsets = [0, 256], sizes = [8, 128], strides = [1, 1]} : vector<8x512xf32> to vector<8x128xf32>
    %60 = math.tanh %59 : vector<8x128xf32>
    %61 = vector.extract_strided_slice %21 {offsets = [0, 384], sizes = [8, 128], strides = [1, 1]} : vector<8x512xf32> to vector<8x128xf32>
    %62 = arith.negf %61 : vector<8x128xf32>
    %63 = math.exp %62 : vector<8x128xf32>
    %cst_22 = arith.constant 1.000000e+00 : f32
    %64 = vector.broadcast %cst_22 : f32 to vector<8x128xf32>
    %65 = arith.addf %64, %63 : vector<8x128xf32>
    %66 = arith.divf %64, %65 : vector<8x128xf32>
    %67 = arith.mulf %58, %9 : vector<8x128xf32>
    %68 = arith.mulf %52, %60 : vector<8x128xf32>
    %69 = arith.addf %67, %68 : vector<8x128xf32>
    %70 = math.tanh %69 : vector<8x128xf32>
    %71 = arith.mulf %66, %70 : vector<8x128xf32>
    %72 = vector.extract_strided_slice %5 {offsets = [16, 0], sizes = [8, 512], strides = [1, 1]} : vector<128x512xf32> to vector<8x512xf32>
    %73 = vector.broadcast %2 : vector<1x512xf32> to vector<8x512xf32>
    %74 = arith.addf %72, %73 : vector<8x512xf32>
    %75 = arith.truncf %46 : vector<8x128xf32> to vector<8x128xbf16>
    %cst_23 = arith.constant dense<0.000000e+00> : vector<8x512xf32>
    %76 = tpu.matmul %75, %1, %cst_23 {dimension_numbers = #tpu.dot_dimension_numbers<[1], [0], [0], [1], [0, 0, 1, 1], [], []>} : vector<8x128xbf16>, vector<128x512xbf16>, vector<8x512xf32> -> vector<8x512xf32>
    %77 = arith.addf %74, %76 : vector<8x512xf32>
    %78 = vector.extract_strided_slice %5 {offsets = [24, 0], sizes = [8, 512], strides = [1, 1]} : vector<128x512xf32> to vector<8x512xf32>
    %79 = vector.broadcast %2 : vector<1x512xf32> to vector<8x512xf32>
    %80 = arith.addf %78, %79 : vector<8x512xf32>
    %81 = arith.truncf %71 : vector<8x128xf32> to vector<8x128xbf16>
    %cst_24 = arith.constant dense<0.000000e+00> : vector<8x512xf32>
    %82 = tpu.matmul %81, %1, %cst_24 {dimension_numbers = #tpu.dot_dimension_numbers<[1], [0], [0], [1], [0, 0, 1, 1], [], []>} : vector<8x128xbf16>, vector<128x512xbf16>, vector<8x512xf32> -> vector<8x512xf32>
    %83 = arith.addf %80, %82 : vector<8x512xf32>
    %84 = vector.extract_strided_slice %77 {offsets = [0, 0], sizes = [8, 128], strides = [1, 1]} : vector<8x512xf32> to vector<8x128xf32>
    %85 = arith.negf %84 : vector<8x128xf32>
    %86 = math.exp %85 : vector<8x128xf32>
    %cst_25 = arith.constant 1.000000e+00 : f32
    %87 = vector.broadcast %cst_25 : f32 to vector<8x128xf32>
    %88 = arith.addf %87, %86 : vector<8x128xf32>
    %89 = arith.divf %87, %88 : vector<8x128xf32>
    %90 = vector.extract_strided_slice %77 {offsets = [0, 128], sizes = [8, 128], strides = [1, 1]} : vector<8x512xf32> to vector<8x128xf32>
    %91 = arith.negf %90 : vector<8x128xf32>
    %92 = math.exp %91 : vector<8x128xf32>
    %cst_26 = arith.constant 1.000000e+00 : f32
    %93 = vector.broadcast %cst_26 : f32 to vector<8x128xf32>
    %94 = arith.addf %93, %92 : vector<8x128xf32>
    %95 = arith.divf %93, %94 : vector<8x128xf32>
    %96 = vector.extract_strided_slice %77 {offsets = [0, 256], sizes = [8, 128], strides = [1, 1]} : vector<8x512xf32> to vector<8x128xf32>
    %97 = math.tanh %96 : vector<8x128xf32>
    %98 = vector.extract_strided_slice %77 {offsets = [0, 384], sizes = [8, 128], strides = [1, 1]} : vector<8x512xf32> to vector<8x128xf32>
    %99 = arith.negf %98 : vector<8x128xf32>
    %100 = math.exp %99 : vector<8x128xf32>
    %cst_27 = arith.constant 1.000000e+00 : f32
    %101 = vector.broadcast %cst_27 : f32 to vector<8x128xf32>
    %102 = arith.addf %101, %100 : vector<8x128xf32>
    %103 = arith.divf %101, %102 : vector<8x128xf32>
    %104 = arith.mulf %95, %44 : vector<8x128xf32>
    %105 = arith.mulf %89, %97 : vector<8x128xf32>
    %106 = arith.addf %104, %105 : vector<8x128xf32>
    %107 = math.tanh %106 : vector<8x128xf32>
    %108 = arith.mulf %103, %107 : vector<8x128xf32>
    %109 = vector.extract_strided_slice %83 {offsets = [0, 0], sizes = [8, 128], strides = [1, 1]} : vector<8x512xf32> to vector<8x128xf32>
    %110 = arith.negf %109 : vector<8x128xf32>
    %111 = math.exp %110 : vector<8x128xf32>
    %cst_28 = arith.constant 1.000000e+00 : f32
    %112 = vector.broadcast %cst_28 : f32 to vector<8x128xf32>
    %113 = arith.addf %112, %111 : vector<8x128xf32>
    %114 = arith.divf %112, %113 : vector<8x128xf32>
    %115 = vector.extract_strided_slice %83 {offsets = [0, 128], sizes = [8, 128], strides = [1, 1]} : vector<8x512xf32> to vector<8x128xf32>
    %116 = arith.negf %115 : vector<8x128xf32>
    %117 = math.exp %116 : vector<8x128xf32>
    %cst_29 = arith.constant 1.000000e+00 : f32
    %118 = vector.broadcast %cst_29 : f32 to vector<8x128xf32>
    %119 = arith.addf %118, %117 : vector<8x128xf32>
    %120 = arith.divf %118, %119 : vector<8x128xf32>
    %121 = vector.extract_strided_slice %83 {offsets = [0, 256], sizes = [8, 128], strides = [1, 1]} : vector<8x512xf32> to vector<8x128xf32>
    %122 = math.tanh %121 : vector<8x128xf32>
    %123 = vector.extract_strided_slice %83 {offsets = [0, 384], sizes = [8, 128], strides = [1, 1]} : vector<8x512xf32> to vector<8x128xf32>
    %124 = arith.negf %123 : vector<8x128xf32>
    %125 = math.exp %124 : vector<8x128xf32>
    %cst_30 = arith.constant 1.000000e+00 : f32
    %126 = vector.broadcast %cst_30 : f32 to vector<8x128xf32>
    %127 = arith.addf %126, %125 : vector<8x128xf32>
    %128 = arith.divf %126, %127 : vector<8x128xf32>
    %129 = arith.mulf %120, %69 : vector<8x128xf32>
    %130 = arith.mulf %114, %122 : vector<8x128xf32>
    %131 = arith.addf %129, %130 : vector<8x128xf32>
    %132 = math.tanh %131 : vector<8x128xf32>
    %133 = arith.mulf %128, %132 : vector<8x128xf32>
    %134 = vector.extract_strided_slice %5 {offsets = [32, 0], sizes = [8, 512], strides = [1, 1]} : vector<128x512xf32> to vector<8x512xf32>
    %135 = vector.broadcast %2 : vector<1x512xf32> to vector<8x512xf32>
    %136 = arith.addf %134, %135 : vector<8x512xf32>
    %137 = arith.truncf %108 : vector<8x128xf32> to vector<8x128xbf16>
    %cst_31 = arith.constant dense<0.000000e+00> : vector<8x512xf32>
    %138 = tpu.matmul %137, %1, %cst_31 {dimension_numbers = #tpu.dot_dimension_numbers<[1], [0], [0], [1], [0, 0, 1, 1], [], []>} : vector<8x128xbf16>, vector<128x512xbf16>, vector<8x512xf32> -> vector<8x512xf32>
    %139 = arith.addf %136, %138 : vector<8x512xf32>
    %140 = vector.extract_strided_slice %5 {offsets = [40, 0], sizes = [8, 512], strides = [1, 1]} : vector<128x512xf32> to vector<8x512xf32>
    %141 = vector.broadcast %2 : vector<1x512xf32> to vector<8x512xf32>
    %142 = arith.addf %140, %141 : vector<8x512xf32>
    %143 = arith.truncf %133 : vector<8x128xf32> to vector<8x128xbf16>
    %cst_32 = arith.constant dense<0.000000e+00> : vector<8x512xf32>
    %144 = tpu.matmul %143, %1, %cst_32 {dimension_numbers = #tpu.dot_dimension_numbers<[1], [0], [0], [1], [0, 0, 1, 1], [], []>} : vector<8x128xbf16>, vector<128x512xbf16>, vector<8x512xf32> -> vector<8x512xf32>
    %145 = arith.addf %142, %144 : vector<8x512xf32>
    %146 = vector.extract_strided_slice %139 {offsets = [0, 0], sizes = [8, 128], strides = [1, 1]} : vector<8x512xf32> to vector<8x128xf32>
    %147 = arith.negf %146 : vector<8x128xf32>
    %148 = math.exp %147 : vector<8x128xf32>
    %cst_33 = arith.constant 1.000000e+00 : f32
    %149 = vector.broadcast %cst_33 : f32 to vector<8x128xf32>
    %150 = arith.addf %149, %148 : vector<8x128xf32>
    %151 = arith.divf %149, %150 : vector<8x128xf32>
    %152 = vector.extract_strided_slice %139 {offsets = [0, 128], sizes = [8, 128], strides = [1, 1]} : vector<8x512xf32> to vector<8x128xf32>
    %153 = arith.negf %152 : vector<8x128xf32>
    %154 = math.exp %153 : vector<8x128xf32>
    %cst_34 = arith.constant 1.000000e+00 : f32
    %155 = vector.broadcast %cst_34 : f32 to vector<8x128xf32>
    %156 = arith.addf %155, %154 : vector<8x128xf32>
    %157 = arith.divf %155, %156 : vector<8x128xf32>
    %158 = vector.extract_strided_slice %139 {offsets = [0, 256], sizes = [8, 128], strides = [1, 1]} : vector<8x512xf32> to vector<8x128xf32>
    %159 = math.tanh %158 : vector<8x128xf32>
    %160 = vector.extract_strided_slice %139 {offsets = [0, 384], sizes = [8, 128], strides = [1, 1]} : vector<8x512xf32> to vector<8x128xf32>
    %161 = arith.negf %160 : vector<8x128xf32>
    %162 = math.exp %161 : vector<8x128xf32>
    %cst_35 = arith.constant 1.000000e+00 : f32
    %163 = vector.broadcast %cst_35 : f32 to vector<8x128xf32>
    %164 = arith.addf %163, %162 : vector<8x128xf32>
    %165 = arith.divf %163, %164 : vector<8x128xf32>
    %166 = arith.mulf %157, %106 : vector<8x128xf32>
    %167 = arith.mulf %151, %159 : vector<8x128xf32>
    %168 = arith.addf %166, %167 : vector<8x128xf32>
    %169 = math.tanh %168 : vector<8x128xf32>
    %170 = arith.mulf %165, %169 : vector<8x128xf32>
    %171 = vector.extract_strided_slice %145 {offsets = [0, 0], sizes = [8, 128], strides = [1, 1]} : vector<8x512xf32> to vector<8x128xf32>
    %172 = arith.negf %171 : vector<8x128xf32>
    %173 = math.exp %172 : vector<8x128xf32>
    %cst_36 = arith.constant 1.000000e+00 : f32
    %174 = vector.broadcast %cst_36 : f32 to vector<8x128xf32>
    %175 = arith.addf %174, %173 : vector<8x128xf32>
    %176 = arith.divf %174, %175 : vector<8x128xf32>
    %177 = vector.extract_strided_slice %145 {offsets = [0, 128], sizes = [8, 128], strides = [1, 1]} : vector<8x512xf32> to vector<8x128xf32>
    %178 = arith.negf %177 : vector<8x128xf32>
    %179 = math.exp %178 : vector<8x128xf32>
    %cst_37 = arith.constant 1.000000e+00 : f32
    %180 = vector.broadcast %cst_37 : f32 to vector<8x128xf32>
    %181 = arith.addf %180, %179 : vector<8x128xf32>
    %182 = arith.divf %180, %181 : vector<8x128xf32>
    %183 = vector.extract_strided_slice %145 {offsets = [0, 256], sizes = [8, 128], strides = [1, 1]} : vector<8x512xf32> to vector<8x128xf32>
    %184 = math.tanh %183 : vector<8x128xf32>
    %185 = vector.extract_strided_slice %145 {offsets = [0, 384], sizes = [8, 128], strides = [1, 1]} : vector<8x512xf32> to vector<8x128xf32>
    %186 = arith.negf %185 : vector<8x128xf32>
    %187 = math.exp %186 : vector<8x128xf32>
    %cst_38 = arith.constant 1.000000e+00 : f32
    %188 = vector.broadcast %cst_38 : f32 to vector<8x128xf32>
    %189 = arith.addf %188, %187 : vector<8x128xf32>
    %190 = arith.divf %188, %189 : vector<8x128xf32>
    %191 = arith.mulf %182, %131 : vector<8x128xf32>
    %192 = arith.mulf %176, %184 : vector<8x128xf32>
    %193 = arith.addf %191, %192 : vector<8x128xf32>
    %194 = math.tanh %193 : vector<8x128xf32>
    %195 = arith.mulf %190, %194 : vector<8x128xf32>
    %196 = vector.extract_strided_slice %5 {offsets = [48, 0], sizes = [8, 512], strides = [1, 1]} : vector<128x512xf32> to vector<8x512xf32>
    %197 = vector.broadcast %2 : vector<1x512xf32> to vector<8x512xf32>
    %198 = arith.addf %196, %197 : vector<8x512xf32>
    %199 = arith.truncf %170 : vector<8x128xf32> to vector<8x128xbf16>
    %cst_39 = arith.constant dense<0.000000e+00> : vector<8x512xf32>
    %200 = tpu.matmul %199, %1, %cst_39 {dimension_numbers = #tpu.dot_dimension_numbers<[1], [0], [0], [1], [0, 0, 1, 1], [], []>} : vector<8x128xbf16>, vector<128x512xbf16>, vector<8x512xf32> -> vector<8x512xf32>
    %201 = arith.addf %198, %200 : vector<8x512xf32>
    %202 = vector.extract_strided_slice %5 {offsets = [56, 0], sizes = [8, 512], strides = [1, 1]} : vector<128x512xf32> to vector<8x512xf32>
    %203 = vector.broadcast %2 : vector<1x512xf32> to vector<8x512xf32>
    %204 = arith.addf %202, %203 : vector<8x512xf32>
    %205 = arith.truncf %195 : vector<8x128xf32> to vector<8x128xbf16>
    %cst_40 = arith.constant dense<0.000000e+00> : vector<8x512xf32>
    %206 = tpu.matmul %205, %1, %cst_40 {dimension_numbers = #tpu.dot_dimension_numbers<[1], [0], [0], [1], [0, 0, 1, 1], [], []>} : vector<8x128xbf16>, vector<128x512xbf16>, vector<8x512xf32> -> vector<8x512xf32>
    %207 = arith.addf %204, %206 : vector<8x512xf32>
    %208 = vector.extract_strided_slice %201 {offsets = [0, 0], sizes = [8, 128], strides = [1, 1]} : vector<8x512xf32> to vector<8x128xf32>
    %209 = arith.negf %208 : vector<8x128xf32>
    %210 = math.exp %209 : vector<8x128xf32>
    %cst_41 = arith.constant 1.000000e+00 : f32
    %211 = vector.broadcast %cst_41 : f32 to vector<8x128xf32>
    %212 = arith.addf %211, %210 : vector<8x128xf32>
    %213 = arith.divf %211, %212 : vector<8x128xf32>
    %214 = vector.extract_strided_slice %201 {offsets = [0, 128], sizes = [8, 128], strides = [1, 1]} : vector<8x512xf32> to vector<8x128xf32>
    %215 = arith.negf %214 : vector<8x128xf32>
    %216 = math.exp %215 : vector<8x128xf32>
    %cst_42 = arith.constant 1.000000e+00 : f32
    %217 = vector.broadcast %cst_42 : f32 to vector<8x128xf32>
    %218 = arith.addf %217, %216 : vector<8x128xf32>
    %219 = arith.divf %217, %218 : vector<8x128xf32>
    %220 = vector.extract_strided_slice %201 {offsets = [0, 256], sizes = [8, 128], strides = [1, 1]} : vector<8x512xf32> to vector<8x128xf32>
    %221 = math.tanh %220 : vector<8x128xf32>
    %222 = vector.extract_strided_slice %201 {offsets = [0, 384], sizes = [8, 128], strides = [1, 1]} : vector<8x512xf32> to vector<8x128xf32>
    %223 = arith.negf %222 : vector<8x128xf32>
    %224 = math.exp %223 : vector<8x128xf32>
    %cst_43 = arith.constant 1.000000e+00 : f32
    %225 = vector.broadcast %cst_43 : f32 to vector<8x128xf32>
    %226 = arith.addf %225, %224 : vector<8x128xf32>
    %227 = arith.divf %225, %226 : vector<8x128xf32>
    %228 = arith.mulf %219, %168 : vector<8x128xf32>
    %229 = arith.mulf %213, %221 : vector<8x128xf32>
    %230 = arith.addf %228, %229 : vector<8x128xf32>
    %231 = math.tanh %230 : vector<8x128xf32>
    %232 = arith.mulf %227, %231 : vector<8x128xf32>
    %233 = vector.extract_strided_slice %207 {offsets = [0, 0], sizes = [8, 128], strides = [1, 1]} : vector<8x512xf32> to vector<8x128xf32>
    %234 = arith.negf %233 : vector<8x128xf32>
    %235 = math.exp %234 : vector<8x128xf32>
    %cst_44 = arith.constant 1.000000e+00 : f32
    %236 = vector.broadcast %cst_44 : f32 to vector<8x128xf32>
    %237 = arith.addf %236, %235 : vector<8x128xf32>
    %238 = arith.divf %236, %237 : vector<8x128xf32>
    %239 = vector.extract_strided_slice %207 {offsets = [0, 128], sizes = [8, 128], strides = [1, 1]} : vector<8x512xf32> to vector<8x128xf32>
    %240 = arith.negf %239 : vector<8x128xf32>
    %241 = math.exp %240 : vector<8x128xf32>
    %cst_45 = arith.constant 1.000000e+00 : f32
    %242 = vector.broadcast %cst_45 : f32 to vector<8x128xf32>
    %243 = arith.addf %242, %241 : vector<8x128xf32>
    %244 = arith.divf %242, %243 : vector<8x128xf32>
    %245 = vector.extract_strided_slice %207 {offsets = [0, 256], sizes = [8, 128], strides = [1, 1]} : vector<8x512xf32> to vector<8x128xf32>
    %246 = math.tanh %245 : vector<8x128xf32>
    %247 = vector.extract_strided_slice %207 {offsets = [0, 384], sizes = [8, 128], strides = [1, 1]} : vector<8x512xf32> to vector<8x128xf32>
    %248 = arith.negf %247 : vector<8x128xf32>
    %249 = math.exp %248 : vector<8x128xf32>
    %cst_46 = arith.constant 1.000000e+00 : f32
    %250 = vector.broadcast %cst_46 : f32 to vector<8x128xf32>
    %251 = arith.addf %250, %249 : vector<8x128xf32>
    %252 = arith.divf %250, %251 : vector<8x128xf32>
    %253 = arith.mulf %244, %193 : vector<8x128xf32>
    %254 = arith.mulf %238, %246 : vector<8x128xf32>
    %255 = arith.addf %253, %254 : vector<8x128xf32>
    %256 = math.tanh %255 : vector<8x128xf32>
    %257 = arith.mulf %252, %256 : vector<8x128xf32>
    %258 = vector.extract_strided_slice %5 {offsets = [64, 0], sizes = [8, 512], strides = [1, 1]} : vector<128x512xf32> to vector<8x512xf32>
    %259 = vector.broadcast %2 : vector<1x512xf32> to vector<8x512xf32>
    %260 = arith.addf %258, %259 : vector<8x512xf32>
    %261 = arith.truncf %232 : vector<8x128xf32> to vector<8x128xbf16>
    %cst_47 = arith.constant dense<0.000000e+00> : vector<8x512xf32>
    %262 = tpu.matmul %261, %1, %cst_47 {dimension_numbers = #tpu.dot_dimension_numbers<[1], [0], [0], [1], [0, 0, 1, 1], [], []>} : vector<8x128xbf16>, vector<128x512xbf16>, vector<8x512xf32> -> vector<8x512xf32>
    %263 = arith.addf %260, %262 : vector<8x512xf32>
    %264 = vector.extract_strided_slice %5 {offsets = [72, 0], sizes = [8, 512], strides = [1, 1]} : vector<128x512xf32> to vector<8x512xf32>
    %265 = vector.broadcast %2 : vector<1x512xf32> to vector<8x512xf32>
    %266 = arith.addf %264, %265 : vector<8x512xf32>
    %267 = arith.truncf %257 : vector<8x128xf32> to vector<8x128xbf16>
    %cst_48 = arith.constant dense<0.000000e+00> : vector<8x512xf32>
    %268 = tpu.matmul %267, %1, %cst_48 {dimension_numbers = #tpu.dot_dimension_numbers<[1], [0], [0], [1], [0, 0, 1, 1], [], []>} : vector<8x128xbf16>, vector<128x512xbf16>, vector<8x512xf32> -> vector<8x512xf32>
    %269 = arith.addf %266, %268 : vector<8x512xf32>
    %270 = vector.extract_strided_slice %263 {offsets = [0, 0], sizes = [8, 128], strides = [1, 1]} : vector<8x512xf32> to vector<8x128xf32>
    %271 = arith.negf %270 : vector<8x128xf32>
    %272 = math.exp %271 : vector<8x128xf32>
    %cst_49 = arith.constant 1.000000e+00 : f32
    %273 = vector.broadcast %cst_49 : f32 to vector<8x128xf32>
    %274 = arith.addf %273, %272 : vector<8x128xf32>
    %275 = arith.divf %273, %274 : vector<8x128xf32>
    %276 = vector.extract_strided_slice %263 {offsets = [0, 128], sizes = [8, 128], strides = [1, 1]} : vector<8x512xf32> to vector<8x128xf32>
    %277 = arith.negf %276 : vector<8x128xf32>
    %278 = math.exp %277 : vector<8x128xf32>
    %cst_50 = arith.constant 1.000000e+00 : f32
    %279 = vector.broadcast %cst_50 : f32 to vector<8x128xf32>
    %280 = arith.addf %279, %278 : vector<8x128xf32>
    %281 = arith.divf %279, %280 : vector<8x128xf32>
    %282 = vector.extract_strided_slice %263 {offsets = [0, 256], sizes = [8, 128], strides = [1, 1]} : vector<8x512xf32> to vector<8x128xf32>
    %283 = math.tanh %282 : vector<8x128xf32>
    %284 = vector.extract_strided_slice %263 {offsets = [0, 384], sizes = [8, 128], strides = [1, 1]} : vector<8x512xf32> to vector<8x128xf32>
    %285 = arith.negf %284 : vector<8x128xf32>
    %286 = math.exp %285 : vector<8x128xf32>
    %cst_51 = arith.constant 1.000000e+00 : f32
    %287 = vector.broadcast %cst_51 : f32 to vector<8x128xf32>
    %288 = arith.addf %287, %286 : vector<8x128xf32>
    %289 = arith.divf %287, %288 : vector<8x128xf32>
    %290 = arith.mulf %281, %230 : vector<8x128xf32>
    %291 = arith.mulf %275, %283 : vector<8x128xf32>
    %292 = arith.addf %290, %291 : vector<8x128xf32>
    %293 = math.tanh %292 : vector<8x128xf32>
    %294 = arith.mulf %289, %293 : vector<8x128xf32>
    %295 = vector.extract_strided_slice %269 {offsets = [0, 0], sizes = [8, 128], strides = [1, 1]} : vector<8x512xf32> to vector<8x128xf32>
    %296 = arith.negf %295 : vector<8x128xf32>
    %297 = math.exp %296 : vector<8x128xf32>
    %cst_52 = arith.constant 1.000000e+00 : f32
    %298 = vector.broadcast %cst_52 : f32 to vector<8x128xf32>
    %299 = arith.addf %298, %297 : vector<8x128xf32>
    %300 = arith.divf %298, %299 : vector<8x128xf32>
    %301 = vector.extract_strided_slice %269 {offsets = [0, 128], sizes = [8, 128], strides = [1, 1]} : vector<8x512xf32> to vector<8x128xf32>
    %302 = arith.negf %301 : vector<8x128xf32>
    %303 = math.exp %302 : vector<8x128xf32>
    %cst_53 = arith.constant 1.000000e+00 : f32
    %304 = vector.broadcast %cst_53 : f32 to vector<8x128xf32>
    %305 = arith.addf %304, %303 : vector<8x128xf32>
    %306 = arith.divf %304, %305 : vector<8x128xf32>
    %307 = vector.extract_strided_slice %269 {offsets = [0, 256], sizes = [8, 128], strides = [1, 1]} : vector<8x512xf32> to vector<8x128xf32>
    %308 = math.tanh %307 : vector<8x128xf32>
    %309 = vector.extract_strided_slice %269 {offsets = [0, 384], sizes = [8, 128], strides = [1, 1]} : vector<8x512xf32> to vector<8x128xf32>
    %310 = arith.negf %309 : vector<8x128xf32>
    %311 = math.exp %310 : vector<8x128xf32>
    %cst_54 = arith.constant 1.000000e+00 : f32
    %312 = vector.broadcast %cst_54 : f32 to vector<8x128xf32>
    %313 = arith.addf %312, %311 : vector<8x128xf32>
    %314 = arith.divf %312, %313 : vector<8x128xf32>
    %315 = arith.mulf %306, %255 : vector<8x128xf32>
    %316 = arith.mulf %300, %308 : vector<8x128xf32>
    %317 = arith.addf %315, %316 : vector<8x128xf32>
    %318 = math.tanh %317 : vector<8x128xf32>
    %319 = arith.mulf %314, %318 : vector<8x128xf32>
    %320 = vector.extract_strided_slice %5 {offsets = [80, 0], sizes = [8, 512], strides = [1, 1]} : vector<128x512xf32> to vector<8x512xf32>
    %321 = vector.broadcast %2 : vector<1x512xf32> to vector<8x512xf32>
    %322 = arith.addf %320, %321 : vector<8x512xf32>
    %323 = arith.truncf %294 : vector<8x128xf32> to vector<8x128xbf16>
    %cst_55 = arith.constant dense<0.000000e+00> : vector<8x512xf32>
    %324 = tpu.matmul %323, %1, %cst_55 {dimension_numbers = #tpu.dot_dimension_numbers<[1], [0], [0], [1], [0, 0, 1, 1], [], []>} : vector<8x128xbf16>, vector<128x512xbf16>, vector<8x512xf32> -> vector<8x512xf32>
    %325 = arith.addf %322, %324 : vector<8x512xf32>
    %326 = vector.extract_strided_slice %5 {offsets = [88, 0], sizes = [8, 512], strides = [1, 1]} : vector<128x512xf32> to vector<8x512xf32>
    %327 = vector.broadcast %2 : vector<1x512xf32> to vector<8x512xf32>
    %328 = arith.addf %326, %327 : vector<8x512xf32>
    %329 = arith.truncf %319 : vector<8x128xf32> to vector<8x128xbf16>
    %cst_56 = arith.constant dense<0.000000e+00> : vector<8x512xf32>
    %330 = tpu.matmul %329, %1, %cst_56 {dimension_numbers = #tpu.dot_dimension_numbers<[1], [0], [0], [1], [0, 0, 1, 1], [], []>} : vector<8x128xbf16>, vector<128x512xbf16>, vector<8x512xf32> -> vector<8x512xf32>
    %331 = arith.addf %328, %330 : vector<8x512xf32>
    %332 = vector.extract_strided_slice %325 {offsets = [0, 0], sizes = [8, 128], strides = [1, 1]} : vector<8x512xf32> to vector<8x128xf32>
    %333 = arith.negf %332 : vector<8x128xf32>
    %334 = math.exp %333 : vector<8x128xf32>
    %cst_57 = arith.constant 1.000000e+00 : f32
    %335 = vector.broadcast %cst_57 : f32 to vector<8x128xf32>
    %336 = arith.addf %335, %334 : vector<8x128xf32>
    %337 = arith.divf %335, %336 : vector<8x128xf32>
    %338 = vector.extract_strided_slice %325 {offsets = [0, 128], sizes = [8, 128], strides = [1, 1]} : vector<8x512xf32> to vector<8x128xf32>
    %339 = arith.negf %338 : vector<8x128xf32>
    %340 = math.exp %339 : vector<8x128xf32>
    %cst_58 = arith.constant 1.000000e+00 : f32
    %341 = vector.broadcast %cst_58 : f32 to vector<8x128xf32>
    %342 = arith.addf %341, %340 : vector<8x128xf32>
    %343 = arith.divf %341, %342 : vector<8x128xf32>
    %344 = vector.extract_strided_slice %325 {offsets = [0, 256], sizes = [8, 128], strides = [1, 1]} : vector<8x512xf32> to vector<8x128xf32>
    %345 = math.tanh %344 : vector<8x128xf32>
    %346 = vector.extract_strided_slice %325 {offsets = [0, 384], sizes = [8, 128], strides = [1, 1]} : vector<8x512xf32> to vector<8x128xf32>
    %347 = arith.negf %346 : vector<8x128xf32>
    %348 = math.exp %347 : vector<8x128xf32>
    %cst_59 = arith.constant 1.000000e+00 : f32
    %349 = vector.broadcast %cst_59 : f32 to vector<8x128xf32>
    %350 = arith.addf %349, %348 : vector<8x128xf32>
    %351 = arith.divf %349, %350 : vector<8x128xf32>
    %352 = arith.mulf %343, %292 : vector<8x128xf32>
    %353 = arith.mulf %337, %345 : vector<8x128xf32>
    %354 = arith.addf %352, %353 : vector<8x128xf32>
    %355 = math.tanh %354 : vector<8x128xf32>
    %356 = arith.mulf %351, %355 : vector<8x128xf32>
    %357 = vector.extract_strided_slice %331 {offsets = [0, 0], sizes = [8, 128], strides = [1, 1]} : vector<8x512xf32> to vector<8x128xf32>
    %358 = arith.negf %357 : vector<8x128xf32>
    %359 = math.exp %358 : vector<8x128xf32>
    %cst_60 = arith.constant 1.000000e+00 : f32
    %360 = vector.broadcast %cst_60 : f32 to vector<8x128xf32>
    %361 = arith.addf %360, %359 : vector<8x128xf32>
    %362 = arith.divf %360, %361 : vector<8x128xf32>
    %363 = vector.extract_strided_slice %331 {offsets = [0, 128], sizes = [8, 128], strides = [1, 1]} : vector<8x512xf32> to vector<8x128xf32>
    %364 = arith.negf %363 : vector<8x128xf32>
    %365 = math.exp %364 : vector<8x128xf32>
    %cst_61 = arith.constant 1.000000e+00 : f32
    %366 = vector.broadcast %cst_61 : f32 to vector<8x128xf32>
    %367 = arith.addf %366, %365 : vector<8x128xf32>
    %368 = arith.divf %366, %367 : vector<8x128xf32>
    %369 = vector.extract_strided_slice %331 {offsets = [0, 256], sizes = [8, 128], strides = [1, 1]} : vector<8x512xf32> to vector<8x128xf32>
    %370 = math.tanh %369 : vector<8x128xf32>
    %371 = vector.extract_strided_slice %331 {offsets = [0, 384], sizes = [8, 128], strides = [1, 1]} : vector<8x512xf32> to vector<8x128xf32>
    %372 = arith.negf %371 : vector<8x128xf32>
    %373 = math.exp %372 : vector<8x128xf32>
    %cst_62 = arith.constant 1.000000e+00 : f32
    %374 = vector.broadcast %cst_62 : f32 to vector<8x128xf32>
    %375 = arith.addf %374, %373 : vector<8x128xf32>
    %376 = arith.divf %374, %375 : vector<8x128xf32>
    %377 = arith.mulf %368, %317 : vector<8x128xf32>
    %378 = arith.mulf %362, %370 : vector<8x128xf32>
    %379 = arith.addf %377, %378 : vector<8x128xf32>
    %380 = math.tanh %379 : vector<8x128xf32>
    %381 = arith.mulf %376, %380 : vector<8x128xf32>
    %382 = vector.extract_strided_slice %5 {offsets = [96, 0], sizes = [8, 512], strides = [1, 1]} : vector<128x512xf32> to vector<8x512xf32>
    %383 = vector.broadcast %2 : vector<1x512xf32> to vector<8x512xf32>
    %384 = arith.addf %382, %383 : vector<8x512xf32>
    %385 = arith.truncf %356 : vector<8x128xf32> to vector<8x128xbf16>
    %cst_63 = arith.constant dense<0.000000e+00> : vector<8x512xf32>
    %386 = tpu.matmul %385, %1, %cst_63 {dimension_numbers = #tpu.dot_dimension_numbers<[1], [0], [0], [1], [0, 0, 1, 1], [], []>} : vector<8x128xbf16>, vector<128x512xbf16>, vector<8x512xf32> -> vector<8x512xf32>
    %387 = arith.addf %384, %386 : vector<8x512xf32>
    %388 = vector.extract_strided_slice %5 {offsets = [104, 0], sizes = [8, 512], strides = [1, 1]} : vector<128x512xf32> to vector<8x512xf32>
    %389 = vector.broadcast %2 : vector<1x512xf32> to vector<8x512xf32>
    %390 = arith.addf %388, %389 : vector<8x512xf32>
    %391 = arith.truncf %381 : vector<8x128xf32> to vector<8x128xbf16>
    %cst_64 = arith.constant dense<0.000000e+00> : vector<8x512xf32>
    %392 = tpu.matmul %391, %1, %cst_64 {dimension_numbers = #tpu.dot_dimension_numbers<[1], [0], [0], [1], [0, 0, 1, 1], [], []>} : vector<8x128xbf16>, vector<128x512xbf16>, vector<8x512xf32> -> vector<8x512xf32>
    %393 = arith.addf %390, %392 : vector<8x512xf32>
    %394 = vector.extract_strided_slice %387 {offsets = [0, 0], sizes = [8, 128], strides = [1, 1]} : vector<8x512xf32> to vector<8x128xf32>
    %395 = arith.negf %394 : vector<8x128xf32>
    %396 = math.exp %395 : vector<8x128xf32>
    %cst_65 = arith.constant 1.000000e+00 : f32
    %397 = vector.broadcast %cst_65 : f32 to vector<8x128xf32>
    %398 = arith.addf %397, %396 : vector<8x128xf32>
    %399 = arith.divf %397, %398 : vector<8x128xf32>
    %400 = vector.extract_strided_slice %387 {offsets = [0, 128], sizes = [8, 128], strides = [1, 1]} : vector<8x512xf32> to vector<8x128xf32>
    %401 = arith.negf %400 : vector<8x128xf32>
    %402 = math.exp %401 : vector<8x128xf32>
    %cst_66 = arith.constant 1.000000e+00 : f32
    %403 = vector.broadcast %cst_66 : f32 to vector<8x128xf32>
    %404 = arith.addf %403, %402 : vector<8x128xf32>
    %405 = arith.divf %403, %404 : vector<8x128xf32>
    %406 = vector.extract_strided_slice %387 {offsets = [0, 256], sizes = [8, 128], strides = [1, 1]} : vector<8x512xf32> to vector<8x128xf32>
    %407 = math.tanh %406 : vector<8x128xf32>
    %408 = vector.extract_strided_slice %387 {offsets = [0, 384], sizes = [8, 128], strides = [1, 1]} : vector<8x512xf32> to vector<8x128xf32>
    %409 = arith.negf %408 : vector<8x128xf32>
    %410 = math.exp %409 : vector<8x128xf32>
    %cst_67 = arith.constant 1.000000e+00 : f32
    %411 = vector.broadcast %cst_67 : f32 to vector<8x128xf32>
    %412 = arith.addf %411, %410 : vector<8x128xf32>
    %413 = arith.divf %411, %412 : vector<8x128xf32>
    %414 = arith.mulf %405, %354 : vector<8x128xf32>
    %415 = arith.mulf %399, %407 : vector<8x128xf32>
    %416 = arith.addf %414, %415 : vector<8x128xf32>
    %417 = math.tanh %416 : vector<8x128xf32>
    %418 = arith.mulf %413, %417 : vector<8x128xf32>
    %419 = vector.extract_strided_slice %393 {offsets = [0, 0], sizes = [8, 128], strides = [1, 1]} : vector<8x512xf32> to vector<8x128xf32>
    %420 = arith.negf %419 : vector<8x128xf32>
    %421 = math.exp %420 : vector<8x128xf32>
    %cst_68 = arith.constant 1.000000e+00 : f32
    %422 = vector.broadcast %cst_68 : f32 to vector<8x128xf32>
    %423 = arith.addf %422, %421 : vector<8x128xf32>
    %424 = arith.divf %422, %423 : vector<8x128xf32>
    %425 = vector.extract_strided_slice %393 {offsets = [0, 128], sizes = [8, 128], strides = [1, 1]} : vector<8x512xf32> to vector<8x128xf32>
    %426 = arith.negf %425 : vector<8x128xf32>
    %427 = math.exp %426 : vector<8x128xf32>
    %cst_69 = arith.constant 1.000000e+00 : f32
    %428 = vector.broadcast %cst_69 : f32 to vector<8x128xf32>
    %429 = arith.addf %428, %427 : vector<8x128xf32>
    %430 = arith.divf %428, %429 : vector<8x128xf32>
    %431 = vector.extract_strided_slice %393 {offsets = [0, 256], sizes = [8, 128], strides = [1, 1]} : vector<8x512xf32> to vector<8x128xf32>
    %432 = math.tanh %431 : vector<8x128xf32>
    %433 = vector.extract_strided_slice %393 {offsets = [0, 384], sizes = [8, 128], strides = [1, 1]} : vector<8x512xf32> to vector<8x128xf32>
    %434 = arith.negf %433 : vector<8x128xf32>
    %435 = math.exp %434 : vector<8x128xf32>
    %cst_70 = arith.constant 1.000000e+00 : f32
    %436 = vector.broadcast %cst_70 : f32 to vector<8x128xf32>
    %437 = arith.addf %436, %435 : vector<8x128xf32>
    %438 = arith.divf %436, %437 : vector<8x128xf32>
    %439 = arith.mulf %430, %379 : vector<8x128xf32>
    %440 = arith.mulf %424, %432 : vector<8x128xf32>
    %441 = arith.addf %439, %440 : vector<8x128xf32>
    %442 = math.tanh %441 : vector<8x128xf32>
    %443 = arith.mulf %438, %442 : vector<8x128xf32>
    %444 = vector.extract_strided_slice %5 {offsets = [112, 0], sizes = [8, 512], strides = [1, 1]} : vector<128x512xf32> to vector<8x512xf32>
    %445 = vector.broadcast %2 : vector<1x512xf32> to vector<8x512xf32>
    %446 = arith.addf %444, %445 : vector<8x512xf32>
    %447 = arith.truncf %418 : vector<8x128xf32> to vector<8x128xbf16>
    %cst_71 = arith.constant dense<0.000000e+00> : vector<8x512xf32>
    %448 = tpu.matmul %447, %1, %cst_71 {dimension_numbers = #tpu.dot_dimension_numbers<[1], [0], [0], [1], [0, 0, 1, 1], [], []>} : vector<8x128xbf16>, vector<128x512xbf16>, vector<8x512xf32> -> vector<8x512xf32>
    %449 = arith.addf %446, %448 : vector<8x512xf32>
    %450 = vector.extract_strided_slice %5 {offsets = [120, 0], sizes = [8, 512], strides = [1, 1]} : vector<128x512xf32> to vector<8x512xf32>
    %451 = vector.broadcast %2 : vector<1x512xf32> to vector<8x512xf32>
    %452 = arith.addf %450, %451 : vector<8x512xf32>
    %453 = arith.truncf %443 : vector<8x128xf32> to vector<8x128xbf16>
    %cst_72 = arith.constant dense<0.000000e+00> : vector<8x512xf32>
    %454 = tpu.matmul %453, %1, %cst_72 {dimension_numbers = #tpu.dot_dimension_numbers<[1], [0], [0], [1], [0, 0, 1, 1], [], []>} : vector<8x128xbf16>, vector<128x512xbf16>, vector<8x512xf32> -> vector<8x512xf32>
    %455 = arith.addf %452, %454 : vector<8x512xf32>
    %456 = vector.extract_strided_slice %449 {offsets = [0, 0], sizes = [8, 128], strides = [1, 1]} : vector<8x512xf32> to vector<8x128xf32>
    %457 = arith.negf %456 : vector<8x128xf32>
    %458 = math.exp %457 : vector<8x128xf32>
    %cst_73 = arith.constant 1.000000e+00 : f32
    %459 = vector.broadcast %cst_73 : f32 to vector<8x128xf32>
    %460 = arith.addf %459, %458 : vector<8x128xf32>
    %461 = arith.divf %459, %460 : vector<8x128xf32>
    %462 = vector.extract_strided_slice %449 {offsets = [0, 128], sizes = [8, 128], strides = [1, 1]} : vector<8x512xf32> to vector<8x128xf32>
    %463 = arith.negf %462 : vector<8x128xf32>
    %464 = math.exp %463 : vector<8x128xf32>
    %cst_74 = arith.constant 1.000000e+00 : f32
    %465 = vector.broadcast %cst_74 : f32 to vector<8x128xf32>
    %466 = arith.addf %465, %464 : vector<8x128xf32>
    %467 = arith.divf %465, %466 : vector<8x128xf32>
    %468 = vector.extract_strided_slice %449 {offsets = [0, 256], sizes = [8, 128], strides = [1, 1]} : vector<8x512xf32> to vector<8x128xf32>
    %469 = math.tanh %468 : vector<8x128xf32>
    %470 = vector.extract_strided_slice %449 {offsets = [0, 384], sizes = [8, 128], strides = [1, 1]} : vector<8x512xf32> to vector<8x128xf32>
    %471 = arith.negf %470 : vector<8x128xf32>
    %472 = math.exp %471 : vector<8x128xf32>
    %cst_75 = arith.constant 1.000000e+00 : f32
    %473 = vector.broadcast %cst_75 : f32 to vector<8x128xf32>
    %474 = arith.addf %473, %472 : vector<8x128xf32>
    %475 = arith.divf %473, %474 : vector<8x128xf32>
    %476 = arith.mulf %467, %416 : vector<8x128xf32>
    %477 = arith.mulf %461, %469 : vector<8x128xf32>
    %478 = arith.addf %476, %477 : vector<8x128xf32>
    %479 = math.tanh %478 : vector<8x128xf32>
    %480 = arith.mulf %475, %479 : vector<8x128xf32>
    %481 = vector.extract_strided_slice %455 {offsets = [0, 0], sizes = [8, 128], strides = [1, 1]} : vector<8x512xf32> to vector<8x128xf32>
    %482 = arith.negf %481 : vector<8x128xf32>
    %483 = math.exp %482 : vector<8x128xf32>
    %cst_76 = arith.constant 1.000000e+00 : f32
    %484 = vector.broadcast %cst_76 : f32 to vector<8x128xf32>
    %485 = arith.addf %484, %483 : vector<8x128xf32>
    %486 = arith.divf %484, %485 : vector<8x128xf32>
    %487 = vector.extract_strided_slice %455 {offsets = [0, 128], sizes = [8, 128], strides = [1, 1]} : vector<8x512xf32> to vector<8x128xf32>
    %488 = arith.negf %487 : vector<8x128xf32>
    %489 = math.exp %488 : vector<8x128xf32>
    %cst_77 = arith.constant 1.000000e+00 : f32
    %490 = vector.broadcast %cst_77 : f32 to vector<8x128xf32>
    %491 = arith.addf %490, %489 : vector<8x128xf32>
    %492 = arith.divf %490, %491 : vector<8x128xf32>
    %493 = vector.extract_strided_slice %455 {offsets = [0, 256], sizes = [8, 128], strides = [1, 1]} : vector<8x512xf32> to vector<8x128xf32>
    %494 = math.tanh %493 : vector<8x128xf32>
    %495 = vector.extract_strided_slice %455 {offsets = [0, 384], sizes = [8, 128], strides = [1, 1]} : vector<8x512xf32> to vector<8x128xf32>
    %496 = arith.negf %495 : vector<8x128xf32>
    %497 = math.exp %496 : vector<8x128xf32>
    %cst_78 = arith.constant 1.000000e+00 : f32
    %498 = vector.broadcast %cst_78 : f32 to vector<8x128xf32>
    %499 = arith.addf %498, %497 : vector<8x128xf32>
    %500 = arith.divf %498, %499 : vector<8x128xf32>
    %501 = arith.mulf %492, %441 : vector<8x128xf32>
    %502 = arith.mulf %486, %494 : vector<8x128xf32>
    %503 = arith.addf %501, %502 : vector<8x128xf32>
    %504 = math.tanh %503 : vector<8x128xf32>
    %505 = arith.mulf %500, %504 : vector<8x128xf32>
    %c0_79 = arith.constant 0 : index
    %c0_80 = arith.constant 0 : index
    %506 = vector.load %arg7[%c0_79, %c0_80] : memref<128x128xbf16, #tpu.memory_space<vmem>>, vector<128x128xbf16>
    %c0_81 = arith.constant 0 : index
    %c0_82 = arith.constant 0 : index
    %507 = vector.load %arg8[%c0_81, %c0_82] : memref<1x128xf32, #tpu.memory_space<vmem>>, vector<1x128xf32>
    %508 = arith.truncf %480 : vector<8x128xf32> to vector<8x128xbf16>
    %cst_83 = arith.constant dense<0.000000e+00> : vector<8x128xf32>
    %509 = tpu.matmul %508, %506, %cst_83 {dimension_numbers = #tpu.dot_dimension_numbers<[1], [0], [0], [1], [0, 0, 1, 1], [], []>} : vector<8x128xbf16>, vector<128x128xbf16>, vector<8x128xf32> -> vector<8x128xf32>
    %510 = vector.broadcast %507 : vector<1x128xf32> to vector<8x128xf32>
    %511 = arith.addf %509, %510 : vector<8x128xf32>
    %c0_84 = arith.constant 0 : index
    %c0_85 = arith.constant 0 : index
    %512 = vector.load %arg9[%c0_84, %c0_85] : memref<16x128xf32, #tpu.memory_space<vmem>>, vector<8x128xf32>
    tpu.vector_store %arg9[%c0_84, %c0_85], %511 {strides = array<i32>} : memref<16x128xf32, #tpu.memory_space<vmem>>, vector<8x128xf32>,
    %513 = arith.truncf %505 : vector<8x128xf32> to vector<8x128xbf16>
    %cst_86 = arith.constant dense<0.000000e+00> : vector<8x128xf32>
    %514 = tpu.matmul %513, %506, %cst_86 {dimension_numbers = #tpu.dot_dimension_numbers<[1], [0], [0], [1], [0, 0, 1, 1], [], []>} : vector<8x128xbf16>, vector<128x128xbf16>, vector<8x128xf32> -> vector<8x128xf32>
    %515 = vector.broadcast %507 : vector<1x128xf32> to vector<8x128xf32>
    %516 = arith.addf %514, %515 : vector<8x128xf32>
    %c8_87 = arith.constant 8 : index
    %c0_88 = arith.constant 0 : index
    %517 = vector.load %arg9[%c8_87, %c0_88] : memref<16x128xf32, #tpu.memory_space<vmem>>, vector<8x128xf32>
    tpu.vector_store %arg9[%c8_87, %c0_88], %516 {strides = array<i32>} : memref<16x128xf32, #tpu.memory_space<vmem>>, vector<8x128xf32>,
    %c0_89 = arith.constant 0 : index
    %c0_90 = arith.constant 0 : index
    %518 = vector.load %arg10[%c0_89, %c0_90] : memref<16x128xf32, #tpu.memory_space<vmem>>, vector<8x128xf32>
    tpu.vector_store %arg10[%c0_89, %c0_90], %480 {strides = array<i32>} : memref<16x128xf32, #tpu.memory_space<vmem>>, vector<8x128xf32>,
    %c8_91 = arith.constant 8 : index
    %c0_92 = arith.constant 0 : index
    %519 = vector.load %arg10[%c8_91, %c0_92] : memref<16x128xf32, #tpu.memory_space<vmem>>, vector<8x128xf32>
    tpu.vector_store %arg10[%c8_91, %c0_92], %505 {strides = array<i32>} : memref<16x128xf32, #tpu.memory_space<vmem>>, vector<8x128xf32>,
    %c0_93 = arith.constant 0 : index
    %c0_94 = arith.constant 0 : index
    %520 = vector.load %arg11[%c0_93, %c0_94] : memref<16x128xf32, #tpu.memory_space<vmem>>, vector<8x128xf32>
    tpu.vector_store %arg11[%c0_93, %c0_94], %478 {strides = array<i32>} : memref<16x128xf32, #tpu.memory_space<vmem>>, vector<8x128xf32>,
    %c8_95 = arith.constant 8 : index
    %c0_96 = arith.constant 0 : index
    %521 = vector.load %arg11[%c8_95, %c0_96] : memref<16x128xf32, #tpu.memory_space<vmem>>, vector<8x128xf32>
    tpu.vector_store %arg11[%c8_95, %c0_96], %503 {strides = array<i32>} : memref<16x128xf32, #tpu.memory_space<vmem>>, vector<8x128xf32>,
    return
  }
  func.func @transform_0(%arg0: i32) -> (i32, i32, i32) {
    %c0_i32 = arith.constant 0 : i32
    %c0_i32_0 = arith.constant 0 : i32
    %c0_i32_1 = arith.constant 0 : i32
    return %c0_i32, %arg0, %c0_i32_0 : i32, i32, i32
  }
  func.func @transform_1(%arg0: i32) -> (i32, i32) {
    %c0_i32 = arith.constant 0 : i32
    %c0_i32_0 = arith.constant 0 : i32
    return %arg0, %c0_i32 : i32, i32
  }
  func.func @transform_2(%arg0: i32) -> (i32, i32) {
    %c0_i32 = arith.constant 0 : i32
    %c0_i32_0 = arith.constant 0 : i32
    return %arg0, %c0_i32 : i32, i32
  }
  func.func @transform_3(%arg0: i32) -> (i32, i32) {
    %c0_i32 = arith.constant 0 : i32
    %c0_i32_0 = arith.constant 0 : i32
    %c0_i32_1 = arith.constant 0 : i32
    return %c0_i32, %c0_i32_0 : i32, i32
  }
  func.func @transform_4(%arg0: i32) -> (i32, i32) {
    %c0_i32 = arith.constant 0 : i32
    %c0_i32_0 = arith.constant 0 : i32
    %c0_i32_1 = arith.constant 0 : i32
    return %c0_i32, %c0_i32_0 : i32, i32
  }
  func.func @transform_5(%arg0: i32) -> (i32, i32) {
    %c0_i32 = arith.constant 0 : i32
    %c0_i32_0 = arith.constant 0 : i32
    %c0_i32_1 = arith.constant 0 : i32
    return %c0_i32, %c0_i32_0 : i32, i32
  }
  func.func @transform_6(%arg0: i32) -> (i32, i32) {
    %c0_i32 = arith.constant 0 : i32
    %c0_i32_0 = arith.constant 0 : i32
    %c0_i32_1 = arith.constant 0 : i32
    return %c0_i32, %c0_i32_0 : i32, i32
  }
  func.func @transform_7(%arg0: i32) -> (i32, i32) {
    %c0_i32 = arith.constant 0 : i32
    %c0_i32_0 = arith.constant 0 : i32
    %c0_i32_1 = arith.constant 0 : i32
    return %c0_i32, %c0_i32_0 : i32, i32
  }
  func.func @transform_8(%arg0: i32) -> (i32, i32) {
    %c0_i32 = arith.constant 0 : i32
    %c0_i32_0 = arith.constant 0 : i32
    return %arg0, %c0_i32 : i32, i32
  }
  func.func @transform_9(%arg0: i32) -> (i32, i32) {
    %c0_i32 = arith.constant 0 : i32
    %c0_i32_0 = arith.constant 0 : i32
    return %arg0, %c0_i32 : i32, i32
  }
  func.func @transform_10(%arg0: i32) -> (i32, i32) {
    %c0_i32 = arith.constant 0 : i32
    %c0_i32_0 = arith.constant 0 : i32
    return %arg0, %c0_i32 : i32, i32
  }
}

</mosaic_0001>

<llo_original>
// kernel: tpu_custom_call.1
$region0: #{tpu_custom_call.1}
  #allocation0 [shape = 'u32[]', space=smem, size = 0x4, offset = 0x4, fixed_abs, tag = 'smem constant byte address 0x4 - core index']
  #allocation1 [shape = 'u32[72,128]{1,0:T(1,128)}', space=vmem, size = 0x9000, scoped, tag = 'internal scratch']
  %s0 = inlined_call_operand.hbm [shape: bf16[8,16,16], index: 0, kind: input, shape index: {}]
  %s1 = inlined_call_operand.hbm [shape: f32[16,128], index: 1, kind: input, shape index: {}]
  %s2 = inlined_call_operand.hbm [shape: f32[16,128], index: 2, kind: input, shape index: {}]
  %s3 = inlined_call_operand.hbm [shape: bf16[16,512], index: 3, kind: input, shape index: {}]
  %s4 = inlined_call_operand.hbm [shape: bf16[128,512], index: 4, kind: input, shape index: {}]
  %s5 = inlined_call_operand.vmem [shape: f32[1,512], index: 5, kind: input, shape index: {}]
  %s6 = inlined_call_operand.hbm [shape: bf16[128,128], index: 6, kind: input, shape index: {}]
  %s7 = inlined_call_operand.vmem [shape: f32[1,128], index: 7, kind: input, shape index: {}]
  %s8 = inlined_call_operand.hbm [shape: f32[16,128], index: 8, kind: output, shape index: {0}]
  %s9 = inlined_call_operand.hbm [shape: f32[16,128], index: 9, kind: output, shape index: {1}]
  %s10 = inlined_call_operand.hbm [shape: f32[16,128], index: 10, kind: output, shape index: {2}]
  %11 = xla_tuple %s8, %s9, %s10
  %s12 = sld [smem:[#allocation0]]
  $region82: #{tpu_custom_call.1} parent=0
    _
  %s14 = ssub.s32 1, %s12
  %s15 = scalar_select 0, %s14, %s12
  $region1: #{tpu_custom_call.1} parent=0
    #allocation2 [shape = 'u8[32768]{0}', space=vmem, size = 0x8000, scoped, tag = 'input window, operand 0, single buffered']
    #allocation3 [shape = 's32[1]{0}', space=sflag, size = 0x4, scoped, tag = 'scoped memory for tpu_custom_call.1']
    #allocation4 [shape = 's32[1]{0}', space=sflag, size = 0x4, scoped, tag = 'scoped memory for tpu_custom_call.1']
    #allocation5 [shape = 'u8[8192]{0}', space=vmem, size = 0x2000, scoped, tag = 'input window, operand 1, single buffered']
    #allocation6 [shape = 's32[1]{0}', space=sflag, size = 0x4, scoped, tag = 'scoped memory for tpu_custom_call.1']
    #allocation7 [shape = 'u8[8192]{0}', space=vmem, size = 0x2000, scoped, tag = 'input window, operand 2, single buffered']
    #allocation8 [shape = 'u8[16384]{0}', space=vmem, size = 0x4000, scoped, tag = 'input window, operand 3, single buffered']
    #allocation9 [shape = 's32[1]{0}', space=sflag, size = 0x4, scoped, tag = 'scoped memory for tpu_custom_call.1']
    #allocation10 [shape = 'u8[131072]{0}', space=vmem, size = 0x20000, scoped, tag = 'input window, operand 4, single buffered']
    #allocation11 [shape = 'u8[32768]{0}', space=vmem, size = 0x8000, scoped, tag = 'input window, operand 6, single buffered']
    #allocation12 [shape = 's32[1]{0}', space=sflag, size = 0x4, scoped, tag = 'scoped memory for tpu_custom_call.1']
    #allocation13 [shape = 'u8[8192]{0}', space=vmem, size = 0x2000, scoped, tag = 'output window, operand 0, single buffered']
    #allocation14 [shape = 'u8[8192]{0}', space=vmem, size = 0x2000, scoped, tag = 'output window, operand 1, single buffered']
    #allocation15 [shape = 's32[1]{0}', space=sflag, size = 0x4, scoped, tag = 'scoped memory for tpu_custom_call.1']
    #allocation16 [shape = 'u8[8192]{0}', space=vmem, size = 0x2000, scoped, tag = 'output window, operand 2, single buffered']
    %16 = vsyncpa [#allocation3], 0
    %17 = vsyncpa [#allocation6], 0
    %18 = vsyncpa [#allocation9], 0
    %19 = vsyncpa [#allocation12], 0
    %20 = vsyncpa [#allocation4], 0
    %21 = vsyncpa [#allocation15], 0
    // Predicated region
    $region2: #{tpu_custom_call.1} parent=1 // pred_check
      _
    $region3: #{tpu_custom_call.1} parent=1 // pred_check_branch
      %23 = sbr.rel (0) target = $region5
    $region4: #{tpu_custom_call.1} parent=1 // pred_region
      %25 = vsyncadd [#allocation3], 0
      %s26 = sshll.u32 %s0, 4
      %s27 = int_to_ptr.hbm [resolvable:$true] %s26
      %s28 = sshll.u32 [#allocation2], 4
      %s29 = int_to_ptr.vmem [resolvable:$true] %s28
      %34 = dma.hbm_to_vmem [thread:$0]  %s27, 1024, %s29, [#allocation3], 64, 64, 4
    $region5: #{tpu_custom_call.1} parent=1 // pred_fallthru
      _
    // Predicated region
    $region6: #{tpu_custom_call.1} parent=1 // pred_check
      _
    $region7: #{tpu_custom_call.1} parent=1 // pred_check_branch
      %36 = sbr.rel (0) target = $region9
    $region8: #{tpu_custom_call.1} parent=1 // pred_region
      %38 = vsyncadd [#allocation6], 0
      %s39 = sshll.u32 %s1, 4
      %s40 = int_to_ptr.hbm [resolvable:$true] %s39
      %s41 = sshll.u32 [#allocation5], 4
      %s42 = int_to_ptr.vmem [resolvable:$true] %s41
      %47 = dma.hbm_to_vmem [thread:$0]  %s40, 256, %s42, [#allocation6], 128, 128, 8
    $region9: #{tpu_custom_call.1} parent=1 // pred_fallthru
      _
    // Predicated region
    $region10: #{tpu_custom_call.1} parent=1 // pred_check
      _
    $region11: #{tpu_custom_call.1} parent=1 // pred_check_branch
      %49 = sbr.rel (0) target = $region13
    $region12: #{tpu_custom_call.1} parent=1 // pred_region
      %51 = vsyncadd [#allocation6], 0
      %s52 = sshll.u32 %s2, 4
      %s53 = int_to_ptr.hbm [resolvable:$true] %s52
      %s54 = sshll.u32 [#allocation7], 4
      %s55 = int_to_ptr.vmem [resolvable:$true] %s54
      %60 = dma.hbm_to_vmem [thread:$0]  %s53, 256, %s55, [#allocation6], 128, 128, 8
    $region13: #{tpu_custom_call.1} parent=1 // pred_fallthru
      _
    // Predicated region
    $region14: #{tpu_custom_call.1} parent=1 // pred_check
      _
    $region15: #{tpu_custom_call.1} parent=1 // pred_check_branch
      %62 = sbr.rel (0) target = $region17
    $region16: #{tpu_custom_call.1} parent=1 // pred_region
      %64 = vsyncadd [#allocation9], 0
      %s65 = sshll.u32 %s3, 4
      %s66 = int_to_ptr.hbm [resolvable:$true] %s65
      %s67 = sshll.u32 [#allocation8], 4
      %s68 = int_to_ptr.vmem [resolvable:$true] %s67
      %73 = dma.hbm_to_vmem [thread:$0]  %s66, 512, %s68, [#allocation9], 256, 256, 16
    $region17: #{tpu_custom_call.1} parent=1 // pred_fallthru
      _
    // Predicated region
    $region18: #{tpu_custom_call.1} parent=1 // pred_check
      _
    $region19: #{tpu_custom_call.1} parent=1 // pred_check_branch
      %75 = sbr.rel (0) target = $region21
    $region20: #{tpu_custom_call.1} parent=1 // pred_region
      %77 = vsyncadd [#allocation9], 0
      %s78 = sshll.u32 %s4, 4
      %s79 = int_to_ptr.hbm [resolvable:$true] %s78
      %s80 = sshll.u32 [#allocation10], 4
      %s81 = int_to_ptr.vmem [resolvable:$true] %s80
      %86 = dma.hbm_to_vmem [thread:$0]  %s79, 4096, %s81, [#allocation9], 256, 256, 16
    $region21: #{tpu_custom_call.1} parent=1 // pred_fallthru
      _
    // Predicated region
    $region22: #{tpu_custom_call.1} parent=1 // pred_check
      _
    $region23: #{tpu_custom_call.1} parent=1 // pred_check_branch
      %88 = sbr.rel (0) target = $region25
    $region24: #{tpu_custom_call.1} parent=1 // pred_region
      _
    $region25: #{tpu_custom_call.1} parent=1 // pred_fallthru
      _
    // Predicated region
    $region26: #{tpu_custom_call.1} parent=1 // pred_check
      _
    $region27: #{tpu_custom_call.1} parent=1 // pred_check_branch
      %90 = sbr.rel (0) target = $region29
    $region28: #{tpu_custom_call.1} parent=1 // pred_region
      %92 = vsyncadd [#allocation12], 0
      %s93 = sshll.u32 %s6, 4
      %s94 = int_to_ptr.hbm [resolvable:$true] %s93
      %s95 = sshll.u32 [#allocation11], 4
      %s96 = int_to_ptr.vmem [resolvable:$true] %s95
      %101 = dma.hbm_to_vmem [thread:$0]  %s94, 1024, %s96, [#allocation12], 64, 64, 4
    $region29: #{tpu_custom_call.1} parent=1 // pred_fallthru
      _
    // Predicated region
    $region30: #{tpu_custom_call.1} parent=1 // pred_check
      _
    $region31: #{tpu_custom_call.1} parent=1 // pred_check_branch
      %103 = sbr.rel (0) target = $region33
    $region32: #{tpu_custom_call.1} parent=1 // pred_region
      _
    $region33: #{tpu_custom_call.1} parent=1 // pred_fallthru
      _
    // Predicated region
    $region34: #{tpu_custom_call.1} parent=1 // pred_check
      _
    $region35: #{tpu_custom_call.1} parent=1 // pred_check_branch
      %105 = sbr.rel (0) target = $region37
    $region36: #{tpu_custom_call.1} parent=1 // pred_region
      %107 = dma.done [#allocation3], 1024
    $region37: #{tpu_custom_call.1} parent=1 // pred_fallthru
      _
    // Predicated region
    $region38: #{tpu_custom_call.1} parent=1 // pred_check
      _
    $region39: #{tpu_custom_call.1} parent=1 // pred_check_branch
      %109 = sbr.rel (0) target = $region41
    $region40: #{tpu_custom_call.1} parent=1 // pred_region
      %111 = dma.done [#allocation6], 256
    $region41: #{tpu_custom_call.1} parent=1 // pred_fallthru
      _
    // Predicated region
    $region42: #{tpu_custom_call.1} parent=1 // pred_check
      _
    $region43: #{tpu_custom_call.1} parent=1 // pred_check_branch
      %113 = sbr.rel (0) target = $region45
    $region44: #{tpu_custom_call.1} parent=1 // pred_region
      %115 = dma.done [#allocation6], 256
    $region45: #{tpu_custom_call.1} parent=1 // pred_fallthru
      _
    // Predicated region
    $region46: #{tpu_custom_call.1} parent=1 // pred_check
      _
    $region47: #{tpu_custom_call.1} parent=1 // pred_check_branch
      %117 = sbr.rel (0) target = $region49
    $region48: #{tpu_custom_call.1} parent=1 // pred_region
      %119 = dma.done [#allocation9], 512
    $region49: #{tpu_custom_call.1} parent=1 // pred_fallthru
      _
    // Predicated region
    $region50: #{tpu_custom_call.1} parent=1 // pred_check
      _
    $region51: #{tpu_custom_call.1} parent=1 // pred_check_branch
      %121 = sbr.rel (0) target = $region53
    $region52: #{tpu_custom_call.1} parent=1 // pred_region
      %123 = dma.done [#allocation9], 4096
    $region53: #{tpu_custom_call.1} parent=1 // pred_fallthru
      _
    // Predicated region
    $region54: #{tpu_custom_call.1} parent=1 // pred_check
      _
    $region55: #{tpu_custom_call.1} parent=1 // pred_check_branch
      %125 = sbr.rel (0) target = $region57
    $region56: #{tpu_custom_call.1} parent=1 // pred_region
      %127 = dma.done [#allocation12], 1024
    $region57: #{tpu_custom_call.1} parent=1 // pred_fallthru
      _
    %v129 = vld [vmem:[#allocation8] sm:$0xff]
    %v130 = vld [vmem:[#allocation8 + $0x8] sm:$0xff]
    %v131 = vld [vmem:[#allocation8 + $0x10] sm:$0xff]
    %v132 = vld [vmem:[#allocation8 + $0x18] sm:$0xff]
    %v133 = vld [vmem:[#allocation10] sm:$0xff]
    %v134 = vld [vmem:[#allocation10 + $0x8] sm:$0xff]
    %v135 = vld [vmem:[#allocation10 + $0x10] sm:$0xff]
    %v136 = vld [vmem:[#allocation10 + $0x18] sm:$0xff]
    %v137 = vld [vmem:[#allocation10 + $0x20] sm:$0xff]
    %v138 = vld [vmem:[#allocation10 + $0x28] sm:$0xff]
    %v139 = vld [vmem:[#allocation10 + $0x30] sm:$0xff]
    %v140 = vld [vmem:[#allocation10 + $0x38] sm:$0xff]
    %v141 = vld [vmem:[#allocation10 + $0x40] sm:$0xff]
    %v142 = vld [vmem:[#allocation10 + $0x48] sm:$0xff]
    %v143 = vld [vmem:[#allocation10 + $0x50] sm:$0xff]
    %v144 = vld [vmem:[#allocation10 + $0x58] sm:$0xff]
    %v145 = vld [vmem:[#allocation10 + $0x60] sm:$0xff]
    %v146 = vld [vmem:[#allocation10 + $0x68] sm:$0xff]
    %v147 = vld [vmem:[#allocation10 + $0x70] sm:$0xff]
    %v148 = vld [vmem:[#allocation10 + $0x78] sm:$0xff]
    %v149 = vld [vmem:[#allocation10 + $0x80] sm:$0xff]
    %v150 = vld [vmem:[#allocation10 + $0x88] sm:$0xff]
    %v151 = vld [vmem:[#allocation10 + $0x90] sm:$0xff]
    %v152 = vld [vmem:[#allocation10 + $0x98] sm:$0xff]
    %v153 = vld [vmem:[#allocation10 + $0xa0] sm:$0xff]
    %v154 = vld [vmem:[#allocation10 + $0xa8] sm:$0xff]
    %v155 = vld [vmem:[#allocation10 + $0xb0] sm:$0xff]
    %v156 = vld [vmem:[#allocation10 + $0xb8] sm:$0xff]
    %v157 = vld [vmem:[#allocation10 + $0xc0] sm:$0xff]
    %v158 = vld [vmem:[#allocation10 + $0xc8] sm:$0xff]
    %v159 = vld [vmem:[#allocation10 + $0xd0] sm:$0xff]
    %v160 = vld [vmem:[#allocation10 + $0xd8] sm:$0xff]
    %v161 = vld [vmem:[#allocation10 + $0xe0] sm:$0xff]
    %v162 = vld [vmem:[#allocation10 + $0xe8] sm:$0xff]
    %v163 = vld [vmem:[#allocation10 + $0xf0] sm:$0xff]
    %v164 = vld [vmem:[#allocation10 + $0xf8] sm:$0xff]
    %v165 = vld [vmem:[%s5] sm:$0xf]
    %v166 = vld [vmem:[#allocation2] sm:$0xf]
    %v167 = vld [vmem:[#allocation2 + $0x4] sm:$0xf]
    %v168 = vld [vmem:[#allocation2 + $0x8] sm:$0xf]
    %v169 = vld [vmem:[#allocation2 + $0xc] sm:$0xf]
    %v170 = vld [vmem:[#allocation2 + $0x10] sm:$0xf]
    %v171 = vld [vmem:[#allocation2 + $0x14] sm:$0xf]
    %v172 = vld [vmem:[#allocation2 + $0x18] sm:$0xf]
    %v173 = vld [vmem:[#allocation2 + $0x1c] sm:$0xf]
    %v174 = vld [vmem:[#allocation2 + $0x20] sm:$0xf]
    %v175 = vld [vmem:[#allocation2 + $0x24] sm:$0xf]
    %v176 = vld [vmem:[#allocation2 + $0x28] sm:$0xf]
    %v177 = vld [vmem:[#allocation2 + $0x2c] sm:$0xf]
    %v178 = vld [vmem:[#allocation2 + $0x30] sm:$0xf]
    %v179 = vld [vmem:[#allocation2 + $0x34] sm:$0xf]
    %v180 = vld [vmem:[#allocation2 + $0x38] sm:$0xf]
    %v181 = vld [vmem:[#allocation2 + $0x3c] sm:$0xf]
    %v198 = vunpack.c.l.b16 %v166
    %v199 = vunpack.c.l.b16 %v167
    %v200 = vunpack.c.l.b16 %v168
    %v201 = vunpack.c.l.b16 %v169
    %v202 = vunpack.c.l.b16 %v170
    %v203 = vunpack.c.l.b16 %v171
    %v204 = vunpack.c.l.b16 %v172
    %v205 = vunpack.c.l.b16 %v173
    %v206 = vunpack.c.l.b16 %v174
    %v207 = vunpack.c.l.b16 %v175
    %v208 = vunpack.c.l.b16 %v176
    %v209 = vunpack.c.l.b16 %v177
    %v210 = vunpack.c.l.b16 %v178
    %v211 = vunpack.c.l.b16 %v179
    %v212 = vunpack.c.l.b16 %v180
    %v213 = vunpack.c.l.b16 %v181
    %v214 = vpack.c.b16 %v199, %v198
    %v215 = vpack.c.b16 %v201, %v200
    %v216 = vpack.c.b16 %v203, %v202
    %v217 = vpack.c.b16 %v205, %v204
    %v218 = vpack.c.b16 %v207, %v206
    %v219 = vpack.c.b16 %v209, %v208
    %v220 = vpack.c.b16 %v211, %v210
    %v221 = vpack.c.b16 %v213, %v212
    %v226 = vunpack.c.l.b16 %v129
    %v227 = vunpack.c.h.b16 %v129
    %v228 = vunpack.c.l.b16 %v130
    %v229 = vunpack.c.h.b16 %v130
    %v230 = vunpack.c.l.b16 %v131
    %v231 = vunpack.c.h.b16 %v131
    %v232 = vunpack.c.l.b16 %v132
    %v233 = vunpack.c.h.b16 %v132
    %v234 = vpack.c.b16 %v230, %v226
    %v235 = vpack.c.b16 %v231, %v227
    %v236 = vpack.c.b16 %v232, %v228
    %v237 = vpack.c.b16 %v233, %v229
    %vm242 = vcmask 130048
    %v244 = vsel %vm242, %v214, 0
    %v247 = vsel %vm242, %v215, 0
    %v250 = vsel %vm242, %v216, 0
    %v253 = vsel %vm242, %v217, 0
    %v256 = vsel %vm242, %v218, 0
    %v259 = vsel %vm242, %v219, 0
    %v262 = vsel %vm242, %v220, 0
    %v265 = vsel %vm242, %v221, 0
    %267 = vmatpush.bf16.msra.mxu0 0
    %268 = vmatpush.bf16.msra.mxu0 0
    %269 = vmatpush.bf16.msra.mxu0 0
    %270 = vmatpush.bf16.msra.mxu0 0
    %271 = vmatpush.bf16.msra.mxu0 0
    %272 = vmatpush.bf16.msra.mxu0 0
    %273 = vmatpush.bf16.msra.mxu0 0
    %274 = vmatpush.bf16.msra.mxu0 %v234
    %275 = vmatmul.bf16.gmra.mxu0 %v244
    %v276 = vpop.f32.mrf.mxu0
    %v277 = vadd.f32 0.0, %v276
    %v278 = vpop.f32.mrf.mxu0
    %v279 = vadd.f32 0.0, %v278
    %280 = vmatmul.bf16.gmra.mxu0 %v247
    %v281 = vpop.f32.mrf.mxu0
    %v282 = vadd.f32 0.0, %v281
    %v283 = vpop.f32.mrf.mxu0
    %v284 = vadd.f32 0.0, %v283
    %285 = vmatmul.bf16.gmra.mxu0 %v250
    %v286 = vpop.f32.mrf.mxu0
    %v287 = vadd.f32 0.0, %v286
    %v288 = vpop.f32.mrf.mxu0
    %v289 = vadd.f32 0.0, %v288
    %290 = vmatmul.bf16.gmra.mxu0 %v253
    %v291 = vpop.f32.mrf.mxu0
    %v292 = vadd.f32 0.0, %v291
    %v293 = vpop.f32.mrf.mxu0
    %v294 = vadd.f32 0.0, %v293
    %295 = vmatmul.bf16.gmra.mxu0 %v256
    %v296 = vpop.f32.mrf.mxu0
    %v297 = vadd.f32 0.0, %v296
    %v298 = vpop.f32.mrf.mxu0
    %v299 = vadd.f32 0.0, %v298
    %300 = vmatmul.bf16.gmra.mxu0 %v259
    %v301 = vpop.f32.mrf.mxu0
    %v302 = vadd.f32 0.0, %v301
    %v303 = vpop.f32.mrf.mxu0
    %v304 = vadd.f32 0.0, %v303
    %305 = vmatmul.bf16.gmra.mxu0 %v262
    %v306 = vpop.f32.mrf.mxu0
    %v307 = vadd.f32 0.0, %v306
    %v308 = vpop.f32.mrf.mxu0
    %v309 = vadd.f32 0.0, %v308
    %310 = vmatmul.bf16.gmra.mxu0 %v265
    %v311 = vpop.f32.mrf.mxu0
    %v312 = vadd.f32 0.0, %v311
    %v313 = vpop.f32.mrf.mxu0
    %v314 = vadd.f32 0.0, %v313
    %315 = vdwg.mxu0
    %316 = vmatpush.bf16.msra.mxu0 0
    %317 = vmatpush.bf16.msra.mxu0 0
    %318 = vmatpush.bf16.msra.mxu0 0
    %319 = vmatpush.bf16.msra.mxu0 0
    %320 = vmatpush.bf16.msra.mxu0 0
    %321 = vmatpush.bf16.msra.mxu0 0
    %322 = vmatpush.bf16.msra.mxu0 0
    %323 = vmatpush.bf16.msra.mxu0 %v235
    %324 = vmatmul.bf16.gmra.mxu0 %v244
    %v325 = vpop.f32.mrf.mxu0
    %v326 = vadd.f32 0.0, %v325
    %v327 = vpop.f32.mrf.mxu0
    %v328 = vadd.f32 0.0, %v327
    %329 = vmatmul.bf16.gmra.mxu0 %v247
    %v330 = vpop.f32.mrf.mxu0
    %v331 = vadd.f32 0.0, %v330
    %v332 = vpop.f32.mrf.mxu0
    %v333 = vadd.f32 0.0, %v332
    %334 = vmatmul.bf16.gmra.mxu0 %v250
    %v335 = vpop.f32.mrf.mxu0
    %v336 = vadd.f32 0.0, %v335
    %v337 = vpop.f32.mrf.mxu0
    %v338 = vadd.f32 0.0, %v337
    %339 = vmatmul.bf16.gmra.mxu0 %v253
    %v340 = vpop.f32.mrf.mxu0
    %v341 = vadd.f32 0.0, %v340
    %v342 = vpop.f32.mrf.mxu0
    %v343 = vadd.f32 0.0, %v342
    %344 = vmatmul.bf16.gmra.mxu0 %v256
    %v345 = vpop.f32.mrf.mxu0
    %v346 = vadd.f32 0.0, %v345
    %v347 = vpop.f32.mrf.mxu0
    %v348 = vadd.f32 0.0, %v347
    %349 = vmatmul.bf16.gmra.mxu0 %v259
    %v350 = vpop.f32.mrf.mxu0
    %v351 = vadd.f32 0.0, %v350
    %v352 = vpop.f32.mrf.mxu0
    %v353 = vadd.f32 0.0, %v352
    %354 = vmatmul.bf16.gmra.mxu0 %v262
    %v355 = vpop.f32.mrf.mxu0
    %v356 = vadd.f32 0.0, %v355
    %v357 = vpop.f32.mrf.mxu0
    %v358 = vadd.f32 0.0, %v357
    %359 = vmatmul.bf16.gmra.mxu0 %v265
    %v360 = vpop.f32.mrf.mxu0
    %v361 = vadd.f32 0.0, %v360
    %v362 = vpop.f32.mrf.mxu0
    %v363 = vadd.f32 0.0, %v362
    %364 = vdwg.mxu0
    %365 = vmatpush.bf16.msra.mxu0 0
    %366 = vmatpush.bf16.msra.mxu0 0
    %367 = vmatpush.bf16.msra.mxu0 0
    %368 = vmatpush.bf16.msra.mxu0 0
    %369 = vmatpush.bf16.msra.mxu0 0
    %370 = vmatpush.bf16.msra.mxu0 0
    %371 = vmatpush.bf16.msra.mxu0 0
    %372 = vmatpush.bf16.msra.mxu0 %v236
    %373 = vmatmul.bf16.gmra.mxu0 %v244
    %v374 = vpop.f32.mrf.mxu0
    %v375 = vadd.f32 0.0, %v374
    %v376 = vpop.f32.mrf.mxu0
    %v377 = vadd.f32 0.0, %v376
    %378 = vmatmul.bf16.gmra.mxu0 %v247
    %v379 = vpop.f32.mrf.mxu0
    %v380 = vadd.f32 0.0, %v379
    %v381 = vpop.f32.mrf.mxu0
    %v382 = vadd.f32 0.0, %v381
    %383 = vmatmul.bf16.gmra.mxu0 %v250
    %v384 = vpop.f32.mrf.mxu0
    %v385 = vadd.f32 0.0, %v384
    %v386 = vpop.f32.mrf.mxu0
    %v387 = vadd.f32 0.0, %v386
    %388 = vmatmul.bf16.gmra.mxu0 %v253
    %v389 = vpop.f32.mrf.mxu0
    %v390 = vadd.f32 0.0, %v389
    %v391 = vpop.f32.mrf.mxu0
    %v392 = vadd.f32 0.0, %v391
    %393 = vmatmul.bf16.gmra.mxu0 %v256
    %v394 = vpop.f32.mrf.mxu0
    %v395 = vadd.f32 0.0, %v394
    %v396 = vpop.f32.mrf.mxu0
    %v397 = vadd.f32 0.0, %v396
    %398 = vmatmul.bf16.gmra.mxu0 %v259
    %v399 = vpop.f32.mrf.mxu0
    %v400 = vadd.f32 0.0, %v399
    %v401 = vpop.f32.mrf.mxu0
    %v402 = vadd.f32 0.0, %v401
    %403 = vmatmul.bf16.gmra.mxu0 %v262
    %v404 = vpop.f32.mrf.mxu0
    %v405 = vadd.f32 0.0, %v404
    %v406 = vpop.f32.mrf.mxu0
    %v407 = vadd.f32 0.0, %v406
    %408 = vmatmul.bf16.gmra.mxu0 %v265
    %v409 = vpop.f32.mrf.mxu0
    %v410 = vadd.f32 0.0, %v409
    %v411 = vpop.f32.mrf.mxu0
    %v412 = vadd.f32 0.0, %v411
    %413 = vdwg.mxu0
    %414 = vmatpush.bf16.msra.mxu0 0
    %415 = vmatpush.bf16.msra.mxu0 0
    %416 = vmatpush.bf16.msra.mxu0 0
    %417 = vmatpush.bf16.msra.mxu0 0
    %418 = vmatpush.bf16.msra.mxu0 0
    %419 = vmatpush.bf16.msra.mxu0 0
    %420 = vmatpush.bf16.msra.mxu0 0
    %421 = vmatpush.bf16.msra.mxu0 %v237
    %422 = vmatmul.bf16.gmra.mxu0 %v244
    %v423 = vpop.f32.mrf.mxu0
    %v424 = vadd.f32 0.0, %v423
    %v425 = vpop.f32.mrf.mxu0
    %v426 = vadd.f32 0.0, %v425
    %427 = vmatmul.bf16.gmra.mxu0 %v247
    %v428 = vpop.f32.mrf.mxu0
    %v429 = vadd.f32 0.0, %v428
    %v430 = vpop.f32.mrf.mxu0
    %v431 = vadd.f32 0.0, %v430
    %432 = vmatmul.bf16.gmra.mxu0 %v250
    %v433 = vpop.f32.mrf.mxu0
    %v434 = vadd.f32 0.0, %v433
    %v435 = vpop.f32.mrf.mxu0
    %v436 = vadd.f32 0.0, %v435
    %437 = vmatmul.bf16.gmra.mxu0 %v253
    %v438 = vpop.f32.mrf.mxu0
    %v439 = vadd.f32 0.0, %v438
    %v440 = vpop.f32.mrf.mxu0
    %v441 = vadd.f32 0.0, %v440
    %442 = vmatmul.bf16.gmra.mxu0 %v256
    %v443 = vpop.f32.mrf.mxu0
    %v444 = vadd.f32 0.0, %v443
    %v445 = vpop.f32.mrf.mxu0
    %v446 = vadd.f32 0.0, %v445
    %447 = vmatmul.bf16.gmra.mxu0 %v259
    %v448 = vpop.f32.mrf.mxu0
    %v449 = vadd.f32 0.0, %v448
    %v450 = vpop.f32.mrf.mxu0
    %v451 = vadd.f32 0.0, %v450
    %452 = vmatmul.bf16.gmra.mxu0 %v262
    %v453 = vpop.f32.mrf.mxu0
    %v454 = vadd.f32 0.0, %v453
    %v455 = vpop.f32.mrf.mxu0
    %v456 = vadd.f32 0.0, %v455
    %457 = vmatmul.bf16.gmra.mxu0 %v265
    %v458 = vpop.f32.mrf.mxu0
    %v459 = vadd.f32 0.0, %v458
    %v460 = vpop.f32.mrf.mxu0
    %v461 = vadd.f32 0.0, %v460
    %462 = vdwg.mxu0
    %v463 = vld [vmem:[#allocation5] sm:$0xff]
    %v464 = vld [vmem:[#allocation7] sm:$0xff]
    %v465 = vld [vmem:[#allocation5 + $0x8] sm:$0xff]
    %v466 = vld [vmem:[#allocation7 + $0x8] sm:$0xff]
    %v468 = vperm.slane %v165, 0
    %v469 = vperm.slane %v165, 1
    %v470 = vperm.slane %v165, 2
    %v471 = vperm.slane %v165, 3
    %v476 = vadd.f32 %v277, %v468
    %v477 = vadd.f32 %v326, %v469
    %v478 = vadd.f32 %v375, %v470
    %v479 = vadd.f32 %v424, %v471
    %v480 = vpack.c.bf16 %v463, %v463
    %v513 = vunpack.c.l.b16 %v133
    %v514 = vunpack.c.h.b16 %v133
    %v515 = vunpack.c.l.b16 %v134
    %v516 = vunpack.c.h.b16 %v134
    %v517 = vunpack.c.l.b16 %v135
    %v518 = vunpack.c.h.b16 %v135
    %v519 = vunpack.c.l.b16 %v136
    %v520 = vunpack.c.h.b16 %v136
    %v521 = vunpack.c.l.b16 %v137
    %v522 = vunpack.c.h.b16 %v137
    %v523 = vunpack.c.l.b16 %v138
    %v524 = vunpack.c.h.b16 %v138
    %v525 = vunpack.c.l.b16 %v139
    %v526 = vunpack.c.h.b16 %v139
    %v527 = vunpack.c.l.b16 %v140
    %v528 = vunpack.c.h.b16 %v140
    %v529 = vunpack.c.l.b16 %v141
    %v530 = vunpack.c.h.b16 %v141
    %v531 = vunpack.c.l.b16 %v142
    %v532 = vunpack.c.h.b16 %v142
    %v533 = vunpack.c.l.b16 %v143
    %v534 = vunpack.c.h.b16 %v143
    %v535 = vunpack.c.l.b16 %v144
    %v536 = vunpack.c.h.b16 %v144
    %v537 = vunpack.c.l.b16 %v145
    %v538 = vunpack.c.h.b16 %v145
    %v539 = vunpack.c.l.b16 %v146
    %v540 = vunpack.c.h.b16 %v146
    %v541 = vunpack.c.l.b16 %v147
    %v542 = vunpack.c.h.b16 %v147
    %v543 = vunpack.c.l.b16 %v148
    %v544 = vunpack.c.h.b16 %v148
    %v545 = vunpack.c.l.b16 %v149
    %v546 = vunpack.c.h.b16 %v149
    %v547 = vunpack.c.l.b16 %v150
    %v548 = vunpack.c.h.b16 %v150
    %v549 = vunpack.c.l.b16 %v151
    %v550 = vunpack.c.h.b16 %v151
    %v551 = vunpack.c.l.b16 %v152
    %v552 = vunpack.c.h.b16 %v152
    %v553 = vunpack.c.l.b16 %v153
    %v554 = vunpack.c.h.b16 %v153
    %v555 = vunpack.c.l.b16 %v154
    %v556 = vunpack.c.h.b16 %v154
    %v557 = vunpack.c.l.b16 %v155
    %v558 = vunpack.c.h.b16 %v155
    %v559 = vunpack.c.l.b16 %v156
    %v560 = vunpack.c.h.b16 %v156
    %v561 = vunpack.c.l.b16 %v157
    %v562 = vunpack.c.h.b16 %v157
    %v563 = vunpack.c.l.b16 %v158
    %v564 = vunpack.c.h.b16 %v158
    %v565 = vunpack.c.l.b16 %v159
    %v566 = vunpack.c.h.b16 %v159
    %v567 = vunpack.c.l.b16 %v160
    %v568 = vunpack.c.h.b16 %v160
    %v569 = vunpack.c.l.b16 %v161
    %v570 = vunpack.c.h.b16 %v161
    %v571 = vunpack.c.l.b16 %v162
    %v572 = vunpack.c.h.b16 %v162
    %v573 = vunpack.c.l.b16 %v163
    %v574 = vunpack.c.h.b16 %v163
    %v575 = vunpack.c.l.b16 %v164
    %v576 = vunpack.c.h.b16 %v164
    %v577 = vpack.c.b16 %v517, %v513
    %v578 = vpack.c.b16 %v518, %v514
    %v579 = vpack.c.b16 %v519, %v515
    %v580 = vpack.c.b16 %v520, %v516
    %v581 = vpack.c.b16 %v525, %v521
    %v582 = vpack.c.b16 %v526, %v522
    %v583 = vpack.c.b16 %v527, %v523
    %v584 = vpack.c.b16 %v528, %v524
    %v585 = vpack.c.b16 %v533, %v529
    %v586 = vpack.c.b16 %v534, %v530
    %v587 = vpack.c.b16 %v535, %v531
    %v588 = vpack.c.b16 %v536, %v532
    %v589 = vpack.c.b16 %v541, %v537
    %v590 = vpack.c.b16 %v542, %v538
    %v591 = vpack.c.b16 %v543, %v539
    %v592 = vpack.c.b16 %v544, %v540
    %v593 = vpack.c.b16 %v549, %v545
    %v594 = vpack.c.b16 %v550, %v546
    %v595 = vpack.c.b16 %v551, %v547
    %v596 = vpack.c.b16 %v552, %v548
    %v597 = vpack.c.b16 %v557, %v553
    %v598 = vpack.c.b16 %v558, %v554
    %v599 = vpack.c.b16 %v559, %v555
    %v600 = vpack.c.b16 %v560, %v556
    %v601 = vpack.c.b16 %v565, %v561
    %v602 = vpack.c.b16 %v566, %v562
    %v603 = vpack.c.b16 %v567, %v563
    %v604 = vpack.c.b16 %v568, %v564
    %v605 = vpack.c.b16 %v573, %v569
    %v606 = vpack.c.b16 %v574, %v570
    %v607 = vpack.c.b16 %v575, %v571
    %v608 = vpack.c.b16 %v576, %v572
    %641 = vmatpush.bf16.msra.mxu0 %v605
    %642 = vmatpush.bf16.msra.mxu0 %v601
    %643 = vmatpush.bf16.msra.mxu0 %v597
    %644 = vmatpush.bf16.msra.mxu0 %v593
    %645 = vmatpush.bf16.msra.mxu0 %v589
    %646 = vmatpush.bf16.msra.mxu0 %v585
    %647 = vmatpush.bf16.msra.mxu0 %v581
    %648 = vmatpush.bf16.msra.mxu0 %v577
    %649 = vmatmul.bf16.gmra.mxu0 %v480
    %v650 = vpop.f32.mrf.mxu0
    %v651 = vadd.f32 0.0, %v650
    %v652 = vpop.f32.mrf.mxu0
    %653 = vdwg.mxu0
    %654 = vmatpush.bf16.msra.mxu0 %v606
    %655 = vmatpush.bf16.msra.mxu0 %v602
    %656 = vmatpush.bf16.msra.mxu0 %v598
    %657 = vmatpush.bf16.msra.mxu0 %v594
    %658 = vmatpush.bf16.msra.mxu0 %v590
    %659 = vmatpush.bf16.msra.mxu0 %v586
    %660 = vmatpush.bf16.msra.mxu0 %v582
    %661 = vmatpush.bf16.msra.mxu0 %v578
    %662 = vmatmul.bf16.gmra.mxu0 %v480
    %v663 = vpop.f32.mrf.mxu0
    %v664 = vadd.f32 0.0, %v663
    %v665 = vpop.f32.mrf.mxu0
    %666 = vdwg.mxu0
    %667 = vmatpush.bf16.msra.mxu0 %v607
    %668 = vmatpush.bf16.msra.mxu0 %v603
    %669 = vmatpush.bf16.msra.mxu0 %v599
    %670 = vmatpush.bf16.msra.mxu0 %v595
    %671 = vmatpush.bf16.msra.mxu0 %v591
    %672 = vmatpush.bf16.msra.mxu0 %v587
    %673 = vmatpush.bf16.msra.mxu0 %v583
    %674 = vmatpush.bf16.msra.mxu0 %v579
    %675 = vmatmul.bf16.gmra.mxu0 %v480
    %v676 = vpop.f32.mrf.mxu0
    %v677 = vadd.f32 0.0, %v676
    %v678 = vpop.f32.mrf.mxu0
    %679 = vdwg.mxu0
    %680 = vmatpush.bf16.msra.mxu0 %v608
    %681 = vmatpush.bf16.msra.mxu0 %v604
    %682 = vmatpush.bf16.msra.mxu0 %v600
    %683 = vmatpush.bf16.msra.mxu0 %v596
    %684 = vmatpush.bf16.msra.mxu0 %v592
    %685 = vmatpush.bf16.msra.mxu0 %v588
    %686 = vmatpush.bf16.msra.mxu0 %v584
    %687 = vmatpush.bf16.msra.mxu0 %v580
    %688 = vmatmul.bf16.gmra.mxu0 %v480
    %v689 = vpop.f32.mrf.mxu0
    %v690 = vadd.f32 0.0, %v689
    %v691 = vpop.f32.mrf.mxu0
    %692 = vdwg.mxu0
    %v693 = vadd.f32 %v476, %v651
    %v694 = vadd.f32 %v477, %v664
    %v695 = vadd.f32 %v478, %v677
    %v696 = vadd.f32 %v479, %v690
    %v697 = vadd.f32 %v279, %v468
    %v698 = vadd.f32 %v328, %v469
    %v699 = vadd.f32 %v377, %v470
    %v700 = vadd.f32 %v426, %v471
    %v701 = vpack.c.bf16 %v465, %v465
    %702 = vmatpush.bf16.msra.mxu0 %v605
    %703 = vmatpush.bf16.msra.mxu0 %v601
    %704 = vmatpush.bf16.msra.mxu0 %v597
    %705 = vmatpush.bf16.msra.mxu0 %v593
    %706 = vmatpush.bf16.msra.mxu0 %v589
    %707 = vmatpush.bf16.msra.mxu0 %v585
    %708 = vmatpush.bf16.msra.mxu0 %v581
    %709 = vmatpush.bf16.msra.mxu0 %v577
    %710 = vmatmul.bf16.gmra.mxu0 %v701
    %v711 = vpop.f32.mrf.mxu0
    %v712 = vadd.f32 0.0, %v711
    %v713 = vpop.f32.mrf.mxu0
    %714 = vdwg.mxu0
    %715 = vmatpush.bf16.msra.mxu0 %v606
    %716 = vmatpush.bf16.msra.mxu0 %v602
    %717 = vmatpush.bf16.msra.mxu0 %v598
    %718 = vmatpush.bf16.msra.mxu0 %v594
    %719 = vmatpush.bf16.msra.mxu0 %v590
    %720 = vmatpush.bf16.msra.mxu0 %v586
    %721 = vmatpush.bf16.msra.mxu0 %v582
    %722 = vmatpush.bf16.msra.mxu0 %v578
    %723 = vmatmul.bf16.gmra.mxu0 %v701
    %v724 = vpop.f32.mrf.mxu0
    %v725 = vadd.f32 0.0, %v724
    %v726 = vpop.f32.mrf.mxu0
    %727 = vdwg.mxu0
    %728 = vmatpush.bf16.msra.mxu0 %v607
    %729 = vmatpush.bf16.msra.mxu0 %v603
    %730 = vmatpush.bf16.msra.mxu0 %v599
    %731 = vmatpush.bf16.msra.mxu0 %v595
    %732 = vmatpush.bf16.msra.mxu0 %v591
    %733 = vmatpush.bf16.msra.mxu0 %v587
    %734 = vmatpush.bf16.msra.mxu0 %v583
    %735 = vmatpush.bf16.msra.mxu0 %v579
    %736 = vmatmul.bf16.gmra.mxu0 %v701
    %v737 = vpop.f32.mrf.mxu0
    %v738 = vadd.f32 0.0, %v737
    %v739 = vpop.f32.mrf.mxu0
    %740 = vdwg.mxu0
    %741 = vmatpush.bf16.msra.mxu0 %v608
    %742 = vmatpush.bf16.msra.mxu0 %v604
    %743 = vmatpush.bf16.msra.mxu0 %v600
    %744 = vmatpush.bf16.msra.mxu0 %v596
    %745 = vmatpush.bf16.msra.mxu0 %v592
    %746 = vmatpush.bf16.msra.mxu0 %v588
    %747 = vmatpush.bf16.msra.mxu0 %v584
    %748 = vmatpush.bf16.msra.mxu0 %v580
    %749 = vmatmul.bf16.gmra.mxu0 %v701
    %v750 = vpop.f32.mrf.mxu0
    %v751 = vadd.f32 0.0, %v750
    %v752 = vpop.f32.mrf.mxu0
    %753 = vdwg.mxu0
    %v754 = vadd.f32 %v697, %v712
    %v755 = vadd.f32 %v698, %v725
    %v756 = vadd.f32 %v699, %v738
    %v757 = vadd.f32 %v700, %v751
    %v758 = vxor.u32 %v693, 2147483648
    %v759 = vmul.f32 %v758, 1.442695
    %v760 = vpow.pop %v759
    %v761 = vadd.f32 %v760, 1.0
    %v762 = vrcp.pop %v761
    %v763 = vmul.f32 %v761, %v762
    %v764 = vsub.f32 1.0, %v763
    %v765 = vmul.f32 %v762, %v764
    %v766 = vadd.f32 %v762, %v765
    %vm767 = vweird.f32 %v761
    %vm768 = vweird.f32 %v762
    %vm769 = vmor %vm767, %vm768
    %v770 = vsel %vm769, %v762, %v766
    %v771 = vand.u32 2147483647, %v761
    %vm772 = vcmp.eq.f32.partialorder %v771, 8.507059e+37
    %v773 = vand.u32 %v761, 2147483648
    %v774 = vor.u32 1.1754944e-38, %v773
    %v775 = vsel %vm772, %v774, %v770
    %v776 = vmul.f32 1.0, %v775
    %v777 = vxor.u32 %v694, 2147483648
    %v778 = vmul.f32 %v777, 1.442695
    %v779 = vpow.pop %v778
    %v780 = vadd.f32 %v779, 1.0
    %v781 = vrcp.pop %v780
    %v782 = vmul.f32 %v780, %v781
    %v783 = vsub.f32 1.0, %v782
    %v784 = vmul.f32 %v781, %v783
    %v785 = vadd.f32 %v781, %v784
    %vm786 = vweird.f32 %v780
    %vm787 = vweird.f32 %v781
    %vm788 = vmor %vm786, %vm787
    %v789 = vsel %vm788, %v781, %v785
    %v790 = vand.u32 2147483647, %v780
    %vm791 = vcmp.eq.f32.partialorder %v790, 8.507059e+37
    %v792 = vand.u32 %v780, 2147483648
    %v793 = vor.u32 1.1754944e-38, %v792
    %v794 = vsel %vm791, %v793, %v789
    %v795 = vmul.f32 1.0, %v794
    %v796 = vtanh.pop %v695
    %v797 = vxor.u32 %v696, 2147483648
    %v798 = vmul.f32 %v797, 1.442695
    %v799 = vpow.pop %v798
    %v800 = vadd.f32 %v799, 1.0
    %v801 = vrcp.pop %v800
    %v802 = vmul.f32 %v800, %v801
    %v803 = vsub.f32 1.0, %v802
    %v804 = vmul.f32 %v801, %v803
    %v805 = vadd.f32 %v801, %v804
    %vm806 = vweird.f32 %v800
    %vm807 = vweird.f32 %v801
    %vm808 = vmor %vm806, %vm807
    %v809 = vsel %vm808, %v801, %v805
    %v810 = vand.u32 2147483647, %v800
    %vm811 = vcmp.eq.f32.partialorder %v810, 8.507059e+37
    %v812 = vand.u32 %v800, 2147483648
    %v813 = vor.u32 1.1754944e-38, %v812
    %v814 = vsel %vm811, %v813, %v809
    %v815 = vmul.f32 1.0, %v814
    %v816 = vmul.f32 %v795, %v464
    %v817 = vmul.f32 %v776, %v796
    %v818 = vadd.f32 %v816, %v817
    %v819 = vtanh.pop %v818
    %v820 = vmul.f32 %v815, %v819
    %v821 = vxor.u32 %v754, 2147483648
    %v822 = vmul.f32 %v821, 1.442695
    %v823 = vpow.pop %v822
    %v824 = vadd.f32 %v823, 1.0
    %v825 = vrcp.pop %v824
    %v826 = vmul.f32 %v824, %v825
    %v827 = vsub.f32 1.0, %v826
    %v828 = vmul.f32 %v825, %v827
    %v829 = vadd.f32 %v825, %v828
    %vm830 = vweird.f32 %v824
    %vm831 = vweird.f32 %v825
    %vm832 = vmor %vm830, %vm831
    %v833 = vsel %vm832, %v825, %v829
    %v834 = vand.u32 2147483647, %v824
    %vm835 = vcmp.eq.f32.partialorder %v834, 8.507059e+37
    %v836 = vand.u32 %v824, 2147483648
    %v837 = vor.u32 1.1754944e-38, %v836
    %v838 = vsel %vm835, %v837, %v833
    %v839 = vmul.f32 1.0, %v838
    %v840 = vxor.u32 %v755, 2147483648
    %v841 = vmul.f32 %v840, 1.442695
    %v842 = vpow.pop %v841
    %v843 = vadd.f32 %v842, 1.0
    %v844 = vrcp.pop %v843
    %v845 = vmul.f32 %v843, %v844
    %v846 = vsub.f32 1.0, %v845
    %v847 = vmul.f32 %v844, %v846
    %v848 = vadd.f32 %v844, %v847
    %vm849 = vweird.f32 %v843
    %vm850 = vweird.f32 %v844
    %vm851 = vmor %vm849, %vm850
    %v852 = vsel %vm851, %v844, %v848
    %v853 = vand.u32 2147483647, %v843
    %vm854 = vcmp.eq.f32.partialorder %v853, 8.507059e+37
    %v855 = vand.u32 %v843, 2147483648
    %v856 = vor.u32 1.1754944e-38, %v855
    %v857 = vsel %vm854, %v856, %v852
    %v858 = vmul.f32 1.0, %v857
    %v859 = vtanh.pop %v756
    %v860 = vxor.u32 %v757, 2147483648
    %v861 = vmul.f32 %v860, 1.442695
    %v862 = vpow.pop %v861
    %v863 = vadd.f32 %v862, 1.0
    %v864 = vrcp.pop %v863
    %v865 = vmul.f32 %v863, %v864
    %v866 = vsub.f32 1.0, %v865
    %v867 = vmul.f32 %v864, %v866
    %v868 = vadd.f32 %v864, %v867
    %vm869 = vweird.f32 %v863
    %vm870 = vweird.f32 %v864
    %vm871 = vmor %vm869, %vm870
    %v872 = vsel %vm871, %v864, %v868
    %v873 = vand.u32 2147483647, %v863
    %vm874 = vcmp.eq.f32.partialorder %v873, 8.507059e+37
    %v875 = vand.u32 %v863, 2147483648
    %v876 = vor.u32 1.1754944e-38, %v875
    %v877 = vsel %vm874, %v876, %v872
    %v878 = vmul.f32 1.0, %v877
    %v879 = vmul.f32 %v858, %v466
    %v880 = vmul.f32 %v839, %v859
    %v881 = vadd.f32 %v879, %v880
    %v882 = vtanh.pop %v881
    %v883 = vmul.f32 %v878, %v882
    %v884 = vadd.f32 %v282, %v468
    %v885 = vadd.f32 %v331, %v469
    %v886 = vadd.f32 %v380, %v470
    %v887 = vadd.f32 %v429, %v471
    %v888 = vpack.c.bf16 %v820, %v820
    %889 = vmatpush.bf16.msra.mxu0 %v605
    %890 = vmatpush.bf16.msra.mxu0 %v601
    %891 = vmatpush.bf16.msra.mxu0 %v597
    %892 = vmatpush.bf16.msra.mxu0 %v593
    %893 = vmatpush.bf16.msra.mxu0 %v589
    %894 = vmatpush.bf16.msra.mxu0 %v585
    %895 = vmatpush.bf16.msra.mxu0 %v581
    %896 = vmatpush.bf16.msra.mxu0 %v577
    %897 = vmatmul.bf16.gmra.mxu0 %v888
    %v898 = vpop.f32.mrf.mxu0
    %v899 = vadd.f32 0.0, %v898
    %v900 = vpop.f32.mrf.mxu0
    %901 = vdwg.mxu0
    %902 = vmatpush.bf16.msra.mxu0 %v606
    %903 = vmatpush.bf16.msra.mxu0 %v602
    %904 = vmatpush.bf16.msra.mxu0 %v598
    %905 = vmatpush.bf16.msra.mxu0 %v594
    %906 = vmatpush.bf16.msra.mxu0 %v590
    %907 = vmatpush.bf16.msra.mxu0 %v586
    %908 = vmatpush.bf16.msra.mxu0 %v582
    %909 = vmatpush.bf16.msra.mxu0 %v578
    %910 = vmatmul.bf16.gmra.mxu0 %v888
    %v911 = vpop.f32.mrf.mxu0
    %v912 = vadd.f32 0.0, %v911
    %v913 = vpop.f32.mrf.mxu0
    %914 = vdwg.mxu0
    %915 = vmatpush.bf16.msra.mxu0 %v607
    %916 = vmatpush.bf16.msra.mxu0 %v603
    %917 = vmatpush.bf16.msra.mxu0 %v599
    %918 = vmatpush.bf16.msra.mxu0 %v595
    %919 = vmatpush.bf16.msra.mxu0 %v591
    %920 = vmatpush.bf16.msra.mxu0 %v587
    %921 = vmatpush.bf16.msra.mxu0 %v583
    %922 = vmatpush.bf16.msra.mxu0 %v579
    %923 = vmatmul.bf16.gmra.mxu0 %v888
    %v924 = vpop.f32.mrf.mxu0
    %v925 = vadd.f32 0.0, %v924
    %v926 = vpop.f32.mrf.mxu0
    %927 = vdwg.mxu0
    %928 = vmatpush.bf16.msra.mxu0 %v608
    %929 = vmatpush.bf16.msra.mxu0 %v604
    %930 = vmatpush.bf16.msra.mxu0 %v600
    %931 = vmatpush.bf16.msra.mxu0 %v596
    %932 = vmatpush.bf16.msra.mxu0 %v592
    %933 = vmatpush.bf16.msra.mxu0 %v588
    %934 = vmatpush.bf16.msra.mxu0 %v584
    %935 = vmatpush.bf16.msra.mxu0 %v580
    %936 = vmatmul.bf16.gmra.mxu0 %v888
    %v937 = vpop.f32.mrf.mxu0
    %v938 = vadd.f32 0.0, %v937
    %v939 = vpop.f32.mrf.mxu0
    %940 = vdwg.mxu0
    %v941 = vadd.f32 %v884, %v899
    %v942 = vadd.f32 %v885, %v912
    %v943 = vadd.f32 %v886, %v925
    %v944 = vadd.f32 %v887, %v938
    %v945 = vadd.f32 %v284, %v468
    %v946 = vadd.f32 %v333, %v469
    %v947 = vadd.f32 %v382, %v470
    %v948 = vadd.f32 %v431, %v471
    %v949 = vpack.c.bf16 %v883, %v883
    %950 = vmatpush.bf16.msra.mxu0 %v605
    %951 = vmatpush.bf16.msra.mxu0 %v601
    %952 = vmatpush.bf16.msra.mxu0 %v597
    %953 = vmatpush.bf16.msra.mxu0 %v593
    %954 = vmatpush.bf16.msra.mxu0 %v589
    %955 = vmatpush.bf16.msra.mxu0 %v585
    %956 = vmatpush.bf16.msra.mxu0 %v581
    %957 = vmatpush.bf16.msra.mxu0 %v577
    %958 = vmatmul.bf16.gmra.mxu0 %v949
    %v959 = vpop.f32.mrf.mxu0
    %v960 = vadd.f32 0.0, %v959
    %v961 = vpop.f32.mrf.mxu0
    %962 = vdwg.mxu0
    %963 = vmatpush.bf16.msra.mxu0 %v606
    %964 = vmatpush.bf16.msra.mxu0 %v602
    %965 = vmatpush.bf16.msra.mxu0 %v598
    %966 = vmatpush.bf16.msra.mxu0 %v594
    %967 = vmatpush.bf16.msra.mxu0 %v590
    %968 = vmatpush.bf16.msra.mxu0 %v586
    %969 = vmatpush.bf16.msra.mxu0 %v582
    %970 = vmatpush.bf16.msra.mxu0 %v578
    %971 = vmatmul.bf16.gmra.mxu0 %v949
    %v972 = vpop.f32.mrf.mxu0
    %v973 = vadd.f32 0.0, %v972
    %v974 = vpop.f32.mrf.mxu0
    %975 = vdwg.mxu0
    %976 = vmatpush.bf16.msra.mxu0 %v607
    %977 = vmatpush.bf16.msra.mxu0 %v603
    %978 = vmatpush.bf16.msra.mxu0 %v599
    %979 = vmatpush.bf16.msra.mxu0 %v595
    %980 = vmatpush.bf16.msra.mxu0 %v591
    %981 = vmatpush.bf16.msra.mxu0 %v587
    %982 = vmatpush.bf16.msra.mxu0 %v583
    %983 = vmatpush.bf16.msra.mxu0 %v579
    %984 = vmatmul.bf16.gmra.mxu0 %v949
    %v985 = vpop.f32.mrf.mxu0
    %v986 = vadd.f32 0.0, %v985
    %v987 = vpop.f32.mrf.mxu0
    %988 = vdwg.mxu0
    %989 = vmatpush.bf16.msra.mxu0 %v608
    %990 = vmatpush.bf16.msra.mxu0 %v604
    %991 = vmatpush.bf16.msra.mxu0 %v600
    %992 = vmatpush.bf16.msra.mxu0 %v596
    %993 = vmatpush.bf16.msra.mxu0 %v592
    %994 = vmatpush.bf16.msra.mxu0 %v588
    %995 = vmatpush.bf16.msra.mxu0 %v584
    %996 = vmatpush.bf16.msra.mxu0 %v580
    %997 = vmatmul.bf16.gmra.mxu0 %v949
    %v998 = vpop.f32.mrf.mxu0
    %v999 = vadd.f32 0.0, %v998
    %v1000 = vpop.f32.mrf.mxu0
    %1001 = vdwg.mxu0
    %v1002 = vadd.f32 %v945, %v960
    %v1003 = vadd.f32 %v946, %v973
    %v1004 = vadd.f32 %v947, %v986
    %v1005 = vadd.f32 %v948, %v999
    %v1006 = vxor.u32 %v941, 2147483648
    %v1007 = vmul.f32 %v1006, 1.442695
    %v1008 = vpow.pop %v1007
    %v1009 = vadd.f32 %v1008, 1.0
    %v1010 = vrcp.pop %v1009
    %v1011 = vmul.f32 %v1009, %v1010
    %v1012 = vsub.f32 1.0, %v1011
    %v1013 = vmul.f32 %v1010, %v1012
    %v1014 = vadd.f32 %v1010, %v1013
    %vm1015 = vweird.f32 %v1009
    %vm1016 = vweird.f32 %v1010
    %vm1017 = vmor %vm1015, %vm1016
    %v1018 = vsel %vm1017, %v1010, %v1014
    %v1019 = vand.u32 2147483647, %v1009
    %vm1020 = vcmp.eq.f32.partialorder %v1019, 8.507059e+37
    %v1021 = vand.u32 %v1009, 2147483648
    %v1022 = vor.u32 1.1754944e-38, %v1021
    %v1023 = vsel %vm1020, %v1022, %v1018
    %v1024 = vmul.f32 1.0, %v1023
    %v1025 = vxor.u32 %v942, 2147483648
    %v1026 = vmul.f32 %v1025, 1.442695
    %v1027 = vpow.pop %v1026
    %v1028 = vadd.f32 %v1027, 1.0
    %v1029 = vrcp.pop %v1028
    %v1030 = vmul.f32 %v1028, %v1029
    %v1031 = vsub.f32 1.0, %v1030
    %v1032 = vmul.f32 %v1029, %v1031
    %v1033 = vadd.f32 %v1029, %v1032
    %vm1034 = vweird.f32 %v1028
    %vm1035 = vweird.f32 %v1029
    %vm1036 = vmor %vm1034, %vm1035
    %v1037 = vsel %vm1036, %v1029, %v1033
    %v1038 = vand.u32 2147483647, %v1028
    %vm1039 = vcmp.eq.f32.partialorder %v1038, 8.507059e+37
    %v1040 = vand.u32 %v1028, 2147483648
    %v1041 = vor.u32 1.1754944e-38, %v1040
    %v1042 = vsel %vm1039, %v1041, %v1037
    %v1043 = vmul.f32 1.0, %v1042
    %v1044 = vtanh.pop %v943
    %v1045 = vxor.u32 %v944, 2147483648
    %v1046 = vmul.f32 %v1045, 1.442695
    %v1047 = vpow.pop %v1046
    %v1048 = vadd.f32 %v1047, 1.0
    %v1049 = vrcp.pop %v1048
    %v1050 = vmul.f32 %v1048, %v1049
    %v1051 = vsub.f32 1.0, %v1050
    %v1052 = vmul.f32 %v1049, %v1051
    %v1053 = vadd.f32 %v1049, %v1052
    %vm1054 = vweird.f32 %v1048
    %vm1055 = vweird.f32 %v1049
    %vm1056 = vmor %vm1054, %vm1055
    %v1057 = vsel %vm1056, %v1049, %v1053
    %v1058 = vand.u32 2147483647, %v1048
    %vm1059 = vcmp.eq.f32.partialorder %v1058, 8.507059e+37
    %v1060 = vand.u32 %v1048, 2147483648
    %v1061 = vor.u32 1.1754944e-38, %v1060
    %v1062 = vsel %vm1059, %v1061, %v1057
    %v1063 = vmul.f32 1.0, %v1062
    %v1064 = vmul.f32 %v1043, %v818
    %v1065 = vmul.f32 %v1024, %v1044
    %v1066 = vadd.f32 %v1064, %v1065
    %v1067 = vtanh.pop %v1066
    %v1068 = vmul.f32 %v1063, %v1067
    %v1069 = vxor.u32 %v1002, 2147483648
    %v1070 = vmul.f32 %v1069, 1.442695
    %v1071 = vpow.pop %v1070
    %v1072 = vadd.f32 %v1071, 1.0
    %v1073 = vrcp.pop %v1072
    %v1074 = vmul.f32 %v1072, %v1073
    %v1075 = vsub.f32 1.0, %v1074
    %v1076 = vmul.f32 %v1073, %v1075
    %v1077 = vadd.f32 %v1073, %v1076
    %vm1078 = vweird.f32 %v1072
    %vm1079 = vweird.f32 %v1073
    %vm1080 = vmor %vm1078, %vm1079
    %v1081 = vsel %vm1080, %v1073, %v1077
    %v1082 = vand.u32 2147483647, %v1072
    %vm1083 = vcmp.eq.f32.partialorder %v1082, 8.507059e+37
    %v1084 = vand.u32 %v1072, 2147483648
    %v1085 = vor.u32 1.1754944e-38, %v1084
    %v1086 = vsel %vm1083, %v1085, %v1081
    %v1087 = vmul.f32 1.0, %v1086
    %v1088 = vxor.u32 %v1003, 2147483648
    %v1089 = vmul.f32 %v1088, 1.442695
    %v1090 = vpow.pop %v1089
    %v1091 = vadd.f32 %v1090, 1.0
    %v1092 = vrcp.pop %v1091
    %v1093 = vmul.f32 %v1091, %v1092
    %v1094 = vsub.f32 1.0, %v1093
    %v1095 = vmul.f32 %v1092, %v1094
    %v1096 = vadd.f32 %v1092, %v1095
    %vm1097 = vweird.f32 %v1091
    %vm1098 = vweird.f32 %v1092
    %vm1099 = vmor %vm1097, %vm1098
    %v1100 = vsel %vm1099, %v1092, %v1096
    %v1101 = vand.u32 2147483647, %v1091
    %vm1102 = vcmp.eq.f32.partialorder %v1101, 8.507059e+37
    %v1103 = vand.u32 %v1091, 2147483648
    %v1104 = vor.u32 1.1754944e-38, %v1103
    %v1105 = vsel %vm1102, %v1104, %v1100
    %v1106 = vmul.f32 1.0, %v1105
    %v1107 = vtanh.pop %v1004
    %v1108 = vxor.u32 %v1005, 2147483648
    %v1109 = vmul.f32 %v1108, 1.442695
    %v1110 = vpow.pop %v1109
    %v1111 = vadd.f32 %v1110, 1.0
    %v1112 = vrcp.pop %v1111
    %v1113 = vmul.f32 %v1111, %v1112
    %v1114 = vsub.f32 1.0, %v1113
    %v1115 = vmul.f32 %v1112, %v1114
    %v1116 = vadd.f32 %v1112, %v1115
    %vm1117 = vweird.f32 %v1111
    %vm1118 = vweird.f32 %v1112
    %vm1119 = vmor %vm1117, %vm1118
    %v1120 = vsel %vm1119, %v1112, %v1116
    %v1121 = vand.u32 2147483647, %v1111
    %vm1122 = vcmp.eq.f32.partialorder %v1121, 8.507059e+37
    %v1123 = vand.u32 %v1111, 2147483648
    %v1124 = vor.u32 1.1754944e-38, %v1123
    %v1125 = vsel %vm1122, %v1124, %v1120
    %v1126 = vmul.f32 1.0, %v1125
    %v1127 = vmul.f32 %v1106, %v881
    %v1128 = vmul.f32 %v1087, %v1107
    %v1129 = vadd.f32 %v1127, %v1128
    %v1130 = vtanh.pop %v1129
    %v1131 = vmul.f32 %v1126, %v1130
    %v1132 = vadd.f32 %v287, %v468
    %v1133 = vadd.f32 %v336, %v469
    %v1134 = vadd.f32 %v385, %v470
    %v1135 = vadd.f32 %v434, %v471
    %v1136 = vpack.c.bf16 %v1068, %v1068
    %1137 = vmatpush.bf16.msra.mxu0 %v605
    %1138 = vmatpush.bf16.msra.mxu0 %v601
    %1139 = vmatpush.bf16.msra.mxu0 %v597
    %1140 = vmatpush.bf16.msra.mxu0 %v593
    %1141 = vmatpush.bf16.msra.mxu0 %v589
    %1142 = vmatpush.bf16.msra.mxu0 %v585
    %1143 = vmatpush.bf16.msra.mxu0 %v581
    %1144 = vmatpush.bf16.msra.mxu0 %v577
    %1145 = vmatmul.bf16.gmra.mxu0 %v1136
    %v1146 = vpop.f32.mrf.mxu0
    %v1147 = vadd.f32 0.0, %v1146
    %v1148 = vpop.f32.mrf.mxu0
    %1149 = vdwg.mxu0
    %1150 = vmatpush.bf16.msra.mxu0 %v606
    %1151 = vmatpush.bf16.msra.mxu0 %v602
    %1152 = vmatpush.bf16.msra.mxu0 %v598
    %1153 = vmatpush.bf16.msra.mxu0 %v594
    %1154 = vmatpush.bf16.msra.mxu0 %v590
    %1155 = vmatpush.bf16.msra.mxu0 %v586
    %1156 = vmatpush.bf16.msra.mxu0 %v582
    %1157 = vmatpush.bf16.msra.mxu0 %v578
    %1158 = vmatmul.bf16.gmra.mxu0 %v1136
    %v1159 = vpop.f32.mrf.mxu0
    %v1160 = vadd.f32 0.0, %v1159
    %v1161 = vpop.f32.mrf.mxu0
    %1162 = vdwg.mxu0
    %1163 = vmatpush.bf16.msra.mxu0 %v607
    %1164 = vmatpush.bf16.msra.mxu0 %v603
    %1165 = vmatpush.bf16.msra.mxu0 %v599
    %1166 = vmatpush.bf16.msra.mxu0 %v595
    %1167 = vmatpush.bf16.msra.mxu0 %v591
    %1168 = vmatpush.bf16.msra.mxu0 %v587
    %1169 = vmatpush.bf16.msra.mxu0 %v583
    %1170 = vmatpush.bf16.msra.mxu0 %v579
    %1171 = vmatmul.bf16.gmra.mxu0 %v1136
    %v1172 = vpop.f32.mrf.mxu0
    %v1173 = vadd.f32 0.0, %v1172
    %v1174 = vpop.f32.mrf.mxu0
    %1175 = vdwg.mxu0
    %1176 = vmatpush.bf16.msra.mxu0 %v608
    %1177 = vmatpush.bf16.msra.mxu0 %v604
    %1178 = vmatpush.bf16.msra.mxu0 %v600
    %1179 = vmatpush.bf16.msra.mxu0 %v596
    %1180 = vmatpush.bf16.msra.mxu0 %v592
    %1181 = vmatpush.bf16.msra.mxu0 %v588
    %1182 = vmatpush.bf16.msra.mxu0 %v584
    %1183 = vmatpush.bf16.msra.mxu0 %v580
    %1184 = vmatmul.bf16.gmra.mxu0 %v1136
    %v1185 = vpop.f32.mrf.mxu0
    %v1186 = vadd.f32 0.0, %v1185
    %v1187 = vpop.f32.mrf.mxu0
    %1188 = vdwg.mxu0
    %v1189 = vadd.f32 %v1132, %v1147
    %v1190 = vadd.f32 %v1133, %v1160
    %v1191 = vadd.f32 %v1134, %v1173
    %v1192 = vadd.f32 %v1135, %v1186
    %v1193 = vadd.f32 %v289, %v468
    %v1194 = vadd.f32 %v338, %v469
    %v1195 = vadd.f32 %v387, %v470
    %v1196 = vadd.f32 %v436, %v471
    %v1197 = vpack.c.bf16 %v1131, %v1131
    %1198 = vmatpush.bf16.msra.mxu0 %v605
    %1199 = vmatpush.bf16.msra.mxu0 %v601
    %1200 = vmatpush.bf16.msra.mxu0 %v597
    %1201 = vmatpush.bf16.msra.mxu0 %v593
    %1202 = vmatpush.bf16.msra.mxu0 %v589
    %1203 = vmatpush.bf16.msra.mxu0 %v585
    %1204 = vmatpush.bf16.msra.mxu0 %v581
    %1205 = vmatpush.bf16.msra.mxu0 %v577
    %1206 = vmatmul.bf16.gmra.mxu0 %v1197
    %v1207 = vpop.f32.mrf.mxu0
    %v1208 = vadd.f32 0.0, %v1207
    %v1209 = vpop.f32.mrf.mxu0
    %1210 = vdwg.mxu0
    %1211 = vmatpush.bf16.msra.mxu0 %v606
    %1212 = vmatpush.bf16.msra.mxu0 %v602
    %1213 = vmatpush.bf16.msra.mxu0 %v598
    %1214 = vmatpush.bf16.msra.mxu0 %v594
    %1215 = vmatpush.bf16.msra.mxu0 %v590
    %1216 = vmatpush.bf16.msra.mxu0 %v586
    %1217 = vmatpush.bf16.msra.mxu0 %v582
    %1218 = vmatpush.bf16.msra.mxu0 %v578
    %1219 = vmatmul.bf16.gmra.mxu0 %v1197
    %v1220 = vpop.f32.mrf.mxu0
    %v1221 = vadd.f32 0.0, %v1220
    %v1222 = vpop.f32.mrf.mxu0
    %1223 = vdwg.mxu0
    %1224 = vmatpush.bf16.msra.mxu0 %v607
    %1225 = vmatpush.bf16.msra.mxu0 %v603
    %1226 = vmatpush.bf16.msra.mxu0 %v599
    %1227 = vmatpush.bf16.msra.mxu0 %v595
    %1228 = vmatpush.bf16.msra.mxu0 %v591
    %1229 = vmatpush.bf16.msra.mxu0 %v587
    %1230 = vmatpush.bf16.msra.mxu0 %v583
    %1231 = vmatpush.bf16.msra.mxu0 %v579
    %1232 = vmatmul.bf16.gmra.mxu0 %v1197
    %v1233 = vpop.f32.mrf.mxu0
    %v1234 = vadd.f32 0.0, %v1233
    %v1235 = vpop.f32.mrf.mxu0
    %1236 = vdwg.mxu0
    %1237 = vmatpush.bf16.msra.mxu0 %v608
    %1238 = vmatpush.bf16.msra.mxu0 %v604
    %1239 = vmatpush.bf16.msra.mxu0 %v600
    %1240 = vmatpush.bf16.msra.mxu0 %v596
    %1241 = vmatpush.bf16.msra.mxu0 %v592
    %1242 = vmatpush.bf16.msra.mxu0 %v588
    %1243 = vmatpush.bf16.msra.mxu0 %v584
    %1244 = vmatpush.bf16.msra.mxu0 %v580
    %1245 = vmatmul.bf16.gmra.mxu0 %v1197
    %v1246 = vpop.f32.mrf.mxu0
    %v1247 = vadd.f32 0.0, %v1246
    %v1248 = vpop.f32.mrf.mxu0
    %1249 = vdwg.mxu0
    %v1250 = vadd.f32 %v1193, %v1208
    %v1251 = vadd.f32 %v1194, %v1221
    %v1252 = vadd.f32 %v1195, %v1234
    %v1253 = vadd.f32 %v1196, %v1247
    %v1254 = vxor.u32 %v1189, 2147483648
    %v1255 = vmul.f32 %v1254, 1.442695
    %v1256 = vpow.pop %v1255
    %v1257 = vadd.f32 %v1256, 1.0
    %v1258 = vrcp.pop %v1257
    %v1259 = vmul.f32 %v1257, %v1258
    %v1260 = vsub.f32 1.0, %v1259
    %v1261 = vmul.f32 %v1258, %v1260
    %v1262 = vadd.f32 %v1258, %v1261
    %vm1263 = vweird.f32 %v1257
    %vm1264 = vweird.f32 %v1258
    %vm1265 = vmor %vm1263, %vm1264
    %v1266 = vsel %vm1265, %v1258, %v1262
    %v1267 = vand.u32 2147483647, %v1257
    %vm1268 = vcmp.eq.f32.partialorder %v1267, 8.507059e+37
    %v1269 = vand.u32 %v1257, 2147483648
    %v1270 = vor.u32 1.1754944e-38, %v1269
    %v1271 = vsel %vm1268, %v1270, %v1266
    %v1272 = vmul.f32 1.0, %v1271
    %v1273 = vxor.u32 %v1190, 2147483648
    %v1274 = vmul.f32 %v1273, 1.442695
    %v1275 = vpow.pop %v1274
    %v1276 = vadd.f32 %v1275, 1.0
    %v1277 = vrcp.pop %v1276
    %v1278 = vmul.f32 %v1276, %v1277
    %v1279 = vsub.f32 1.0, %v1278
    %v1280 = vmul.f32 %v1277, %v1279
    %v1281 = vadd.f32 %v1277, %v1280
    %vm1282 = vweird.f32 %v1276
    %vm1283 = vweird.f32 %v1277
    %vm1284 = vmor %vm1282, %vm1283
    %v1285 = vsel %vm1284, %v1277, %v1281
    %v1286 = vand.u32 2147483647, %v1276
    %vm1287 = vcmp.eq.f32.partialorder %v1286, 8.507059e+37
    %v1288 = vand.u32 %v1276, 2147483648
    %v1289 = vor.u32 1.1754944e-38, %v1288
    %v1290 = vsel %vm1287, %v1289, %v1285
    %v1291 = vmul.f32 1.0, %v1290
    %v1292 = vtanh.pop %v1191
    %v1293 = vxor.u32 %v1192, 2147483648
    %v1294 = vmul.f32 %v1293, 1.442695
    %v1295 = vpow.pop %v1294
    %v1296 = vadd.f32 %v1295, 1.0
    %v1297 = vrcp.pop %v1296
    %v1298 = vmul.f32 %v1296, %v1297
    %v1299 = vsub.f32 1.0, %v1298
    %v1300 = vmul.f32 %v1297, %v1299
    %v1301 = vadd.f32 %v1297, %v1300
    %vm1302 = vweird.f32 %v1296
    %vm1303 = vweird.f32 %v1297
    %vm1304 = vmor %vm1302, %vm1303
    %v1305 = vsel %vm1304, %v1297, %v1301
    %v1306 = vand.u32 2147483647, %v1296
    %vm1307 = vcmp.eq.f32.partialorder %v1306, 8.507059e+37
    %v1308 = vand.u32 %v1296, 2147483648
    %v1309 = vor.u32 1.1754944e-38, %v1308
    %v1310 = vsel %vm1307, %v1309, %v1305
    %v1311 = vmul.f32 1.0, %v1310
    %v1312 = vmul.f32 %v1291, %v1066
    %v1313 = vmul.f32 %v1272, %v1292
    %v1314 = vadd.f32 %v1312, %v1313
    %v1315 = vtanh.pop %v1314
    %v1316 = vmul.f32 %v1311, %v1315
    %v1317 = vxor.u32 %v1250, 2147483648
    %v1318 = vmul.f32 %v1317, 1.442695
    %v1319 = vpow.pop %v1318
    %v1320 = vadd.f32 %v1319, 1.0
    %v1321 = vrcp.pop %v1320
    %v1322 = vmul.f32 %v1320, %v1321
    %v1323 = vsub.f32 1.0, %v1322
    %v1324 = vmul.f32 %v1321, %v1323
    %v1325 = vadd.f32 %v1321, %v1324
    %vm1326 = vweird.f32 %v1320
    %vm1327 = vweird.f32 %v1321
    %vm1328 = vmor %vm1326, %vm1327
    %v1329 = vsel %vm1328, %v1321, %v1325
    %v1330 = vand.u32 2147483647, %v1320
    %vm1331 = vcmp.eq.f32.partialorder %v1330, 8.507059e+37
    %v1332 = vand.u32 %v1320, 2147483648
    %v1333 = vor.u32 1.1754944e-38, %v1332
    %v1334 = vsel %vm1331, %v1333, %v1329
    %v1335 = vmul.f32 1.0, %v1334
    %v1336 = vxor.u32 %v1251, 2147483648
    %v1337 = vmul.f32 %v1336, 1.442695
    %v1338 = vpow.pop %v1337
    %v1339 = vadd.f32 %v1338, 1.0
    %v1340 = vrcp.pop %v1339
    %v1341 = vmul.f32 %v1339, %v1340
    %v1342 = vsub.f32 1.0, %v1341
    %v1343 = vmul.f32 %v1340, %v1342
    %v1344 = vadd.f32 %v1340, %v1343
    %vm1345 = vweird.f32 %v1339
    %vm1346 = vweird.f32 %v1340
    %vm1347 = vmor %vm1345, %vm1346
    %v1348 = vsel %vm1347, %v1340, %v1344
    %v1349 = vand.u32 2147483647, %v1339
    %vm1350 = vcmp.eq.f32.partialorder %v1349, 8.507059e+37
    %v1351 = vand.u32 %v1339, 2147483648
    %v1352 = vor.u32 1.1754944e-38, %v1351
    %v1353 = vsel %vm1350, %v1352, %v1348
    %v1354 = vmul.f32 1.0, %v1353
    %v1355 = vtanh.pop %v1252
    %v1356 = vxor.u32 %v1253, 2147483648
    %v1357 = vmul.f32 %v1356, 1.442695
    %v1358 = vpow.pop %v1357
    %v1359 = vadd.f32 %v1358, 1.0
    %v1360 = vrcp.pop %v1359
    %v1361 = vmul.f32 %v1359, %v1360
    %v1362 = vsub.f32 1.0, %v1361
    %v1363 = vmul.f32 %v1360, %v1362
    %v1364 = vadd.f32 %v1360, %v1363
    %vm1365 = vweird.f32 %v1359
    %vm1366 = vweird.f32 %v1360
    %vm1367 = vmor %vm1365, %vm1366
    %v1368 = vsel %vm1367, %v1360, %v1364
    %v1369 = vand.u32 2147483647, %v1359
    %vm1370 = vcmp.eq.f32.partialorder %v1369, 8.507059e+37
    %v1371 = vand.u32 %v1359, 2147483648
    %v1372 = vor.u32 1.1754944e-38, %v1371
    %v1373 = vsel %vm1370, %v1372, %v1368
    %v1374 = vmul.f32 1.0, %v1373
    %v1375 = vmul.f32 %v1354, %v1129
    %v1376 = vmul.f32 %v1335, %v1355
    %v1377 = vadd.f32 %v1375, %v1376
    %v1378 = vtanh.pop %v1377
    %v1379 = vmul.f32 %v1374, %v1378
    %v1380 = vadd.f32 %v292, %v468
    %v1381 = vadd.f32 %v341, %v469
    %v1382 = vadd.f32 %v390, %v470
    %v1383 = vadd.f32 %v439, %v471
    %v1384 = vpack.c.bf16 %v1316, %v1316
    %1385 = vmatpush.bf16.msra.mxu0 %v605
    %1386 = vmatpush.bf16.msra.mxu0 %v601
    %1387 = vmatpush.bf16.msra.mxu0 %v597
    %1388 = vmatpush.bf16.msra.mxu0 %v593
    %1389 = vmatpush.bf16.msra.mxu0 %v589
    %1390 = vmatpush.bf16.msra.mxu0 %v585
    %1391 = vmatpush.bf16.msra.mxu0 %v581
    %1392 = vmatpush.bf16.msra.mxu0 %v577
    %1393 = vmatmul.bf16.gmra.mxu0 %v1384
    %v1394 = vpop.f32.mrf.mxu0
    %v1395 = vadd.f32 0.0, %v1394
    %v1396 = vpop.f32.mrf.mxu0
    %1397 = vdwg.mxu0
    %1398 = vmatpush.bf16.msra.mxu0 %v606
    %1399 = vmatpush.bf16.msra.mxu0 %v602
    %1400 = vmatpush.bf16.msra.mxu0 %v598
    %1401 = vmatpush.bf16.msra.mxu0 %v594
    %1402 = vmatpush.bf16.msra.mxu0 %v590
    %1403 = vmatpush.bf16.msra.mxu0 %v586
    %1404 = vmatpush.bf16.msra.mxu0 %v582
    %1405 = vmatpush.bf16.msra.mxu0 %v578
    %1406 = vmatmul.bf16.gmra.mxu0 %v1384
    %v1407 = vpop.f32.mrf.mxu0
    %v1408 = vadd.f32 0.0, %v1407
    %v1409 = vpop.f32.mrf.mxu0
    %1410 = vdwg.mxu0
    %1411 = vmatpush.bf16.msra.mxu0 %v607
    %1412 = vmatpush.bf16.msra.mxu0 %v603
    %1413 = vmatpush.bf16.msra.mxu0 %v599
    %1414 = vmatpush.bf16.msra.mxu0 %v595
    %1415 = vmatpush.bf16.msra.mxu0 %v591
    %1416 = vmatpush.bf16.msra.mxu0 %v587
    %1417 = vmatpush.bf16.msra.mxu0 %v583
    %1418 = vmatpush.bf16.msra.mxu0 %v579
    %1419 = vmatmul.bf16.gmra.mxu0 %v1384
    %v1420 = vpop.f32.mrf.mxu0
    %v1421 = vadd.f32 0.0, %v1420
    %v1422 = vpop.f32.mrf.mxu0
    %1423 = vdwg.mxu0
    %1424 = vmatpush.bf16.msra.mxu0 %v608
    %1425 = vmatpush.bf16.msra.mxu0 %v604
    %1426 = vmatpush.bf16.msra.mxu0 %v600
    %1427 = vmatpush.bf16.msra.mxu0 %v596
    %1428 = vmatpush.bf16.msra.mxu0 %v592
    %1429 = vmatpush.bf16.msra.mxu0 %v588
    %1430 = vmatpush.bf16.msra.mxu0 %v584
    %1431 = vmatpush.bf16.msra.mxu0 %v580
    %1432 = vmatmul.bf16.gmra.mxu0 %v1384
    %v1433 = vpop.f32.mrf.mxu0
    %v1434 = vadd.f32 0.0, %v1433
    %v1435 = vpop.f32.mrf.mxu0
    %1436 = vdwg.mxu0
    %v1437 = vadd.f32 %v1380, %v1395
    %v1438 = vadd.f32 %v1381, %v1408
    %v1439 = vadd.f32 %v1382, %v1421
    %v1440 = vadd.f32 %v1383, %v1434
    %v1441 = vadd.f32 %v294, %v468
    %v1442 = vadd.f32 %v343, %v469
    %v1443 = vadd.f32 %v392, %v470
    %v1444 = vadd.f32 %v441, %v471
    %v1445 = vpack.c.bf16 %v1379, %v1379
    %1446 = vmatpush.bf16.msra.mxu0 %v605
    %1447 = vmatpush.bf16.msra.mxu0 %v601
    %1448 = vmatpush.bf16.msra.mxu0 %v597
    %1449 = vmatpush.bf16.msra.mxu0 %v593
    %1450 = vmatpush.bf16.msra.mxu0 %v589
    %1451 = vmatpush.bf16.msra.mxu0 %v585
    %1452 = vmatpush.bf16.msra.mxu0 %v581
    %1453 = vmatpush.bf16.msra.mxu0 %v577
    %1454 = vmatmul.bf16.gmra.mxu0 %v1445
    %v1455 = vpop.f32.mrf.mxu0
    %v1456 = vadd.f32 0.0, %v1455
    %v1457 = vpop.f32.mrf.mxu0
    %1458 = vdwg.mxu0
    %1459 = vmatpush.bf16.msra.mxu0 %v606
    %1460 = vmatpush.bf16.msra.mxu0 %v602
    %1461 = vmatpush.bf16.msra.mxu0 %v598
    %1462 = vmatpush.bf16.msra.mxu0 %v594
    %1463 = vmatpush.bf16.msra.mxu0 %v590
    %1464 = vmatpush.bf16.msra.mxu0 %v586
    %1465 = vmatpush.bf16.msra.mxu0 %v582
    %1466 = vmatpush.bf16.msra.mxu0 %v578
    %1467 = vmatmul.bf16.gmra.mxu0 %v1445
    %v1468 = vpop.f32.mrf.mxu0
    %v1469 = vadd.f32 0.0, %v1468
    %v1470 = vpop.f32.mrf.mxu0
    %1471 = vdwg.mxu0
    %1472 = vmatpush.bf16.msra.mxu0 %v607
    %1473 = vmatpush.bf16.msra.mxu0 %v603
    %1474 = vmatpush.bf16.msra.mxu0 %v599
    %1475 = vmatpush.bf16.msra.mxu0 %v595
    %1476 = vmatpush.bf16.msra.mxu0 %v591
    %1477 = vmatpush.bf16.msra.mxu0 %v587
    %1478 = vmatpush.bf16.msra.mxu0 %v583
    %1479 = vmatpush.bf16.msra.mxu0 %v579
    %1480 = vmatmul.bf16.gmra.mxu0 %v1445
    %v1481 = vpop.f32.mrf.mxu0
    %v1482 = vadd.f32 0.0, %v1481
    %v1483 = vpop.f32.mrf.mxu0
    %1484 = vdwg.mxu0
    %1485 = vmatpush.bf16.msra.mxu0 %v608
    %1486 = vmatpush.bf16.msra.mxu0 %v604
    %1487 = vmatpush.bf16.msra.mxu0 %v600
    %1488 = vmatpush.bf16.msra.mxu0 %v596
    %1489 = vmatpush.bf16.msra.mxu0 %v592
    %1490 = vmatpush.bf16.msra.mxu0 %v588
    %1491 = vmatpush.bf16.msra.mxu0 %v584
    %1492 = vmatpush.bf16.msra.mxu0 %v580
    %1493 = vmatmul.bf16.gmra.mxu0 %v1445
    %v1494 = vpop.f32.mrf.mxu0
    %v1495 = vadd.f32 0.0, %v1494
    %v1496 = vpop.f32.mrf.mxu0
    %1497 = vdwg.mxu0
    %v1498 = vadd.f32 %v1441, %v1456
    %v1499 = vadd.f32 %v1442, %v1469
    %v1500 = vadd.f32 %v1443, %v1482
    %v1501 = vadd.f32 %v1444, %v1495
    %v1502 = vxor.u32 %v1437, 2147483648
    %v1503 = vmul.f32 %v1502, 1.442695
    %v1504 = vpow.pop %v1503
    %v1505 = vadd.f32 %v1504, 1.0
    %v1506 = vrcp.pop %v1505
    %v1507 = vmul.f32 %v1505, %v1506
    %v1508 = vsub.f32 1.0, %v1507
    %v1509 = vmul.f32 %v1506, %v1508
    %v1510 = vadd.f32 %v1506, %v1509
    %vm1511 = vweird.f32 %v1505
    %vm1512 = vweird.f32 %v1506
    %vm1513 = vmor %vm1511, %vm1512
    %v1514 = vsel %vm1513, %v1506, %v1510
    %v1515 = vand.u32 2147483647, %v1505
    %vm1516 = vcmp.eq.f32.partialorder %v1515, 8.507059e+37
    %v1517 = vand.u32 %v1505, 2147483648
    %v1518 = vor.u32 1.1754944e-38, %v1517
    %v1519 = vsel %vm1516, %v1518, %v1514
    %v1520 = vmul.f32 1.0, %v1519
    %v1521 = vxor.u32 %v1438, 2147483648
    %v1522 = vmul.f32 %v1521, 1.442695
    %v1523 = vpow.pop %v1522
    %v1524 = vadd.f32 %v1523, 1.0
    %v1525 = vrcp.pop %v1524
    %v1526 = vmul.f32 %v1524, %v1525
    %v1527 = vsub.f32 1.0, %v1526
    %v1528 = vmul.f32 %v1525, %v1527
    %v1529 = vadd.f32 %v1525, %v1528
    %vm1530 = vweird.f32 %v1524
    %vm1531 = vweird.f32 %v1525
    %vm1532 = vmor %vm1530, %vm1531
    %v1533 = vsel %vm1532, %v1525, %v1529
    %v1534 = vand.u32 2147483647, %v1524
    %vm1535 = vcmp.eq.f32.partialorder %v1534, 8.507059e+37
    %v1536 = vand.u32 %v1524, 2147483648
    %v1537 = vor.u32 1.1754944e-38, %v1536
    %v1538 = vsel %vm1535, %v1537, %v1533
    %v1539 = vmul.f32 1.0, %v1538
    %v1540 = vtanh.pop %v1439
    %v1541 = vxor.u32 %v1440, 2147483648
    %v1542 = vmul.f32 %v1541, 1.442695
    %v1543 = vpow.pop %v1542
    %v1544 = vadd.f32 %v1543, 1.0
    %v1545 = vrcp.pop %v1544
    %v1546 = vmul.f32 %v1544, %v1545
    %v1547 = vsub.f32 1.0, %v1546
    %v1548 = vmul.f32 %v1545, %v1547
    %v1549 = vadd.f32 %v1545, %v1548
    %vm1550 = vweird.f32 %v1544
    %vm1551 = vweird.f32 %v1545
    %vm1552 = vmor %vm1550, %vm1551
    %v1553 = vsel %vm1552, %v1545, %v1549
    %v1554 = vand.u32 2147483647, %v1544
    %vm1555 = vcmp.eq.f32.partialorder %v1554, 8.507059e+37
    %v1556 = vand.u32 %v1544, 2147483648
    %v1557 = vor.u32 1.1754944e-38, %v1556
    %v1558 = vsel %vm1555, %v1557, %v1553
    %v1559 = vmul.f32 1.0, %v1558
    %v1560 = vmul.f32 %v1539, %v1314
    %v1561 = vmul.f32 %v1520, %v1540
    %v1562 = vadd.f32 %v1560, %v1561
    %v1563 = vtanh.pop %v1562
    %v1564 = vmul.f32 %v1559, %v1563
    %v1565 = vxor.u32 %v1498, 2147483648
    %v1566 = vmul.f32 %v1565, 1.442695
    %v1567 = vpow.pop %v1566
    %v1568 = vadd.f32 %v1567, 1.0
    %v1569 = vrcp.pop %v1568
    %v1570 = vmul.f32 %v1568, %v1569
    %v1571 = vsub.f32 1.0, %v1570
    %v1572 = vmul.f32 %v1569, %v1571
    %v1573 = vadd.f32 %v1569, %v1572
    %vm1574 = vweird.f32 %v1568
    %vm1575 = vweird.f32 %v1569
    %vm1576 = vmor %vm1574, %vm1575
    %v1577 = vsel %vm1576, %v1569, %v1573
    %v1578 = vand.u32 2147483647, %v1568
    %vm1579 = vcmp.eq.f32.partialorder %v1578, 8.507059e+37
    %v1580 = vand.u32 %v1568, 2147483648
    %v1581 = vor.u32 1.1754944e-38, %v1580
    %v1582 = vsel %vm1579, %v1581, %v1577
    %v1583 = vmul.f32 1.0, %v1582
    %v1584 = vxor.u32 %v1499, 2147483648
    %v1585 = vmul.f32 %v1584, 1.442695
    %v1586 = vpow.pop %v1585
    %v1587 = vadd.f32 %v1586, 1.0
    %v1588 = vrcp.pop %v1587
    %v1589 = vmul.f32 %v1587, %v1588
    %v1590 = vsub.f32 1.0, %v1589
    %v1591 = vmul.f32 %v1588, %v1590
    %v1592 = vadd.f32 %v1588, %v1591
    %vm1593 = vweird.f32 %v1587
    %vm1594 = vweird.f32 %v1588
    %vm1595 = vmor %vm1593, %vm1594
    %v1596 = vsel %vm1595, %v1588, %v1592
    %v1597 = vand.u32 2147483647, %v1587
    %vm1598 = vcmp.eq.f32.partialorder %v1597, 8.507059e+37
    %v1599 = vand.u32 %v1587, 2147483648
    %v1600 = vor.u32 1.1754944e-38, %v1599
    %v1601 = vsel %vm1598, %v1600, %v1596
    %v1602 = vmul.f32 1.0, %v1601
    %v1603 = vtanh.pop %v1500
    %v1604 = vxor.u32 %v1501, 2147483648
    %v1605 = vmul.f32 %v1604, 1.442695
    %v1606 = vpow.pop %v1605
    %v1607 = vadd.f32 %v1606, 1.0
    %v1608 = vrcp.pop %v1607
    %v1609 = vmul.f32 %v1607, %v1608
    %v1610 = vsub.f32 1.0, %v1609
    %v1611 = vmul.f32 %v1608, %v1610
    %v1612 = vadd.f32 %v1608, %v1611
    %vm1613 = vweird.f32 %v1607
    %vm1614 = vweird.f32 %v1608
    %vm1615 = vmor %vm1613, %vm1614
    %v1616 = vsel %vm1615, %v1608, %v1612
    %v1617 = vand.u32 2147483647, %v1607
    %vm1618 = vcmp.eq.f32.partialorder %v1617, 8.507059e+37
    %v1619 = vand.u32 %v1607, 2147483648
    %v1620 = vor.u32 1.1754944e-38, %v1619
    %v1621 = vsel %vm1618, %v1620, %v1616
    %v1622 = vmul.f32 1.0, %v1621
    %v1623 = vmul.f32 %v1602, %v1377
    %v1624 = vmul.f32 %v1583, %v1603
    %v1625 = vadd.f32 %v1623, %v1624
    %v1626 = vtanh.pop %v1625
    %v1627 = vmul.f32 %v1622, %v1626
    %v1628 = vadd.f32 %v297, %v468
    %v1629 = vadd.f32 %v346, %v469
    %v1630 = vadd.f32 %v395, %v470
    %v1631 = vadd.f32 %v444, %v471
    %v1632 = vpack.c.bf16 %v1564, %v1564
    %1633 = vmatpush.bf16.msra.mxu0 %v605
    %1634 = vmatpush.bf16.msra.mxu0 %v601
    %1635 = vmatpush.bf16.msra.mxu0 %v597
    %1636 = vmatpush.bf16.msra.mxu0 %v593
    %1637 = vmatpush.bf16.msra.mxu0 %v589
    %1638 = vmatpush.bf16.msra.mxu0 %v585
    %1639 = vmatpush.bf16.msra.mxu0 %v581
    %1640 = vmatpush.bf16.msra.mxu0 %v577
    %1641 = vmatmul.bf16.gmra.mxu0 %v1632
    %v1642 = vpop.f32.mrf.mxu0
    %v1643 = vadd.f32 0.0, %v1642
    %v1644 = vpop.f32.mrf.mxu0
    %1645 = vdwg.mxu0
    %1646 = vmatpush.bf16.msra.mxu0 %v606
    %1647 = vmatpush.bf16.msra.mxu0 %v602
    %1648 = vmatpush.bf16.msra.mxu0 %v598
    %1649 = vmatpush.bf16.msra.mxu0 %v594
    %1650 = vmatpush.bf16.msra.mxu0 %v590
    %1651 = vmatpush.bf16.msra.mxu0 %v586
    %1652 = vmatpush.bf16.msra.mxu0 %v582
    %1653 = vmatpush.bf16.msra.mxu0 %v578
    %1654 = vmatmul.bf16.gmra.mxu0 %v1632
    %v1655 = vpop.f32.mrf.mxu0
    %v1656 = vadd.f32 0.0, %v1655
    %v1657 = vpop.f32.mrf.mxu0
    %1658 = vdwg.mxu0
    %1659 = vmatpush.bf16.msra.mxu0 %v607
    %1660 = vmatpush.bf16.msra.mxu0 %v603
    %1661 = vmatpush.bf16.msra.mxu0 %v599
    %1662 = vmatpush.bf16.msra.mxu0 %v595
    %1663 = vmatpush.bf16.msra.mxu0 %v591
    %1664 = vmatpush.bf16.msra.mxu0 %v587
    %1665 = vmatpush.bf16.msra.mxu0 %v583
    %1666 = vmatpush.bf16.msra.mxu0 %v579
    %1667 = vmatmul.bf16.gmra.mxu0 %v1632
    %v1668 = vpop.f32.mrf.mxu0
    %v1669 = vadd.f32 0.0, %v1668
    %v1670 = vpop.f32.mrf.mxu0
    %1671 = vdwg.mxu0
    %1672 = vmatpush.bf16.msra.mxu0 %v608
    %1673 = vmatpush.bf16.msra.mxu0 %v604
    %1674 = vmatpush.bf16.msra.mxu0 %v600
    %1675 = vmatpush.bf16.msra.mxu0 %v596
    %1676 = vmatpush.bf16.msra.mxu0 %v592
    %1677 = vmatpush.bf16.msra.mxu0 %v588
    %1678 = vmatpush.bf16.msra.mxu0 %v584
    %1679 = vmatpush.bf16.msra.mxu0 %v580
    %1680 = vmatmul.bf16.gmra.mxu0 %v1632
    %v1681 = vpop.f32.mrf.mxu0
    %v1682 = vadd.f32 0.0, %v1681
    %v1683 = vpop.f32.mrf.mxu0
    %1684 = vdwg.mxu0
    %v1685 = vadd.f32 %v1628, %v1643
    %v1686 = vadd.f32 %v1629, %v1656
    %v1687 = vadd.f32 %v1630, %v1669
    %v1688 = vadd.f32 %v1631, %v1682
    %v1689 = vadd.f32 %v299, %v468
    %v1690 = vadd.f32 %v348, %v469
    %v1691 = vadd.f32 %v397, %v470
    %v1692 = vadd.f32 %v446, %v471
    %v1693 = vpack.c.bf16 %v1627, %v1627
    %1694 = vmatpush.bf16.msra.mxu0 %v605
    %1695 = vmatpush.bf16.msra.mxu0 %v601
    %1696 = vmatpush.bf16.msra.mxu0 %v597
    %1697 = vmatpush.bf16.msra.mxu0 %v593
    %1698 = vmatpush.bf16.msra.mxu0 %v589
    %1699 = vmatpush.bf16.msra.mxu0 %v585
    %1700 = vmatpush.bf16.msra.mxu0 %v581
    %1701 = vmatpush.bf16.msra.mxu0 %v577
    %1702 = vmatmul.bf16.gmra.mxu0 %v1693
    %v1703 = vpop.f32.mrf.mxu0
    %v1704 = vadd.f32 0.0, %v1703
    %v1705 = vpop.f32.mrf.mxu0
    %1706 = vdwg.mxu0
    %1707 = vmatpush.bf16.msra.mxu0 %v606
    %1708 = vmatpush.bf16.msra.mxu0 %v602
    %1709 = vmatpush.bf16.msra.mxu0 %v598
    %1710 = vmatpush.bf16.msra.mxu0 %v594
    %1711 = vmatpush.bf16.msra.mxu0 %v590
    %1712 = vmatpush.bf16.msra.mxu0 %v586
    %1713 = vmatpush.bf16.msra.mxu0 %v582
    %1714 = vmatpush.bf16.msra.mxu0 %v578
    %1715 = vmatmul.bf16.gmra.mxu0 %v1693
    %v1716 = vpop.f32.mrf.mxu0
    %v1717 = vadd.f32 0.0, %v1716
    %v1718 = vpop.f32.mrf.mxu0
    %1719 = vdwg.mxu0
    %1720 = vmatpush.bf16.msra.mxu0 %v607
    %1721 = vmatpush.bf16.msra.mxu0 %v603
    %1722 = vmatpush.bf16.msra.mxu0 %v599
    %1723 = vmatpush.bf16.msra.mxu0 %v595
    %1724 = vmatpush.bf16.msra.mxu0 %v591
    %1725 = vmatpush.bf16.msra.mxu0 %v587
    %1726 = vmatpush.bf16.msra.mxu0 %v583
    %1727 = vmatpush.bf16.msra.mxu0 %v579
    %1728 = vmatmul.bf16.gmra.mxu0 %v1693
    %v1729 = vpop.f32.mrf.mxu0
    %v1730 = vadd.f32 0.0, %v1729
    %v1731 = vpop.f32.mrf.mxu0
    %1732 = vdwg.mxu0
    %1733 = vmatpush.bf16.msra.mxu0 %v608
    %1734 = vmatpush.bf16.msra.mxu0 %v604
    %1735 = vmatpush.bf16.msra.mxu0 %v600
    %1736 = vmatpush.bf16.msra.mxu0 %v596
    %1737 = vmatpush.bf16.msra.mxu0 %v592
    %1738 = vmatpush.bf16.msra.mxu0 %v588
    %1739 = vmatpush.bf16.msra.mxu0 %v584
    %1740 = vmatpush.bf16.msra.mxu0 %v580
    %1741 = vmatmul.bf16.gmra.mxu0 %v1693
    %v1742 = vpop.f32.mrf.mxu0
    %v1743 = vadd.f32 0.0, %v1742
    %v1744 = vpop.f32.mrf.mxu0
    %1745 = vdwg.mxu0
    %v1746 = vadd.f32 %v1689, %v1704
    %v1747 = vadd.f32 %v1690, %v1717
    %v1748 = vadd.f32 %v1691, %v1730
    %v1749 = vadd.f32 %v1692, %v1743
    %v1750 = vxor.u32 %v1685, 2147483648
    %v1751 = vmul.f32 %v1750, 1.442695
    %v1752 = vpow.pop %v1751
    %v1753 = vadd.f32 %v1752, 1.0
    %v1754 = vrcp.pop %v1753
    %v1755 = vmul.f32 %v1753, %v1754
    %v1756 = vsub.f32 1.0, %v1755
    %v1757 = vmul.f32 %v1754, %v1756
    %v1758 = vadd.f32 %v1754, %v1757
    %vm1759 = vweird.f32 %v1753
    %vm1760 = vweird.f32 %v1754
    %vm1761 = vmor %vm1759, %vm1760
    %v1762 = vsel %vm1761, %v1754, %v1758
    %v1763 = vand.u32 2147483647, %v1753
    %vm1764 = vcmp.eq.f32.partialorder %v1763, 8.507059e+37
    %v1765 = vand.u32 %v1753, 2147483648
    %v1766 = vor.u32 1.1754944e-38, %v1765
    %v1767 = vsel %vm1764, %v1766, %v1762
    %v1768 = vmul.f32 1.0, %v1767
    %v1769 = vxor.u32 %v1686, 2147483648
    %v1770 = vmul.f32 %v1769, 1.442695
    %v1771 = vpow.pop %v1770
    %v1772 = vadd.f32 %v1771, 1.0
    %v1773 = vrcp.pop %v1772
    %v1774 = vmul.f32 %v1772, %v1773
    %v1775 = vsub.f32 1.0, %v1774
    %v1776 = vmul.f32 %v1773, %v1775
    %v1777 = vadd.f32 %v1773, %v1776
    %vm1778 = vweird.f32 %v1772
    %vm1779 = vweird.f32 %v1773
    %vm1780 = vmor %vm1778, %vm1779
    %v1781 = vsel %vm1780, %v1773, %v1777
    %v1782 = vand.u32 2147483647, %v1772
    %vm1783 = vcmp.eq.f32.partialorder %v1782, 8.507059e+37
    %v1784 = vand.u32 %v1772, 2147483648
    %v1785 = vor.u32 1.1754944e-38, %v1784
    %v1786 = vsel %vm1783, %v1785, %v1781
    %v1787 = vmul.f32 1.0, %v1786
    %v1788 = vtanh.pop %v1687
    %v1789 = vxor.u32 %v1688, 2147483648
    %v1790 = vmul.f32 %v1789, 1.442695
    %v1791 = vpow.pop %v1790
    %v1792 = vadd.f32 %v1791, 1.0
    %v1793 = vrcp.pop %v1792
    %v1794 = vmul.f32 %v1792, %v1793
    %v1795 = vsub.f32 1.0, %v1794
    %v1796 = vmul.f32 %v1793, %v1795
    %v1797 = vadd.f32 %v1793, %v1796
    %vm1798 = vweird.f32 %v1792
    %vm1799 = vweird.f32 %v1793
    %vm1800 = vmor %vm1798, %vm1799
    %v1801 = vsel %vm1800, %v1793, %v1797
    %v1802 = vand.u32 2147483647, %v1792
    %vm1803 = vcmp.eq.f32.partialorder %v1802, 8.507059e+37
    %v1804 = vand.u32 %v1792, 2147483648
    %v1805 = vor.u32 1.1754944e-38, %v1804
    %v1806 = vsel %vm1803, %v1805, %v1801
    %v1807 = vmul.f32 1.0, %v1806
    %v1808 = vmul.f32 %v1787, %v1562
    %v1809 = vmul.f32 %v1768, %v1788
    %v1810 = vadd.f32 %v1808, %v1809
    %v1811 = vtanh.pop %v1810
    %v1812 = vmul.f32 %v1807, %v1811
    %v1813 = vxor.u32 %v1746, 2147483648
    %v1814 = vmul.f32 %v1813, 1.442695
    %v1815 = vpow.pop %v1814
    %v1816 = vadd.f32 %v1815, 1.0
    %v1817 = vrcp.pop %v1816
    %v1818 = vmul.f32 %v1816, %v1817
    %v1819 = vsub.f32 1.0, %v1818
    %v1820 = vmul.f32 %v1817, %v1819
    %v1821 = vadd.f32 %v1817, %v1820
    %vm1822 = vweird.f32 %v1816
    %vm1823 = vweird.f32 %v1817
    %vm1824 = vmor %vm1822, %vm1823
    %v1825 = vsel %vm1824, %v1817, %v1821
    %v1826 = vand.u32 2147483647, %v1816
    %vm1827 = vcmp.eq.f32.partialorder %v1826, 8.507059e+37
    %v1828 = vand.u32 %v1816, 2147483648
    %v1829 = vor.u32 1.1754944e-38, %v1828
    %v1830 = vsel %vm1827, %v1829, %v1825
    %v1831 = vmul.f32 1.0, %v1830
    %v1832 = vxor.u32 %v1747, 2147483648
    %v1833 = vmul.f32 %v1832, 1.442695
    %v1834 = vpow.pop %v1833
    %v1835 = vadd.f32 %v1834, 1.0
    %v1836 = vrcp.pop %v1835
    %v1837 = vmul.f32 %v1835, %v1836
    %v1838 = vsub.f32 1.0, %v1837
    %v1839 = vmul.f32 %v1836, %v1838
    %v1840 = vadd.f32 %v1836, %v1839
    %vm1841 = vweird.f32 %v1835
    %vm1842 = vweird.f32 %v1836
    %vm1843 = vmor %vm1841, %vm1842
    %v1844 = vsel %vm1843, %v1836, %v1840
    %v1845 = vand.u32 2147483647, %v1835
    %vm1846 = vcmp.eq.f32.partialorder %v1845, 8.507059e+37
    %v1847 = vand.u32 %v1835, 2147483648
    %v1848 = vor.u32 1.1754944e-38, %v1847
    %v1849 = vsel %vm1846, %v1848, %v1844
    %v1850 = vmul.f32 1.0, %v1849
    %v1851 = vtanh.pop %v1748
    %v1852 = vxor.u32 %v1749, 2147483648
    %v1853 = vmul.f32 %v1852, 1.442695
    %v1854 = vpow.pop %v1853
    %v1855 = vadd.f32 %v1854, 1.0
    %v1856 = vrcp.pop %v1855
    %v1857 = vmul.f32 %v1855, %v1856
    %v1858 = vsub.f32 1.0, %v1857
    %v1859 = vmul.f32 %v1856, %v1858
    %v1860 = vadd.f32 %v1856, %v1859
    %vm1861 = vweird.f32 %v1855
    %vm1862 = vweird.f32 %v1856
    %vm1863 = vmor %vm1861, %vm1862
    %v1864 = vsel %vm1863, %v1856, %v1860
    %v1865 = vand.u32 2147483647, %v1855
    %vm1866 = vcmp.eq.f32.partialorder %v1865, 8.507059e+37
    %v1867 = vand.u32 %v1855, 2147483648
    %v1868 = vor.u32 1.1754944e-38, %v1867
    %v1869 = vsel %vm1866, %v1868, %v1864
    %v1870 = vmul.f32 1.0, %v1869
    %v1871 = vmul.f32 %v1850, %v1625
    %v1872 = vmul.f32 %v1831, %v1851
    %v1873 = vadd.f32 %v1871, %v1872
    %v1874 = vtanh.pop %v1873
    %v1875 = vmul.f32 %v1870, %v1874
    %v1876 = vadd.f32 %v302, %v468
    %v1877 = vadd.f32 %v351, %v469
    %v1878 = vadd.f32 %v400, %v470
    %v1879 = vadd.f32 %v449, %v471
    %v1880 = vpack.c.bf16 %v1812, %v1812
    %1881 = vmatpush.bf16.msra.mxu0 %v605
    %1882 = vmatpush.bf16.msra.mxu0 %v601
    %1883 = vmatpush.bf16.msra.mxu0 %v597
    %1884 = vmatpush.bf16.msra.mxu0 %v593
    %1885 = vmatpush.bf16.msra.mxu0 %v589
    %1886 = vmatpush.bf16.msra.mxu0 %v585
    %1887 = vmatpush.bf16.msra.mxu0 %v581
    %1888 = vmatpush.bf16.msra.mxu0 %v577
    %1889 = vmatmul.bf16.gmra.mxu0 %v1880
    %v1890 = vpop.f32.mrf.mxu0
    %v1891 = vadd.f32 0.0, %v1890
    %v1892 = vpop.f32.mrf.mxu0
    %1893 = vdwg.mxu0
    %1894 = vmatpush.bf16.msra.mxu0 %v606
    %1895 = vmatpush.bf16.msra.mxu0 %v602
    %1896 = vmatpush.bf16.msra.mxu0 %v598
    %1897 = vmatpush.bf16.msra.mxu0 %v594
    %1898 = vmatpush.bf16.msra.mxu0 %v590
    %1899 = vmatpush.bf16.msra.mxu0 %v586
    %1900 = vmatpush.bf16.msra.mxu0 %v582
    %1901 = vmatpush.bf16.msra.mxu0 %v578
    %1902 = vmatmul.bf16.gmra.mxu0 %v1880
    %v1903 = vpop.f32.mrf.mxu0
    %v1904 = vadd.f32 0.0, %v1903
    %v1905 = vpop.f32.mrf.mxu0
    %1906 = vdwg.mxu0
    %1907 = vmatpush.bf16.msra.mxu0 %v607
    %1908 = vmatpush.bf16.msra.mxu0 %v603
    %1909 = vmatpush.bf16.msra.mxu0 %v599
    %1910 = vmatpush.bf16.msra.mxu0 %v595
    %1911 = vmatpush.bf16.msra.mxu0 %v591
    %1912 = vmatpush.bf16.msra.mxu0 %v587
    %1913 = vmatpush.bf16.msra.mxu0 %v583
    %1914 = vmatpush.bf16.msra.mxu0 %v579
    %1915 = vmatmul.bf16.gmra.mxu0 %v1880
    %v1916 = vpop.f32.mrf.mxu0
    %v1917 = vadd.f32 0.0, %v1916
    %v1918 = vpop.f32.mrf.mxu0
    %1919 = vdwg.mxu0
    %1920 = vmatpush.bf16.msra.mxu0 %v608
    %1921 = vmatpush.bf16.msra.mxu0 %v604
    %1922 = vmatpush.bf16.msra.mxu0 %v600
    %1923 = vmatpush.bf16.msra.mxu0 %v596
    %1924 = vmatpush.bf16.msra.mxu0 %v592
    %1925 = vmatpush.bf16.msra.mxu0 %v588
    %1926 = vmatpush.bf16.msra.mxu0 %v584
    %1927 = vmatpush.bf16.msra.mxu0 %v580
    %1928 = vmatmul.bf16.gmra.mxu0 %v1880
    %v1929 = vpop.f32.mrf.mxu0
    %v1930 = vadd.f32 0.0, %v1929
    %v1931 = vpop.f32.mrf.mxu0
    %1932 = vdwg.mxu0
    %v1933 = vadd.f32 %v1876, %v1891
    %v1934 = vadd.f32 %v1877, %v1904
    %v1935 = vadd.f32 %v1878, %v1917
    %v1936 = vadd.f32 %v1879, %v1930
    %v1937 = vadd.f32 %v304, %v468
    %v1938 = vadd.f32 %v353, %v469
    %v1939 = vadd.f32 %v402, %v470
    %v1940 = vadd.f32 %v451, %v471
    %v1941 = vpack.c.bf16 %v1875, %v1875
    %1942 = vmatpush.bf16.msra.mxu0 %v605
    %1943 = vmatpush.bf16.msra.mxu0 %v601
    %1944 = vmatpush.bf16.msra.mxu0 %v597
    %1945 = vmatpush.bf16.msra.mxu0 %v593
    %1946 = vmatpush.bf16.msra.mxu0 %v589
    %1947 = vmatpush.bf16.msra.mxu0 %v585
    %1948 = vmatpush.bf16.msra.mxu0 %v581
    %1949 = vmatpush.bf16.msra.mxu0 %v577
    %1950 = vmatmul.bf16.gmra.mxu0 %v1941
    %v1951 = vpop.f32.mrf.mxu0
    %v1952 = vadd.f32 0.0, %v1951
    %v1953 = vpop.f32.mrf.mxu0
    %1954 = vdwg.mxu0
    %1955 = vmatpush.bf16.msra.mxu0 %v606
    %1956 = vmatpush.bf16.msra.mxu0 %v602
    %1957 = vmatpush.bf16.msra.mxu0 %v598
    %1958 = vmatpush.bf16.msra.mxu0 %v594
    %1959 = vmatpush.bf16.msra.mxu0 %v590
    %1960 = vmatpush.bf16.msra.mxu0 %v586
    %1961 = vmatpush.bf16.msra.mxu0 %v582
    %1962 = vmatpush.bf16.msra.mxu0 %v578
    %1963 = vmatmul.bf16.gmra.mxu0 %v1941
    %v1964 = vpop.f32.mrf.mxu0
    %v1965 = vadd.f32 0.0, %v1964
    %v1966 = vpop.f32.mrf.mxu0
    %1967 = vdwg.mxu0
    %1968 = vmatpush.bf16.msra.mxu0 %v607
    %1969 = vmatpush.bf16.msra.mxu0 %v603
    %1970 = vmatpush.bf16.msra.mxu0 %v599
    %1971 = vmatpush.bf16.msra.mxu0 %v595
    %1972 = vmatpush.bf16.msra.mxu0 %v591
    %1973 = vmatpush.bf16.msra.mxu0 %v587
    %1974 = vmatpush.bf16.msra.mxu0 %v583
    %1975 = vmatpush.bf16.msra.mxu0 %v579
    %1976 = vmatmul.bf16.gmra.mxu0 %v1941
    %v1977 = vpop.f32.mrf.mxu0
    %v1978 = vadd.f32 0.0, %v1977
    %v1979 = vpop.f32.mrf.mxu0
    %1980 = vdwg.mxu0
    %1981 = vmatpush.bf16.msra.mxu0 %v608
    %1982 = vmatpush.bf16.msra.mxu0 %v604
    %1983 = vmatpush.bf16.msra.mxu0 %v600
    %1984 = vmatpush.bf16.msra.mxu0 %v596
    %1985 = vmatpush.bf16.msra.mxu0 %v592
    %1986 = vmatpush.bf16.msra.mxu0 %v588
    %1987 = vmatpush.bf16.msra.mxu0 %v584
    %1988 = vmatpush.bf16.msra.mxu0 %v580
    %1989 = vmatmul.bf16.gmra.mxu0 %v1941
    %v1990 = vpop.f32.mrf.mxu0
    %v1991 = vadd.f32 0.0, %v1990
    %v1992 = vpop.f32.mrf.mxu0
    %1993 = vdwg.mxu0
    %v1994 = vadd.f32 %v1937, %v1952
    %v1995 = vadd.f32 %v1938, %v1965
    %v1996 = vadd.f32 %v1939, %v1978
    %v1997 = vadd.f32 %v1940, %v1991
    %v1998 = vxor.u32 %v1933, 2147483648
    %v1999 = vmul.f32 %v1998, 1.442695
    %v2000 = vpow.pop %v1999
    %v2001 = vadd.f32 %v2000, 1.0
    %v2002 = vrcp.pop %v2001
    %v2003 = vmul.f32 %v2001, %v2002
    %v2004 = vsub.f32 1.0, %v2003
    %v2005 = vmul.f32 %v2002, %v2004
    %v2006 = vadd.f32 %v2002, %v2005
    %vm2007 = vweird.f32 %v2001
    %vm2008 = vweird.f32 %v2002
    %vm2009 = vmor %vm2007, %vm2008
    %v2010 = vsel %vm2009, %v2002, %v2006
    %v2011 = vand.u32 2147483647, %v2001
    %vm2012 = vcmp.eq.f32.partialorder %v2011, 8.507059e+37
    %v2013 = vand.u32 %v2001, 2147483648
    %v2014 = vor.u32 1.1754944e-38, %v2013
    %v2015 = vsel %vm2012, %v2014, %v2010
    %v2016 = vmul.f32 1.0, %v2015
    %v2017 = vxor.u32 %v1934, 2147483648
    %v2018 = vmul.f32 %v2017, 1.442695
    %v2019 = vpow.pop %v2018
    %v2020 = vadd.f32 %v2019, 1.0
    %v2021 = vrcp.pop %v2020
    %v2022 = vmul.f32 %v2020, %v2021
    %v2023 = vsub.f32 1.0, %v2022
    %v2024 = vmul.f32 %v2021, %v2023
    %v2025 = vadd.f32 %v2021, %v2024
    %vm2026 = vweird.f32 %v2020
    %vm2027 = vweird.f32 %v2021
    %vm2028 = vmor %vm2026, %vm2027
    %v2029 = vsel %vm2028, %v2021, %v2025
    %v2030 = vand.u32 2147483647, %v2020
    %vm2031 = vcmp.eq.f32.partialorder %v2030, 8.507059e+37
    %v2032 = vand.u32 %v2020, 2147483648
    %v2033 = vor.u32 1.1754944e-38, %v2032
    %v2034 = vsel %vm2031, %v2033, %v2029
    %v2035 = vmul.f32 1.0, %v2034
    %v2036 = vtanh.pop %v1935
    %v2037 = vxor.u32 %v1936, 2147483648
    %v2038 = vmul.f32 %v2037, 1.442695
    %v2039 = vpow.pop %v2038
    %v2040 = vadd.f32 %v2039, 1.0
    %v2041 = vrcp.pop %v2040
    %v2042 = vmul.f32 %v2040, %v2041
    %v2043 = vsub.f32 1.0, %v2042
    %v2044 = vmul.f32 %v2041, %v2043
    %v2045 = vadd.f32 %v2041, %v2044
    %vm2046 = vweird.f32 %v2040
    %vm2047 = vweird.f32 %v2041
    %vm2048 = vmor %vm2046, %vm2047
    %v2049 = vsel %vm2048, %v2041, %v2045
    %v2050 = vand.u32 2147483647, %v2040
    %vm2051 = vcmp.eq.f32.partialorder %v2050, 8.507059e+37
    %v2052 = vand.u32 %v2040, 2147483648
    %v2053 = vor.u32 1.1754944e-38, %v2052
    %v2054 = vsel %vm2051, %v2053, %v2049
    %v2055 = vmul.f32 1.0, %v2054
    %v2056 = vmul.f32 %v2035, %v1810
    %v2057 = vmul.f32 %v2016, %v2036
    %v2058 = vadd.f32 %v2056, %v2057
    %v2059 = vtanh.pop %v2058
    %v2060 = vmul.f32 %v2055, %v2059
    %v2061 = vxor.u32 %v1994, 2147483648
    %v2062 = vmul.f32 %v2061, 1.442695
    %v2063 = vpow.pop %v2062
    %v2064 = vadd.f32 %v2063, 1.0
    %v2065 = vrcp.pop %v2064
    %v2066 = vmul.f32 %v2064, %v2065
    %v2067 = vsub.f32 1.0, %v2066
    %v2068 = vmul.f32 %v2065, %v2067
    %v2069 = vadd.f32 %v2065, %v2068
    %vm2070 = vweird.f32 %v2064
    %vm2071 = vweird.f32 %v2065
    %vm2072 = vmor %vm2070, %vm2071
    %v2073 = vsel %vm2072, %v2065, %v2069
    %v2074 = vand.u32 2147483647, %v2064
    %vm2075 = vcmp.eq.f32.partialorder %v2074, 8.507059e+37
    %v2076 = vand.u32 %v2064, 2147483648
    %v2077 = vor.u32 1.1754944e-38, %v2076
    %v2078 = vsel %vm2075, %v2077, %v2073
    %v2079 = vmul.f32 1.0, %v2078
    %v2080 = vxor.u32 %v1995, 2147483648
    %v2081 = vmul.f32 %v2080, 1.442695
    %v2082 = vpow.pop %v2081
    %v2083 = vadd.f32 %v2082, 1.0
    %v2084 = vrcp.pop %v2083
    %v2085 = vmul.f32 %v2083, %v2084
    %v2086 = vsub.f32 1.0, %v2085
    %v2087 = vmul.f32 %v2084, %v2086
    %v2088 = vadd.f32 %v2084, %v2087
    %vm2089 = vweird.f32 %v2083
    %vm2090 = vweird.f32 %v2084
    %vm2091 = vmor %vm2089, %vm2090
    %v2092 = vsel %vm2091, %v2084, %v2088
    %v2093 = vand.u32 2147483647, %v2083
    %vm2094 = vcmp.eq.f32.partialorder %v2093, 8.507059e+37
    %v2095 = vand.u32 %v2083, 2147483648
    %v2096 = vor.u32 1.1754944e-38, %v2095
    %v2097 = vsel %vm2094, %v2096, %v2092
    %v2098 = vmul.f32 1.0, %v2097
    %v2099 = vtanh.pop %v1996
    %v2100 = vxor.u32 %v1997, 2147483648
    %v2101 = vmul.f32 %v2100, 1.442695
    %v2102 = vpow.pop %v2101
    %v2103 = vadd.f32 %v2102, 1.0
    %v2104 = vrcp.pop %v2103
    %v2105 = vmul.f32 %v2103, %v2104
    %v2106 = vsub.f32 1.0, %v2105
    %v2107 = vmul.f32 %v2104, %v2106
    %v2108 = vadd.f32 %v2104, %v2107
    %vm2109 = vweird.f32 %v2103
    %vm2110 = vweird.f32 %v2104
    %vm2111 = vmor %vm2109, %vm2110
    %v2112 = vsel %vm2111, %v2104, %v2108
    %v2113 = vand.u32 2147483647, %v2103
    %vm2114 = vcmp.eq.f32.partialorder %v2113, 8.507059e+37
    %v2115 = vand.u32 %v2103, 2147483648
    %v2116 = vor.u32 1.1754944e-38, %v2115
    %v2117 = vsel %vm2114, %v2116, %v2112
    %v2118 = vmul.f32 1.0, %v2117
    %v2119 = vmul.f32 %v2098, %v1873
    %v2120 = vmul.f32 %v2079, %v2099
    %v2121 = vadd.f32 %v2119, %v2120
    %v2122 = vtanh.pop %v2121
    %v2123 = vmul.f32 %v2118, %v2122
    %v2124 = vadd.f32 %v307, %v468
    %v2125 = vadd.f32 %v356, %v469
    %v2126 = vadd.f32 %v405, %v470
    %v2127 = vadd.f32 %v454, %v471
    %v2128 = vpack.c.bf16 %v2060, %v2060
    %2129 = vmatpush.bf16.msra.mxu0 %v605
    %2130 = vmatpush.bf16.msra.mxu0 %v601
    %2131 = vmatpush.bf16.msra.mxu0 %v597
    %2132 = vmatpush.bf16.msra.mxu0 %v593
    %2133 = vmatpush.bf16.msra.mxu0 %v589
    %2134 = vmatpush.bf16.msra.mxu0 %v585
    %2135 = vmatpush.bf16.msra.mxu0 %v581
    %2136 = vmatpush.bf16.msra.mxu0 %v577
    %2137 = vmatmul.bf16.gmra.mxu0 %v2128
    %v2138 = vpop.f32.mrf.mxu0
    %v2139 = vadd.f32 0.0, %v2138
    %v2140 = vpop.f32.mrf.mxu0
    %2141 = vdwg.mxu0
    %2142 = vmatpush.bf16.msra.mxu0 %v606
    %2143 = vmatpush.bf16.msra.mxu0 %v602
    %2144 = vmatpush.bf16.msra.mxu0 %v598
    %2145 = vmatpush.bf16.msra.mxu0 %v594
    %2146 = vmatpush.bf16.msra.mxu0 %v590
    %2147 = vmatpush.bf16.msra.mxu0 %v586
    %2148 = vmatpush.bf16.msra.mxu0 %v582
    %2149 = vmatpush.bf16.msra.mxu0 %v578
    %2150 = vmatmul.bf16.gmra.mxu0 %v2128
    %v2151 = vpop.f32.mrf.mxu0
    %v2152 = vadd.f32 0.0, %v2151
    %v2153 = vpop.f32.mrf.mxu0
    %2154 = vdwg.mxu0
    %2155 = vmatpush.bf16.msra.mxu0 %v607
    %2156 = vmatpush.bf16.msra.mxu0 %v603
    %2157 = vmatpush.bf16.msra.mxu0 %v599
    %2158 = vmatpush.bf16.msra.mxu0 %v595
    %2159 = vmatpush.bf16.msra.mxu0 %v591
    %2160 = vmatpush.bf16.msra.mxu0 %v587
    %2161 = vmatpush.bf16.msra.mxu0 %v583
    %2162 = vmatpush.bf16.msra.mxu0 %v579
    %2163 = vmatmul.bf16.gmra.mxu0 %v2128
    %v2164 = vpop.f32.mrf.mxu0
    %v2165 = vadd.f32 0.0, %v2164
    %v2166 = vpop.f32.mrf.mxu0
    %2167 = vdwg.mxu0
    %2168 = vmatpush.bf16.msra.mxu0 %v608
    %2169 = vmatpush.bf16.msra.mxu0 %v604
    %2170 = vmatpush.bf16.msra.mxu0 %v600
    %2171 = vmatpush.bf16.msra.mxu0 %v596
    %2172 = vmatpush.bf16.msra.mxu0 %v592
    %2173 = vmatpush.bf16.msra.mxu0 %v588
    %2174 = vmatpush.bf16.msra.mxu0 %v584
    %2175 = vmatpush.bf16.msra.mxu0 %v580
    %2176 = vmatmul.bf16.gmra.mxu0 %v2128
    %v2177 = vpop.f32.mrf.mxu0
    %v2178 = vadd.f32 0.0, %v2177
    %v2179 = vpop.f32.mrf.mxu0
    %2180 = vdwg.mxu0
    %v2181 = vadd.f32 %v2124, %v2139
    %v2182 = vadd.f32 %v2125, %v2152
    %v2183 = vadd.f32 %v2126, %v2165
    %v2184 = vadd.f32 %v2127, %v2178
    %v2185 = vadd.f32 %v309, %v468
    %v2186 = vadd.f32 %v358, %v469
    %v2187 = vadd.f32 %v407, %v470
    %v2188 = vadd.f32 %v456, %v471
    %v2189 = vpack.c.bf16 %v2123, %v2123
    %2190 = vmatpush.bf16.msra.mxu0 %v605
    %2191 = vmatpush.bf16.msra.mxu0 %v601
    %2192 = vmatpush.bf16.msra.mxu0 %v597
    %2193 = vmatpush.bf16.msra.mxu0 %v593
    %2194 = vmatpush.bf16.msra.mxu0 %v589
    %2195 = vmatpush.bf16.msra.mxu0 %v585
    %2196 = vmatpush.bf16.msra.mxu0 %v581
    %2197 = vmatpush.bf16.msra.mxu0 %v577
    %2198 = vmatmul.bf16.gmra.mxu0 %v2189
    %v2199 = vpop.f32.mrf.mxu0
    %v2200 = vadd.f32 0.0, %v2199
    %v2201 = vpop.f32.mrf.mxu0
    %2202 = vdwg.mxu0
    %2203 = vmatpush.bf16.msra.mxu0 %v606
    %2204 = vmatpush.bf16.msra.mxu0 %v602
    %2205 = vmatpush.bf16.msra.mxu0 %v598
    %2206 = vmatpush.bf16.msra.mxu0 %v594
    %2207 = vmatpush.bf16.msra.mxu0 %v590
    %2208 = vmatpush.bf16.msra.mxu0 %v586
    %2209 = vmatpush.bf16.msra.mxu0 %v582
    %2210 = vmatpush.bf16.msra.mxu0 %v578
    %2211 = vmatmul.bf16.gmra.mxu0 %v2189
    %v2212 = vpop.f32.mrf.mxu0
    %v2213 = vadd.f32 0.0, %v2212
    %v2214 = vpop.f32.mrf.mxu0
    %2215 = vdwg.mxu0
    %2216 = vmatpush.bf16.msra.mxu0 %v607
    %2217 = vmatpush.bf16.msra.mxu0 %v603
    %2218 = vmatpush.bf16.msra.mxu0 %v599
    %2219 = vmatpush.bf16.msra.mxu0 %v595
    %2220 = vmatpush.bf16.msra.mxu0 %v591
    %2221 = vmatpush.bf16.msra.mxu0 %v587
    %2222 = vmatpush.bf16.msra.mxu0 %v583
    %2223 = vmatpush.bf16.msra.mxu0 %v579
    %2224 = vmatmul.bf16.gmra.mxu0 %v2189
    %v2225 = vpop.f32.mrf.mxu0
    %v2226 = vadd.f32 0.0, %v2225
    %v2227 = vpop.f32.mrf.mxu0
    %2228 = vdwg.mxu0
    %2229 = vmatpush.bf16.msra.mxu0 %v608
    %2230 = vmatpush.bf16.msra.mxu0 %v604
    %2231 = vmatpush.bf16.msra.mxu0 %v600
    %2232 = vmatpush.bf16.msra.mxu0 %v596
    %2233 = vmatpush.bf16.msra.mxu0 %v592
    %2234 = vmatpush.bf16.msra.mxu0 %v588
    %2235 = vmatpush.bf16.msra.mxu0 %v584
    %2236 = vmatpush.bf16.msra.mxu0 %v580
    %2237 = vmatmul.bf16.gmra.mxu0 %v2189
    %v2238 = vpop.f32.mrf.mxu0
    %v2239 = vadd.f32 0.0, %v2238
    %v2240 = vpop.f32.mrf.mxu0
    %2241 = vdwg.mxu0
    %v2242 = vadd.f32 %v2185, %v2200
    %v2243 = vadd.f32 %v2186, %v2213
    %v2244 = vadd.f32 %v2187, %v2226
    %v2245 = vadd.f32 %v2188, %v2239
    %v2246 = vxor.u32 %v2181, 2147483648
    %v2247 = vmul.f32 %v2246, 1.442695
    %v2248 = vpow.pop %v2247
    %v2249 = vadd.f32 %v2248, 1.0
    %v2250 = vrcp.pop %v2249
    %v2251 = vmul.f32 %v2249, %v2250
    %v2252 = vsub.f32 1.0, %v2251
    %v2253 = vmul.f32 %v2250, %v2252
    %v2254 = vadd.f32 %v2250, %v2253
    %vm2255 = vweird.f32 %v2249
    %vm2256 = vweird.f32 %v2250
    %vm2257 = vmor %vm2255, %vm2256
    %v2258 = vsel %vm2257, %v2250, %v2254
    %v2259 = vand.u32 2147483647, %v2249
    %vm2260 = vcmp.eq.f32.partialorder %v2259, 8.507059e+37
    %v2261 = vand.u32 %v2249, 2147483648
    %v2262 = vor.u32 1.1754944e-38, %v2261
    %v2263 = vsel %vm2260, %v2262, %v2258
    %v2264 = vmul.f32 1.0, %v2263
    %v2265 = vxor.u32 %v2182, 2147483648
    %v2266 = vmul.f32 %v2265, 1.442695
    %v2267 = vpow.pop %v2266
    %v2268 = vadd.f32 %v2267, 1.0
    %v2269 = vrcp.pop %v2268
    %v2270 = vmul.f32 %v2268, %v2269
    %v2271 = vsub.f32 1.0, %v2270
    %v2272 = vmul.f32 %v2269, %v2271
    %v2273 = vadd.f32 %v2269, %v2272
    %vm2274 = vweird.f32 %v2268
    %vm2275 = vweird.f32 %v2269
    %vm2276 = vmor %vm2274, %vm2275
    %v2277 = vsel %vm2276, %v2269, %v2273
    %v2278 = vand.u32 2147483647, %v2268
    %vm2279 = vcmp.eq.f32.partialorder %v2278, 8.507059e+37
    %v2280 = vand.u32 %v2268, 2147483648
    %v2281 = vor.u32 1.1754944e-38, %v2280
    %v2282 = vsel %vm2279, %v2281, %v2277
    %v2283 = vmul.f32 1.0, %v2282
    %v2284 = vtanh.pop %v2183
    %v2285 = vxor.u32 %v2184, 2147483648
    %v2286 = vmul.f32 %v2285, 1.442695
    %v2287 = vpow.pop %v2286
    %v2288 = vadd.f32 %v2287, 1.0
    %v2289 = vrcp.pop %v2288
    %v2290 = vmul.f32 %v2288, %v2289
    %v2291 = vsub.f32 1.0, %v2290
    %v2292 = vmul.f32 %v2289, %v2291
    %v2293 = vadd.f32 %v2289, %v2292
    %vm2294 = vweird.f32 %v2288
    %vm2295 = vweird.f32 %v2289
    %vm2296 = vmor %vm2294, %vm2295
    %v2297 = vsel %vm2296, %v2289, %v2293
    %v2298 = vand.u32 2147483647, %v2288
    %vm2299 = vcmp.eq.f32.partialorder %v2298, 8.507059e+37
    %v2300 = vand.u32 %v2288, 2147483648
    %v2301 = vor.u32 1.1754944e-38, %v2300
    %v2302 = vsel %vm2299, %v2301, %v2297
    %v2303 = vmul.f32 1.0, %v2302
    %v2304 = vmul.f32 %v2283, %v2058
    %v2305 = vmul.f32 %v2264, %v2284
    %v2306 = vadd.f32 %v2304, %v2305
    %v2307 = vtanh.pop %v2306
    %v2308 = vmul.f32 %v2303, %v2307
    %v2309 = vxor.u32 %v2242, 2147483648
    %v2310 = vmul.f32 %v2309, 1.442695
    %v2311 = vpow.pop %v2310
    %v2312 = vadd.f32 %v2311, 1.0
    %v2313 = vrcp.pop %v2312
    %v2314 = vmul.f32 %v2312, %v2313
    %v2315 = vsub.f32 1.0, %v2314
    %v2316 = vmul.f32 %v2313, %v2315
    %v2317 = vadd.f32 %v2313, %v2316
    %vm2318 = vweird.f32 %v2312
    %vm2319 = vweird.f32 %v2313
    %vm2320 = vmor %vm2318, %vm2319
    %v2321 = vsel %vm2320, %v2313, %v2317
    %v2322 = vand.u32 2147483647, %v2312
    %vm2323 = vcmp.eq.f32.partialorder %v2322, 8.507059e+37
    %v2324 = vand.u32 %v2312, 2147483648
    %v2325 = vor.u32 1.1754944e-38, %v2324
    %v2326 = vsel %vm2323, %v2325, %v2321
    %v2327 = vmul.f32 1.0, %v2326
    %v2328 = vxor.u32 %v2243, 2147483648
    %v2329 = vmul.f32 %v2328, 1.442695
    %v2330 = vpow.pop %v2329
    %v2331 = vadd.f32 %v2330, 1.0
    %v2332 = vrcp.pop %v2331
    %v2333 = vmul.f32 %v2331, %v2332
    %v2334 = vsub.f32 1.0, %v2333
    %v2335 = vmul.f32 %v2332, %v2334
    %v2336 = vadd.f32 %v2332, %v2335
    %vm2337 = vweird.f32 %v2331
    %vm2338 = vweird.f32 %v2332
    %vm2339 = vmor %vm2337, %vm2338
    %v2340 = vsel %vm2339, %v2332, %v2336
    %v2341 = vand.u32 2147483647, %v2331
    %vm2342 = vcmp.eq.f32.partialorder %v2341, 8.507059e+37
    %v2343 = vand.u32 %v2331, 2147483648
    %v2344 = vor.u32 1.1754944e-38, %v2343
    %v2345 = vsel %vm2342, %v2344, %v2340
    %v2346 = vmul.f32 1.0, %v2345
    %v2347 = vtanh.pop %v2244
    %v2348 = vxor.u32 %v2245, 2147483648
    %v2349 = vmul.f32 %v2348, 1.442695
    %v2350 = vpow.pop %v2349
    %v2351 = vadd.f32 %v2350, 1.0
    %v2352 = vrcp.pop %v2351
    %v2353 = vmul.f32 %v2351, %v2352
    %v2354 = vsub.f32 1.0, %v2353
    %v2355 = vmul.f32 %v2352, %v2354
    %v2356 = vadd.f32 %v2352, %v2355
    %vm2357 = vweird.f32 %v2351
    %vm2358 = vweird.f32 %v2352
    %vm2359 = vmor %vm2357, %vm2358
    %v2360 = vsel %vm2359, %v2352, %v2356
    %v2361 = vand.u32 2147483647, %v2351
    %vm2362 = vcmp.eq.f32.partialorder %v2361, 8.507059e+37
    %v2363 = vand.u32 %v2351, 2147483648
    %v2364 = vor.u32 1.1754944e-38, %v2363
    %v2365 = vsel %vm2362, %v2364, %v2360
    %v2366 = vmul.f32 1.0, %v2365
    %v2367 = vmul.f32 %v2346, %v2121
    %v2368 = vmul.f32 %v2327, %v2347
    %v2369 = vadd.f32 %v2367, %v2368
    %v2370 = vtanh.pop %v2369
    %v2371 = vmul.f32 %v2366, %v2370
    %v2372 = vadd.f32 %v312, %v468
    %v2373 = vadd.f32 %v361, %v469
    %v2374 = vadd.f32 %v410, %v470
    %v2375 = vadd.f32 %v459, %v471
    %v2376 = vpack.c.bf16 %v2308, %v2308
    %2377 = vmatpush.bf16.msra.mxu0 %v605
    %2378 = vmatpush.bf16.msra.mxu0 %v601
    %2379 = vmatpush.bf16.msra.mxu0 %v597
    %2380 = vmatpush.bf16.msra.mxu0 %v593
    %2381 = vmatpush.bf16.msra.mxu0 %v589
    %2382 = vmatpush.bf16.msra.mxu0 %v585
    %2383 = vmatpush.bf16.msra.mxu0 %v581
    %2384 = vmatpush.bf16.msra.mxu0 %v577
    %2385 = vmatmul.bf16.gmra.mxu0 %v2376
    %v2386 = vpop.f32.mrf.mxu0
    %v2387 = vadd.f32 0.0, %v2386
    %v2388 = vpop.f32.mrf.mxu0
    %2389 = vdwg.mxu0
    %2390 = vmatpush.bf16.msra.mxu0 %v606
    %2391 = vmatpush.bf16.msra.mxu0 %v602
    %2392 = vmatpush.bf16.msra.mxu0 %v598
    %2393 = vmatpush.bf16.msra.mxu0 %v594
    %2394 = vmatpush.bf16.msra.mxu0 %v590
    %2395 = vmatpush.bf16.msra.mxu0 %v586
    %2396 = vmatpush.bf16.msra.mxu0 %v582
    %2397 = vmatpush.bf16.msra.mxu0 %v578
    %2398 = vmatmul.bf16.gmra.mxu0 %v2376
    %v2399 = vpop.f32.mrf.mxu0
    %v2400 = vadd.f32 0.0, %v2399
    %v2401 = vpop.f32.mrf.mxu0
    %2402 = vdwg.mxu0
    %2403 = vmatpush.bf16.msra.mxu0 %v607
    %2404 = vmatpush.bf16.msra.mxu0 %v603
    %2405 = vmatpush.bf16.msra.mxu0 %v599
    %2406 = vmatpush.bf16.msra.mxu0 %v595
    %2407 = vmatpush.bf16.msra.mxu0 %v591
    %2408 = vmatpush.bf16.msra.mxu0 %v587
    %2409 = vmatpush.bf16.msra.mxu0 %v583
    %2410 = vmatpush.bf16.msra.mxu0 %v579
    %2411 = vmatmul.bf16.gmra.mxu0 %v2376
    %v2412 = vpop.f32.mrf.mxu0
    %v2413 = vadd.f32 0.0, %v2412
    %v2414 = vpop.f32.mrf.mxu0
    %2415 = vdwg.mxu0
    %2416 = vmatpush.bf16.msra.mxu0 %v608
    %2417 = vmatpush.bf16.msra.mxu0 %v604
    %2418 = vmatpush.bf16.msra.mxu0 %v600
    %2419 = vmatpush.bf16.msra.mxu0 %v596
    %2420 = vmatpush.bf16.msra.mxu0 %v592
    %2421 = vmatpush.bf16.msra.mxu0 %v588
    %2422 = vmatpush.bf16.msra.mxu0 %v584
    %2423 = vmatpush.bf16.msra.mxu0 %v580
    %2424 = vmatmul.bf16.gmra.mxu0 %v2376
    %v2425 = vpop.f32.mrf.mxu0
    %v2426 = vadd.f32 0.0, %v2425
    %v2427 = vpop.f32.mrf.mxu0
    %2428 = vdwg.mxu0
    %v2429 = vadd.f32 %v2372, %v2387
    %v2430 = vadd.f32 %v2373, %v2400
    %v2431 = vadd.f32 %v2374, %v2413
    %v2432 = vadd.f32 %v2375, %v2426
    %v2433 = vadd.f32 %v314, %v468
    %v2434 = vadd.f32 %v363, %v469
    %v2435 = vadd.f32 %v412, %v470
    %v2436 = vadd.f32 %v461, %v471
    %v2437 = vpack.c.bf16 %v2371, %v2371
    %2438 = vmatpush.bf16.msra.mxu0 %v605
    %2439 = vmatpush.bf16.msra.mxu0 %v601
    %2440 = vmatpush.bf16.msra.mxu0 %v597
    %2441 = vmatpush.bf16.msra.mxu0 %v593
    %2442 = vmatpush.bf16.msra.mxu0 %v589
    %2443 = vmatpush.bf16.msra.mxu0 %v585
    %2444 = vmatpush.bf16.msra.mxu0 %v581
    %2445 = vmatpush.bf16.msra.mxu0 %v577
    %2446 = vmatmul.bf16.gmra.mxu0 %v2437
    %v2447 = vpop.f32.mrf.mxu0
    %v2448 = vadd.f32 0.0, %v2447
    %v2449 = vpop.f32.mrf.mxu0
    %2450 = vdwg.mxu0
    %2451 = vmatpush.bf16.msra.mxu0 %v606
    %2452 = vmatpush.bf16.msra.mxu0 %v602
    %2453 = vmatpush.bf16.msra.mxu0 %v598
    %2454 = vmatpush.bf16.msra.mxu0 %v594
    %2455 = vmatpush.bf16.msra.mxu0 %v590
    %2456 = vmatpush.bf16.msra.mxu0 %v586
    %2457 = vmatpush.bf16.msra.mxu0 %v582
    %2458 = vmatpush.bf16.msra.mxu0 %v578
    %2459 = vmatmul.bf16.gmra.mxu0 %v2437
    %v2460 = vpop.f32.mrf.mxu0
    %v2461 = vadd.f32 0.0, %v2460
    %v2462 = vpop.f32.mrf.mxu0
    %2463 = vdwg.mxu0
    %2464 = vmatpush.bf16.msra.mxu0 %v607
    %2465 = vmatpush.bf16.msra.mxu0 %v603
    %2466 = vmatpush.bf16.msra.mxu0 %v599
    %2467 = vmatpush.bf16.msra.mxu0 %v595
    %2468 = vmatpush.bf16.msra.mxu0 %v591
    %2469 = vmatpush.bf16.msra.mxu0 %v587
    %2470 = vmatpush.bf16.msra.mxu0 %v583
    %2471 = vmatpush.bf16.msra.mxu0 %v579
    %2472 = vmatmul.bf16.gmra.mxu0 %v2437
    %v2473 = vpop.f32.mrf.mxu0
    %v2474 = vadd.f32 0.0, %v2473
    %v2475 = vpop.f32.mrf.mxu0
    %2476 = vdwg.mxu0
    %2477 = vmatpush.bf16.msra.mxu0 %v608
    %2478 = vmatpush.bf16.msra.mxu0 %v604
    %2479 = vmatpush.bf16.msra.mxu0 %v600
    %2480 = vmatpush.bf16.msra.mxu0 %v596
    %2481 = vmatpush.bf16.msra.mxu0 %v592
    %2482 = vmatpush.bf16.msra.mxu0 %v588
    %2483 = vmatpush.bf16.msra.mxu0 %v584
    %2484 = vmatpush.bf16.msra.mxu0 %v580
    %2485 = vmatmul.bf16.gmra.mxu0 %v2437
    %v2486 = vpop.f32.mrf.mxu0
    %v2487 = vadd.f32 0.0, %v2486
    %v2488 = vpop.f32.mrf.mxu0
    %2489 = vdwg.mxu0
    %v2490 = vadd.f32 %v2433, %v2448
    %v2491 = vadd.f32 %v2434, %v2461
    %v2492 = vadd.f32 %v2435, %v2474
    %v2493 = vadd.f32 %v2436, %v2487
    %v2494 = vxor.u32 %v2429, 2147483648
    %v2495 = vmul.f32 %v2494, 1.442695
    %v2496 = vpow.pop %v2495
    %v2497 = vadd.f32 %v2496, 1.0
    %v2498 = vrcp.pop %v2497
    %v2499 = vmul.f32 %v2497, %v2498
    %v2500 = vsub.f32 1.0, %v2499
    %v2501 = vmul.f32 %v2498, %v2500
    %v2502 = vadd.f32 %v2498, %v2501
    %vm2503 = vweird.f32 %v2497
    %vm2504 = vweird.f32 %v2498
    %vm2505 = vmor %vm2503, %vm2504
    %v2506 = vsel %vm2505, %v2498, %v2502
    %v2507 = vand.u32 2147483647, %v2497
    %vm2508 = vcmp.eq.f32.partialorder %v2507, 8.507059e+37
    %v2509 = vand.u32 %v2497, 2147483648
    %v2510 = vor.u32 1.1754944e-38, %v2509
    %v2511 = vsel %vm2508, %v2510, %v2506
    %v2512 = vmul.f32 1.0, %v2511
    %v2513 = vxor.u32 %v2430, 2147483648
    %v2514 = vmul.f32 %v2513, 1.442695
    %v2515 = vpow.pop %v2514
    %v2516 = vadd.f32 %v2515, 1.0
    %v2517 = vrcp.pop %v2516
    %v2518 = vmul.f32 %v2516, %v2517
    %v2519 = vsub.f32 1.0, %v2518
    %v2520 = vmul.f32 %v2517, %v2519
    %v2521 = vadd.f32 %v2517, %v2520
    %vm2522 = vweird.f32 %v2516
    %vm2523 = vweird.f32 %v2517
    %vm2524 = vmor %vm2522, %vm2523
    %v2525 = vsel %vm2524, %v2517, %v2521
    %v2526 = vand.u32 2147483647, %v2516
    %vm2527 = vcmp.eq.f32.partialorder %v2526, 8.507059e+37
    %v2528 = vand.u32 %v2516, 2147483648
    %v2529 = vor.u32 1.1754944e-38, %v2528
    %v2530 = vsel %vm2527, %v2529, %v2525
    %v2531 = vmul.f32 1.0, %v2530
    %v2532 = vtanh.pop %v2431
    %v2533 = vxor.u32 %v2432, 2147483648
    %v2534 = vmul.f32 %v2533, 1.442695
    %v2535 = vpow.pop %v2534
    %v2536 = vadd.f32 %v2535, 1.0
    %v2537 = vrcp.pop %v2536
    %v2538 = vmul.f32 %v2536, %v2537
    %v2539 = vsub.f32 1.0, %v2538
    %v2540 = vmul.f32 %v2537, %v2539
    %v2541 = vadd.f32 %v2537, %v2540
    %vm2542 = vweird.f32 %v2536
    %vm2543 = vweird.f32 %v2537
    %vm2544 = vmor %vm2542, %vm2543
    %v2545 = vsel %vm2544, %v2537, %v2541
    %v2546 = vand.u32 2147483647, %v2536
    %vm2547 = vcmp.eq.f32.partialorder %v2546, 8.507059e+37
    %v2548 = vand.u32 %v2536, 2147483648
    %v2549 = vor.u32 1.1754944e-38, %v2548
    %v2550 = vsel %vm2547, %v2549, %v2545
    %v2551 = vmul.f32 1.0, %v2550
    %v2552 = vmul.f32 %v2531, %v2306
    %v2553 = vmul.f32 %v2512, %v2532
    %v2554 = vadd.f32 %v2552, %v2553
    %v2555 = vtanh.pop %v2554
    %v2556 = vmul.f32 %v2551, %v2555
    %v2557 = vxor.u32 %v2490, 2147483648
    %v2558 = vmul.f32 %v2557, 1.442695
    %v2559 = vpow.pop %v2558
    %v2560 = vadd.f32 %v2559, 1.0
    %v2561 = vrcp.pop %v2560
    %v2562 = vmul.f32 %v2560, %v2561
    %v2563 = vsub.f32 1.0, %v2562
    %v2564 = vmul.f32 %v2561, %v2563
    %v2565 = vadd.f32 %v2561, %v2564
    %vm2566 = vweird.f32 %v2560
    %vm2567 = vweird.f32 %v2561
    %vm2568 = vmor %vm2566, %vm2567
    %v2569 = vsel %vm2568, %v2561, %v2565
    %v2570 = vand.u32 2147483647, %v2560
    %vm2571 = vcmp.eq.f32.partialorder %v2570, 8.507059e+37
    %v2572 = vand.u32 %v2560, 2147483648
    %v2573 = vor.u32 1.1754944e-38, %v2572
    %v2574 = vsel %vm2571, %v2573, %v2569
    %v2575 = vmul.f32 1.0, %v2574
    %v2576 = vxor.u32 %v2491, 2147483648
    %v2577 = vmul.f32 %v2576, 1.442695
    %v2578 = vpow.pop %v2577
    %v2579 = vadd.f32 %v2578, 1.0
    %v2580 = vrcp.pop %v2579
    %v2581 = vmul.f32 %v2579, %v2580
    %v2582 = vsub.f32 1.0, %v2581
    %v2583 = vmul.f32 %v2580, %v2582
    %v2584 = vadd.f32 %v2580, %v2583
    %vm2585 = vweird.f32 %v2579
    %vm2586 = vweird.f32 %v2580
    %vm2587 = vmor %vm2585, %vm2586
    %v2588 = vsel %vm2587, %v2580, %v2584
    %v2589 = vand.u32 2147483647, %v2579
    %vm2590 = vcmp.eq.f32.partialorder %v2589, 8.507059e+37
    %v2591 = vand.u32 %v2579, 2147483648
    %v2592 = vor.u32 1.1754944e-38, %v2591
    %v2593 = vsel %vm2590, %v2592, %v2588
    %v2594 = vmul.f32 1.0, %v2593
    %v2595 = vtanh.pop %v2492
    %v2596 = vxor.u32 %v2493, 2147483648
    %v2597 = vmul.f32 %v2596, 1.442695
    %v2598 = vpow.pop %v2597
    %v2599 = vadd.f32 %v2598, 1.0
    %v2600 = vrcp.pop %v2599
    %v2601 = vmul.f32 %v2599, %v2600
    %v2602 = vsub.f32 1.0, %v2601
    %v2603 = vmul.f32 %v2600, %v2602
    %v2604 = vadd.f32 %v2600, %v2603
    %vm2605 = vweird.f32 %v2599
    %vm2606 = vweird.f32 %v2600
    %vm2607 = vmor %vm2605, %vm2606
    %v2608 = vsel %vm2607, %v2600, %v2604
    %v2609 = vand.u32 2147483647, %v2599
    %vm2610 = vcmp.eq.f32.partialorder %v2609, 8.507059e+37
    %v2611 = vand.u32 %v2599, 2147483648
    %v2612 = vor.u32 1.1754944e-38, %v2611
    %v2613 = vsel %vm2610, %v2612, %v2608
    %v2614 = vmul.f32 1.0, %v2613
    %v2615 = vmul.f32 %v2594, %v2369
    %v2616 = vmul.f32 %v2575, %v2595
    %v2617 = vadd.f32 %v2615, %v2616
    %v2618 = vtanh.pop %v2617
    %v2619 = vmul.f32 %v2614, %v2618
    %v2620 = vld [vmem:[#allocation11] sm:$0xf]
    %v2621 = vld [vmem:[#allocation11 + $0x4] sm:$0xf]
    %v2622 = vld [vmem:[#allocation11 + $0x8] sm:$0xf]
    %v2623 = vld [vmem:[#allocation11 + $0xc] sm:$0xf]
    %v2624 = vld [vmem:[#allocation11 + $0x10] sm:$0xf]
    %v2625 = vld [vmem:[#allocation11 + $0x14] sm:$0xf]
    %v2626 = vld [vmem:[#allocation11 + $0x18] sm:$0xf]
    %v2627 = vld [vmem:[#allocation11 + $0x1c] sm:$0xf]
    %v2628 = vld [vmem:[#allocation11 + $0x20] sm:$0xf]
    %v2629 = vld [vmem:[#allocation11 + $0x24] sm:$0xf]
    %v2630 = vld [vmem:[#allocation11 + $0x28] sm:$0xf]
    %v2631 = vld [vmem:[#allocation11 + $0x2c] sm:$0xf]
    %v2632 = vld [vmem:[#allocation11 + $0x30] sm:$0xf]
    %v2633 = vld [vmem:[#allocation11 + $0x34] sm:$0xf]
    %v2634 = vld [vmem:[#allocation11 + $0x38] sm:$0xf]
    %v2635 = vld [vmem:[#allocation11 + $0x3c] sm:$0xf]
    %v2636 = vld [vmem:[%s7] sm:$0x1]
    %v2637 = vpack.c.bf16 %v2556, %v2556
    %v2639 = vperm.slane %v2636, 0
    %v2657 = vunpack.c.l.b16 %v2620
    %v2658 = vunpack.c.l.b16 %v2621
    %v2659 = vunpack.c.l.b16 %v2622
    %v2660 = vunpack.c.l.b16 %v2623
    %v2661 = vunpack.c.l.b16 %v2624
    %v2662 = vunpack.c.l.b16 %v2625
    %v2663 = vunpack.c.l.b16 %v2626
    %v2664 = vunpack.c.l.b16 %v2627
    %v2665 = vunpack.c.l.b16 %v2628
    %v2666 = vunpack.c.l.b16 %v2629
    %v2667 = vunpack.c.l.b16 %v2630
    %v2668 = vunpack.c.l.b16 %v2631
    %v2669 = vunpack.c.l.b16 %v2632
    %v2670 = vunpack.c.l.b16 %v2633
    %v2671 = vunpack.c.l.b16 %v2634
    %v2672 = vunpack.c.l.b16 %v2635
    %v2673 = vpack.c.b16 %v2658, %v2657
    %v2674 = vpack.c.b16 %v2660, %v2659
    %v2675 = vpack.c.b16 %v2662, %v2661
    %v2676 = vpack.c.b16 %v2664, %v2663
    %v2677 = vpack.c.b16 %v2666, %v2665
    %v2678 = vpack.c.b16 %v2668, %v2667
    %v2679 = vpack.c.b16 %v2670, %v2669
    %v2680 = vpack.c.b16 %v2672, %v2671
    %2689 = vmatpush.bf16.msra.mxu0 %v2680
    %2690 = vmatpush.bf16.msra.mxu0 %v2679
    %2691 = vmatpush.bf16.msra.mxu0 %v2678
    %2692 = vmatpush.bf16.msra.mxu0 %v2677
    %2693 = vmatpush.bf16.msra.mxu0 %v2676
    %2694 = vmatpush.bf16.msra.mxu0 %v2675
    %2695 = vmatpush.bf16.msra.mxu0 %v2674
    %2696 = vmatpush.bf16.msra.mxu0 %v2673
    %2697 = vmatmul.bf16.gmra.mxu0 %v2637
    %v2698 = vpop.f32.mrf.mxu0
    %v2699 = vadd.f32 %v2639, %v2698
    %v2700 = vpop.f32.mrf.mxu0
    %2701 = vdwg.mxu0
    %2702 = vst [vmem:[#allocation13] sm:$0xff] %v2699
    %v2703 = vpack.c.bf16 %v2619, %v2619
    %2704 = vmatpush.bf16.msra.mxu0 %v2680
    %2705 = vmatpush.bf16.msra.mxu0 %v2679
    %2706 = vmatpush.bf16.msra.mxu0 %v2678
    %2707 = vmatpush.bf16.msra.mxu0 %v2677
    %2708 = vmatpush.bf16.msra.mxu0 %v2676
    %2709 = vmatpush.bf16.msra.mxu0 %v2675
    %2710 = vmatpush.bf16.msra.mxu0 %v2674
    %2711 = vmatpush.bf16.msra.mxu0 %v2673
    %2712 = vmatmul.bf16.gmra.mxu0 %v2703
    %v2713 = vpop.f32.mrf.mxu0
    %v2714 = vadd.f32 %v2639, %v2713
    %v2715 = vpop.f32.mrf.mxu0
    %2716 = vdwg.mxu0
    %2717 = vst [vmem:[#allocation13 + $0x8] sm:$0xff] %v2714
    %2718 = vst [vmem:[#allocation14] sm:$0xff] %v2556
    %2719 = vst [vmem:[#allocation14 + $0x8] sm:$0xff] %v2619
    %2720 = vst [vmem:[#allocation16] sm:$0xff] %v2554
    %2721 = vst [vmem:[#allocation16 + $0x8] sm:$0xff] %v2617
    // Predicated region
    $region58: #{tpu_custom_call.1} parent=1 // pred_check
      _
    $region59: #{tpu_custom_call.1} parent=1 // pred_check_branch
      %2723 = sbr.rel (0) target = $region61
    $region60: #{tpu_custom_call.1} parent=1 // pred_region
      %2725 = vsyncadd [#allocation4], 0
      %s2726 = sshll.u32 [#allocation13], 4
      %s2727 = int_to_ptr.vmem [resolvable:$true] %s2726
      %s2728 = sshll.u32 %s8, 4
      %s2729 = int_to_ptr.hbm [resolvable:$true] %s2728
      %2734 = dma.vmem_to_hbm [thread:$0]  %s2727, 256, %s2729, [#allocation4], 128, 128, 8
    $region61: #{tpu_custom_call.1} parent=1 // pred_fallthru
      _
    // Predicated region
    $region62: #{tpu_custom_call.1} parent=1 // pred_check
      _
    $region63: #{tpu_custom_call.1} parent=1 // pred_check_branch
      %2736 = sbr.rel (0) target = $region65
    $region64: #{tpu_custom_call.1} parent=1 // pred_region
      %2738 = vsyncadd [#allocation15], 0
      %s2739 = sshll.u32 [#allocation14], 4
      %s2740 = int_to_ptr.vmem [resolvable:$true] %s2739
      %s2741 = sshll.u32 %s9, 4
      %s2742 = int_to_ptr.hbm [resolvable:$true] %s2741
      %2747 = dma.vmem_to_hbm [thread:$0]  %s2740, 256, %s2742, [#allocation15], 128, 128, 8
    $region65: #{tpu_custom_call.1} parent=1 // pred_fallthru
      _
    // Predicated region
    $region66: #{tpu_custom_call.1} parent=1 // pred_check
      _
    $region67: #{tpu_custom_call.1} parent=1 // pred_check_branch
      %2749 = sbr.rel (0) target = $region69
    $region68: #{tpu_custom_call.1} parent=1 // pred_region
      %2751 = vsyncadd [#allocation15], 0
      %s2752 = sshll.u32 [#allocation16], 4
      %s2753 = int_to_ptr.vmem [resolvable:$true] %s2752
      %s2754 = sshll.u32 %s10, 4
      %s2755 = int_to_ptr.hbm [resolvable:$true] %s2754
      %2760 = dma.vmem_to_hbm [thread:$0]  %s2753, 256, %s2755, [#allocation15], 128, 128, 8
    $region69: #{tpu_custom_call.1} parent=1 // pred_fallthru
      _
    // Predicated region
    $region70: #{tpu_custom_call.1} parent=1 // pred_check
      _
    $region71: #{tpu_custom_call.1} parent=1 // pred_check_branch
      %2762 = sbr.rel (0) target = $region73
    $region72: #{tpu_custom_call.1} parent=1 // pred_region
      %2764 = dma.done [#allocation4], 256
    $region73: #{tpu_custom_call.1} parent=1 // pred_fallthru
      _
    // Predicated region
    $region74: #{tpu_custom_call.1} parent=1 // pred_check
      _
    $region75: #{tpu_custom_call.1} parent=1 // pred_check_branch
      %2766 = sbr.rel (0) target = $region77
    $region76: #{tpu_custom_call.1} parent=1 // pred_region
      %2768 = dma.done [#allocation15], 256
    $region77: #{tpu_custom_call.1} parent=1 // pred_fallthru
      _
    // Predicated region
    $region78: #{tpu_custom_call.1} parent=1 // pred_check
      _
    $region79: #{tpu_custom_call.1} parent=1 // pred_check_branch
      %2770 = sbr.rel (0) target = $region81
    $region80: #{tpu_custom_call.1} parent=1 // pred_region
      %2772 = dma.done [#allocation15], 256
    $region81: #{tpu_custom_call.1} parent=1 // pred_fallthru
      _
    %2773 = vsyncpa [#allocation3], 1
    %2774 = vsyncpa [#allocation6], 1
    %2775 = vsyncpa [#allocation9], 1
    %2776 = vsyncpa [#allocation12], 1
    %2777 = vsyncpa [#allocation4], 1
    %2778 = vsyncpa [#allocation15], 1

</llo_original>
